<compile_context>
chip_gen: v7x
topology: tpu7x:2x2x1
jax: 0.10.0
libtpu: 0.0.40
codegen_flags: <defaults>
</compile_context>

<pallas_src>
import functools

import jax
import jax.numpy as jnp
from jax.experimental import pallas as pl
from jax.experimental.pallas import tpu as pltpu


# --------------------------- fused forward kernel ----------------------------

def _fused_lstm_kernel(x_ref, *refs, num_layers, unroll):
    """Fused multi-layer LSTM + vocab-tiled FC head.

    refs = [wih_t, whh_t, b] * L, fc_w_tile, fc_b_tile,
           logits_tile, h_n, c_n,                       (outputs)
           seq_scr, hlast_scr, *gate_bufs               (VMEM scratch)

    Grid: one axis over vocab tiles.  The LSTM recurrence runs only at the first
    vocab tile; its final hidden state persists in VMEM scratch for later tiles.
    """
    L = num_layers
    w_refs = refs[:3 * L]
    fcw_ref, fcb_ref = refs[3 * L], refs[3 * L + 1]
    logits_ref, hn_ref, cn_ref = refs[3 * L + 2], refs[3 * L + 3], refs[3 * L + 4]
    seq_scr, hlast_scr = refs[3 * L + 5], refs[3 * L + 6]
    gate_bufs = refs[3 * L + 7:]                       # n_buf chunked-gate buffers

    n_buf = len(gate_bufs)
    Bp, H = hn_ref.shape[1], hn_ref.shape[2]
    T = x_ref.shape[0] // Bp
    Tc = gate_bufs[0].shape[0] // Bp
    n_chunks = T // Tc

    @pl.when(pl.program_id(0) == 0)
    def _run_lstm():
        h = None
        for l in range(L):
            wih = w_refs[3 * l][...]                   # (F, 4H) compute dtype
            whh = w_refs[3 * l + 1][...]               # (H, 4H) compute dtype
            bias = w_refs[3 * l + 2][...]              # (1, 4H) f32
            src = x_ref if l == 0 else seq_scr         # previous layer's sequence
            write_seq = l < L - 1                      # last layer's seq is unused

            def project(chunk, slot, wih=wih, bias=bias, src=src):
                # Hoisted input projection for one time chunk: one MXU matmul.
                row0 = chunk * (Tc * Bp)               # static
                xin = src[pl.ds(row0, Tc * Bp), :]
                gate_bufs[slot][...] = (
                    jnp.dot(xin.astype(wih.dtype), wih,
                            preferred_element_type=jnp.float32) + bias)

            prefetch = n_buf > 1
            if prefetch:
                project(0, 0)

            h = jnp.zeros((Bp, H), jnp.float32)
            c = jnp.zeros((Bp, H), jnp.float32)

            for k in range(n_chunks):
                slot = k % n_buf
                if prefetch:
                    # Issue chunk k+1's projection before chunk k's serial recurrence
                    # so the big MXU matmul can hide behind the latency-bound loop.
                    if k + 1 < n_chunks:
                        project(k + 1, (k + 1) % n_buf)
                else:
                    project(k, slot)
                gbuf = gate_bufs[slot]

                def step(t, carry, whh=whh, gbuf=gbuf, base=k * Tc,
                         write_seq=write_seq):
                    h, c = carry
                    row = pl.multiple_of(t * Bp, Bp)
                    # TODO(synk): weight-stationary MXU driving for whh (see header).
                    g = gbuf[pl.ds(row, Bp), :] + jnp.dot(
                        h.astype(whh.dtype), whh,
                        preferred_element_type=jnp.float32)
                    # Gate order (i, f, o, g): sigmoid over the 3H slab, tanh over H.
                    sig = jax.nn.sigmoid(g[:, :3 * H])
                    g_t = jnp.tanh(g[:, 3 * H:])
                    i_g = sig[:, 0 * H:1 * H]
                    f_g = sig[:, 1 * H:2 * H]
                    o_g = sig[:, 2 * H:3 * H]
                    c_new = f_g * c + i_g * g_t
                    h_new = o_g * jnp.tanh(c_new)
                    if write_seq:
                        orow = pl.multiple_of((base + t) * Bp, Bp)
                        seq_scr[pl.ds(orow, Bp), :] = h_new.astype(seq_scr.dtype)
                    return h_new, c_new

                h, c = jax.lax.fori_loop(0, Tc, step, (h, c), unroll=unroll)

            hn_ref[l] = h
            cn_ref[l] = c

        hlast_scr[...] = h                             # == lstm_out[:, -1, :]

    # FC head: one lane-dense vocab tile per grid step (weight tile pipelined by
    # the BlockSpec machinery while the previous tile's matmul runs).
    fcw = fcw_ref[...]
    logits_ref[...] = (
        jnp.dot(hlast_scr[...].astype(fcw.dtype), fcw,
                preferred_element_type=jnp.float32) + fcb_ref[...])


# ------------------------------ host-side wrapper ------------------------------

def swahili_lstm_forward(tokens, params, *, compute_dtype=jnp.float32,
                         time_chunk=32, vocab_tile=None, unroll=8):
    """tokens: (B, T) int32 -> (logits (B, V), (h_n (L, B, H), c_n (L, B, H)))."""
    B, T = tokens.shape
    L = len(params["lstm"])
    H = params["lstm"][0]["whh_t"].shape[0]
    V = params["fc_w_t"].shape[1]
    E = params["embedding"].shape[1]
    itemsize = jnp.dtype(compute_dtype).itemsize

    # Batch padding: full sublane packing (8 rows for f32, 16 for bf16 MXU operands).
    sub = 8 if itemsize >= 4 else 16
    Bp = ((B + sub - 1) // sub) * sub

    # Embedding gather straight into padded, time-major layout (one gather, no extra
    # transpose/pad copies of the embedded tensor).
    tok_pad = jnp.zeros((T, Bp), jnp.int32).at[:, :B].set(tokens.T.astype(jnp.int32))
    x2d = jnp.take(params["embedding"], tok_pad.reshape(-1), axis=0
                   ).astype(compute_dtype)                       # (T*Bp, E)

    # Time chunking for the hoisted gate precompute (largest divisor of T <= time_chunk).
    Tc = max(1, min(time_chunk, T))
    while T % Tc:
        Tc -= 1
    n_chunks = T // Tc
    n_buf = 2 if n_chunks > 1 else 1
    unroll_steps = max(1, min(unroll, Tc))

    # Gate-column permutation: PyTorch (i, f, g, o) -> (i, f, o, g) so the recurrence
    # applies sigmoid to a contiguous 3H slab and tanh to the trailing H slab.
    def permute_gates(w):
        return jnp.concatenate(
            [w[..., 0 * H:1 * H], w[..., 1 * H:2 * H],
             w[..., 3 * H:4 * H], w[..., 2 * H:3 * H]], axis=-1)

    inputs = [x2d]
    in_specs = [pl.BlockSpec((T * Bp, E), lambda j: (0, 0))]
    w_bytes = 0
    for layer in params["lstm"]:
        wih = permute_gates(layer["wih_t"]).astype(compute_dtype)    # (F, 4H)
        whh = permute_gates(layer["whh_t"]).astype(compute_dtype)    # (H, 4H)
        b = permute_gates(layer["b"]).astype(jnp.float32)            # (1, 4H)
        inputs += [wih, whh, b]
        in_specs += [pl.BlockSpec(wih.shape, lambda j: (0, 0)),
                     pl.BlockSpec(whh.shape, lambda j: (0, 0)),
                     pl.BlockSpec(b.shape, lambda j: (0, 0))]
        w_bytes += (wih.size + whh.size) * itemsize + b.size * 4

    # FC head tiled over the vocab axis with lane-aligned tiles.
    if vocab_tile is None or vocab_tile >= V:
        Vt = V
    else:
        Vt = max(128, (vocab_tile // 128) * 128)
    Vp = ((V + Vt - 1) // Vt) * Vt
    n_vtiles = Vp // Vt
    fc_w = params["fc_w_t"].astype(compute_dtype)                    # (H, V)
    fc_b = params["fc_b"].astype(jnp.float32)                        # (1, V)
    if Vp != V:
        fc_w = jnp.pad(fc_w, ((0, 0), (0, Vp - V)))
        fc_b = jnp.pad(fc_b, ((0, 0), (0, Vp - V)))
    inputs += [fc_w, fc_b]
    in_specs += [pl.BlockSpec((H, Vt), lambda j: (0, j)),
                 pl.BlockSpec((1, Vt), lambda j: (0, j))]

    out_shapes = (jax.ShapeDtypeStruct((Bp, Vp), jnp.float32),
                  jax.ShapeDtypeStruct((L, Bp, H), jnp.float32),
                  jax.ShapeDtypeStruct((L, Bp, H), jnp.float32))
    out_specs = [pl.BlockSpec((Bp, Vt), lambda j: (0, j)),
                 pl.BlockSpec((L, Bp, H), lambda j: (0, 0, 0)),
                 pl.BlockSpec((L, Bp, H), lambda j: (0, 0, 0))]

    seq_rows = T * Bp if L > 1 else Bp
    scratch_shapes = (
        [pltpu.VMEM((seq_rows, H), compute_dtype),        # inter-layer sequence
         pltpu.VMEM((Bp, H), jnp.float32)]                # final hidden (FC input)
        + [pltpu.VMEM((Tc * Bp, 4 * H), jnp.float32)] * n_buf)   # chunked gates

    # Explicit VMEM budget (default scoped limit is only 16/32 MiB on v5e/v6e/v7x).
    x_bytes = x2d.size * itemsize
    fc_tile_bytes = H * Vt * itemsize + Vt * 4
    out_bytes = Bp * Vt * 4 + 2 * L * Bp * H * 4
    scr_bytes = (n_buf * Tc * Bp * 4 * H * 4 + seq_rows * H * itemsize + Bp * H * 4)
    budget = 2 * (x_bytes + w_bytes + fc_tile_bytes + out_bytes) + scr_bytes
    vmem_limit = int(min(100 * 2 ** 20, max(32 * 2 ** 20, budget * 5 // 4 + (2 << 20))))

    logits_p, hn_p, cn_p = pl.pallas_call(
        functools.partial(_fused_lstm_kernel, num_layers=L, unroll=unroll_steps),
        out_shape=out_shapes,
        grid_spec=pltpu.PrefetchScalarGridSpec(
            num_scalar_prefetch=0,
            grid=(n_vtiles,),                             # vocab tiles
            in_specs=in_specs,
            out_specs=out_specs,
            scratch_shapes=scratch_shapes),
        compiler_params=pltpu.CompilerParams(
            # j > 0 consumes scratch written at j == 0 -> must stay sequential.
            dimension_semantics=("arbitrary",),
            vmem_limit_bytes=vmem_limit),
    )(*inputs)

    logits = logits_p[:B, :V]
    hidden = (hn_p[:, :B, :], cn_p[:, :B, :])
    return logits, hidden


# ------------------------- deterministic param setup --------------------------

def init_params(key, vocab_size, embedding_dim, hidden_dim, num_layers):
    keys = jax.random.split(key, 3 + 4 * num_layers)
    k_emb, k_fc_w, k_fc_b = keys[0], keys[1], keys[2]
    params = {}
    params["embedding"] = jax.random.normal(
        k_emb, (vocab_size, embedding_dim), jnp.float32)

    bound = 1.0 / jnp.sqrt(hidden_dim)
    layers = []
    for l in range(num_layers):
        in_dim = embedding_dim if l == 0 else hidden_dim
        kw1, kw2, kb1, kb2 = keys[3 + 4 * l: 3 + 4 * (l + 1)]
        w_ih = jax.random.uniform(kw1, (4 * hidden_dim, in_dim),
                                  jnp.float32, -bound, bound)
        w_hh = jax.random.uniform(kw2, (4 * hidden_dim, hidden_dim),
                                  jnp.float32, -bound, bound)
        b_ih = jax.random.uniform(kb1, (4 * hidden_dim,), jnp.float32, -bound, bound)
        b_hh = jax.random.uniform(kb2, (4 * hidden_dim,), jnp.float32, -bound, bound)
        layers.append({"wih_t": w_ih.T,                       # (in, 4H), i,f,g,o order
                       "whh_t": w_hh.T,                       # (H, 4H)
                       "b": (b_ih + b_hh).reshape(1, -1)})    # (1, 4H)
    params["lstm"] = layers

    fc_bound = 1.0 / jnp.sqrt(hidden_dim)
    w_fc = jax.random.uniform(k_fc_w, (vocab_size, hidden_dim),
                              jnp.float32, -fc_bound, fc_bound)
    b_fc = jax.random.uniform(k_fc_b, (vocab_size,), jnp.float32,
                              -fc_bound, fc_bound)
    params["fc_w_t"] = w_fc.T                                 # (H, V)
    params["fc_b"] = b_fc.reshape(1, -1)                      # (1, V)
    return params


# ----------------------------- pure-JAX reference ------------------------------

def reference_forward(tokens, params):
    emb = jnp.take(params["embedding"], tokens, axis=0)       # (B, T, E)
    x = jnp.transpose(emb, (1, 0, 2))
    T, B, _ = x.shape
    h_list, c_list = [], []
    for layer in params["lstm"]:
        H = layer["whh_t"].shape[0]
        h = jnp.zeros((B, H), jnp.float32)
        c = jnp.zeros((B, H), jnp.float32)
        outs = []
        for t in range(T):
            gates = x[t] @ layer["wih_t"] + h @ layer["whh_t"] + layer["b"]
            i = jax.nn.sigmoid(gates[:, 0 * H:1 * H])
            f = jax.nn.sigmoid(gates[:, 1 * H:2 * H])
            g = jnp.tanh(gates[:, 2 * H:3 * H])
            o = jax.nn.sigmoid(gates[:, 3 * H:4 * H])
            c = f * c + i * g
            h = o * jnp.tanh(c)
            outs.append(h)
        x = jnp.stack(outs, axis=0)
        h_list.append(h)
        c_list.append(c)
    logits = x[-1] @ params["fc_w_t"] + params["fc_b"]
    return logits, (jnp.stack(h_list, 0), jnp.stack(c_list, 0))


# ------------------------------------ main ------------------------------------

if __name__ == "__main__":
    VOCAB, EMB, HID, LAYERS = 64, 16, 32, 2
    B, T = 2, 8

    key = jax.random.PRNGKey(0)
    k_params, k_tokens = jax.random.split(key)
    params = init_params(k_params, VOCAB, EMB, HID, LAYERS)
    tokens = jax.random.randint(k_tokens, (B, T), 0, VOCAB, dtype=jnp.int32)

    ref_logits, (ref_h, ref_c) = reference_forward(tokens, params)

    # f32 path (numerically matches the PyTorch/f32 reference).
    logits, (h_n, c_n) = swahili_lstm_forward(tokens, params)
    jax.block_until_ready((logits, h_n, c_n))
    assert logits.shape == (B, VOCAB)
    assert h_n.shape == (LAYERS, B, HID) and c_n.shape == (LAYERS, B, HID)
    assert jnp.allclose(logits, ref_logits, atol=1e-4, rtol=1e-4)
    assert jnp.allclose(h_n, ref_h, atol=1e-4, rtol=1e-4)
    assert jnp.allclose(c_n, ref_c, atol=1e-4, rtol=1e-4)

    # bf16-MXU path (f32 gate math / carries); now also validates c_n.
    logits_bf, (h_bf, c_bf) = swahili_lstm_forward(
        tokens, params, compute_dtype=jnp.bfloat16)
    jax.block_until_ready((logits_bf, h_bf, c_bf))
    assert jnp.allclose(logits_bf, ref_logits, atol=1e-1, rtol=1e-1)
    assert jnp.allclose(h_bf, ref_h, atol=1e-1, rtol=1e-1)
    assert jnp.allclose(c_bf, ref_c, atol=1e-1, rtol=1e-1)

    # Multi-tile config: 2 vocab tiles, 2 time chunks (double-buffered gate prefetch),
    # padded batch (B=5 -> 8) -- exercises the new tiling/chunking paths.
    V2, E2, H2, L2, B2, T2 = 256, 32, 128, 2, 5, 16
    params2 = init_params(jax.random.PRNGKey(1), V2, E2, H2, L2)
    tokens2 = jax.random.randint(jax.random.PRNGKey(2), (B2, T2), 0, V2,
                                 dtype=jnp.int32)
    ref2_logits, (ref2_h, ref2_c) = reference_forward(tokens2, params2)
    logits2, (h2, c2) = swahili_lstm_forward(tokens2, params2,
                                             vocab_tile=128, time_chunk=8)
    jax.block_until_ready((logits2, h2, c2))
    assert logits2.shape == (B2, V2)
    assert h2.shape == (L2, B2, H2) and c2.shape == (L2, B2, H2)
    assert jnp.allclose(logits2, ref2_logits, atol=1e-3, rtol=1e-3)
    assert jnp.allclose(h2, ref2_h, atol=1e-3, rtol=1e-3)
    assert jnp.allclose(c2, ref2_c, atol=1e-3, rtol=1e-3)

    print("KERNEL_OK")
</pallas_src>

<mosaic_0001>
module attributes {stable_mosaic.version = 11 : i64} {
  func.func @_fused_lstm_kernel(%arg0: i32, %arg1: memref<64x16xf32, #tpu.memory_space<vmem>>, %arg2: memref<16x128xf32, #tpu.memory_space<vmem>>, %arg3: memref<32x128xf32, #tpu.memory_space<vmem>>, %arg4: memref<1x128xf32, #tpu.memory_space<vmem>>, %arg5: memref<32x128xf32, #tpu.memory_space<vmem>>, %arg6: memref<32x128xf32, #tpu.memory_space<vmem>>, %arg7: memref<1x128xf32, #tpu.memory_space<vmem>>, %arg8: memref<32x64xf32, #tpu.memory_space<vmem>>, %arg9: memref<1x64xf32, #tpu.memory_space<vmem>>, %arg10: memref<8x64xf32, #tpu.memory_space<vmem>>, %arg11: memref<2x8x32xf32, #tpu.memory_space<vmem>>, %arg12: memref<2x8x32xf32, #tpu.memory_space<vmem>>, %arg13: memref<64x32xf32, #tpu.memory_space<vmem>>, %arg14: memref<8x32xf32, #tpu.memory_space<vmem>>, %arg15: memref<64x128xf32, #tpu.memory_space<vmem>>) attributes {dimension_semantics = [#tpu.dimension_semantics<arbitrary>], iteration_bounds = array<i64: 1>, scalar_prefetch = 0 : i64, scratch_operands = 3 : i64, tpu.core_type = #tpu.core_type<tc>, window_params = [{pipeline_mode = #tpu.pipeline_mode<synchronous>, transform_indices = @transform_0, window_bounds = array<i64: 64, 16>}, {pipeline_mode = #tpu.pipeline_mode<synchronous>, transform_indices = @transform_1, window_bounds = array<i64: 16, 128>}, {pipeline_mode = #tpu.pipeline_mode<synchronous>, transform_indices = @transform_2, window_bounds = array<i64: 32, 128>}, {pipeline_mode = #tpu.pipeline_mode<synchronous>, transform_indices = @transform_3, window_bounds = array<i64: 1, 128>}, {pipeline_mode = #tpu.pipeline_mode<synchronous>, transform_indices = @transform_4, window_bounds = array<i64: 32, 128>}, {pipeline_mode = #tpu.pipeline_mode<synchronous>, transform_indices = @transform_5, window_bounds = array<i64: 32, 128>}, {pipeline_mode = #tpu.pipeline_mode<synchronous>, transform_indices = @transform_6, window_bounds = array<i64: 1, 128>}, {transform_indices = @transform_7, window_bounds = array<i64: 32, 64>}, {transform_indices = @transform_8, window_bounds = array<i64: 1, 64>}, {transform_indices = @transform_9, window_bounds = array<i64: 8, 64>}, {pipeline_mode = #tpu.pipeline_mode<synchronous>, transform_indices = @transform_10, window_bounds = array<i64: 2, 8, 32>}, {pipeline_mode = #tpu.pipeline_mode<synchronous>, transform_indices = @transform_11, window_bounds = array<i64: 2, 8, 32>}]} {
    %c0_i32 = arith.constant 0 : i32
    %0 = arith.cmpi eq, %arg0, %c0_i32 : i32
    %1 = arith.extui %0 : i1 to i32
    %c0_i32_0 = arith.constant 0 : i32
    %2 = arith.cmpi ne, %1, %c0_i32_0 : i32
    scf.if %2 {
      %c0_8 = arith.constant 0 : index
      %c0_9 = arith.constant 0 : index
      %10 = vector.load %arg2[%c0_8, %c0_9] : memref<16x128xf32, #tpu.memory_space<vmem>>, vector<16x128xf32>
      %c0_10 = arith.constant 0 : index
      %c0_11 = arith.constant 0 : index
      %11 = vector.load %arg3[%c0_10, %c0_11] : memref<32x128xf32, #tpu.memory_space<vmem>>, vector<32x128xf32>
      %c0_12 = arith.constant 0 : index
      %c0_13 = arith.constant 0 : index
      %12 = vector.load %arg4[%c0_12, %c0_13] : memref<1x128xf32, #tpu.memory_space<vmem>>, vector<1x128xf32>
      %cst_14 = arith.constant 0.000000e+00 : f32
      %13 = vector.broadcast %cst_14 : f32 to vector<8x32xf32>
      %cst_15 = arith.constant 0.000000e+00 : f32
      %14 = vector.broadcast %cst_15 : f32 to vector<8x32xf32>
      %c0_16 = arith.constant 0 : index
      %c0_17 = arith.constant 0 : index
      %15 = vector.load %arg1[%c0_16, %c0_17] : memref<64x16xf32, #tpu.memory_space<vmem>>, vector<64x16xf32>
      %cst_18 = arith.constant dense<0.000000e+00> : vector<64x128xf32>
      %16 = tpu.matmul %15, %10, %cst_18 {dimension_numbers = #tpu.dot_dimension_numbers<[1], [0], [0], [1], [0, 0, 1, 1], [], []>} : vector<64x16xf32>, vector<16x128xf32>, vector<64x128xf32> -> vector<64x128xf32>
      %17 = vector.broadcast %12 : vector<1x128xf32> to vector<64x128xf32>
      %18 = arith.addf %16, %17 : vector<64x128xf32>
      %c0_19 = arith.constant 0 : index
      %c0_20 = arith.constant 0 : index
      %19 = vector.load %arg15[%c0_19, %c0_20] : memref<64x128xf32, #tpu.memory_space<vmem>>, vector<64x128xf32>
      tpu.vector_store %arg15[%c0_19, %c0_20], %18 {strides = array<i32>} : memref<64x128xf32, #tpu.memory_space<vmem>>, vector<64x128xf32>,
      %c0_i32_21 = arith.constant 0 : i32
      %c8_i32 = arith.constant 8 : i32
      %20 = arith.muli %c0_i32_21, %c8_i32 : i32
      %21 = tpu.assume_multiple %20, 8 : i32
      %22 = arith.index_cast %21 : i32 to index
      %c0_22 = arith.constant 0 : index
      %23 = vector.load %arg15[%22, %c0_22] : memref<64x128xf32, #tpu.memory_space<vmem>>, vector<8x128xf32>
      %cst_23 = arith.constant dense<0.000000e+00> : vector<8x128xf32>
      %24 = tpu.matmul %13, %11, %cst_23 {dimension_numbers = #tpu.dot_dimension_numbers<[1], [0], [0], [1], [0, 0, 1, 1], [], []>} : vector<8x32xf32>, vector<32x128xf32>, vector<8x128xf32> -> vector<8x128xf32>
      %25 = arith.addf %23, %24 : vector<8x128xf32>
      %26 = vector.extract_strided_slice %25 {offsets = [0, 0], sizes = [8, 96], strides = [1, 1]} : vector<8x128xf32> to vector<8x96xf32>
      %27 = arith.negf %26 : vector<8x96xf32>
      %28 = math.exp %27 : vector<8x96xf32>
      %cst_24 = arith.constant 1.000000e+00 : f32
      %29 = vector.broadcast %cst_24 : f32 to vector<8x96xf32>
      %30 = arith.addf %29, %28 : vector<8x96xf32>
      %31 = arith.divf %29, %30 : vector<8x96xf32>
      %32 = vector.extract_strided_slice %25 {offsets = [0, 96], sizes = [8, 32], strides = [1, 1]} : vector<8x128xf32> to vector<8x32xf32>
      %33 = math.tanh %32 : vector<8x32xf32>
      %34 = vector.extract_strided_slice %31 {offsets = [0, 0], sizes = [8, 32], strides = [1, 1]} : vector<8x96xf32> to vector<8x32xf32>
      %35 = vector.extract_strided_slice %31 {offsets = [0, 32], sizes = [8, 32], strides = [1, 1]} : vector<8x96xf32> to vector<8x32xf32>
      %36 = vector.extract_strided_slice %31 {offsets = [0, 64], sizes = [8, 32], strides = [1, 1]} : vector<8x96xf32> to vector<8x32xf32>
      %37 = arith.mulf %35, %14 : vector<8x32xf32>
      %38 = arith.mulf %34, %33 : vector<8x32xf32>
      %39 = arith.addf %37, %38 : vector<8x32xf32>
      %40 = math.tanh %39 : vector<8x32xf32>
      %41 = arith.mulf %36, %40 : vector<8x32xf32>
      %c0_i32_25 = arith.constant 0 : i32
      %42 = arith.addi %c0_i32_25, %c0_i32_21 : i32
      %c8_i32_26 = arith.constant 8 : i32
      %43 = arith.muli %42, %c8_i32_26 : i32
      %44 = tpu.assume_multiple %43, 8 : i32
      %45 = arith.index_cast %44 : i32 to index
      %c0_27 = arith.constant 0 : index
      %46 = vector.load %arg13[%45, %c0_27] : memref<64x32xf32, #tpu.memory_space<vmem>>, vector<8x32xf32>
      tpu.vector_store %arg13[%45, %c0_27], %41 {strides = array<i32>} : memref<64x32xf32, #tpu.memory_space<vmem>>, vector<8x32xf32>,
      %c1_i32 = arith.constant 1 : i32
      %c8_i32_28 = arith.constant 8 : i32
      %47 = arith.muli %c1_i32, %c8_i32_28 : i32
      %48 = tpu.assume_multiple %47, 8 : i32
      %49 = arith.index_cast %48 : i32 to index
      %c0_29 = arith.constant 0 : index
      %50 = vector.load %arg15[%49, %c0_29] : memref<64x128xf32, #tpu.memory_space<vmem>>, vector<8x128xf32>
      %cst_30 = arith.constant dense<0.000000e+00> : vector<8x128xf32>
      %51 = tpu.matmul %41, %11, %cst_30 {dimension_numbers = #tpu.dot_dimension_numbers<[1], [0], [0], [1], [0, 0, 1, 1], [], []>} : vector<8x32xf32>, vector<32x128xf32>, vector<8x128xf32> -> vector<8x128xf32>
      %52 = arith.addf %50, %51 : vector<8x128xf32>
      %53 = vector.extract_strided_slice %52 {offsets = [0, 0], sizes = [8, 96], strides = [1, 1]} : vector<8x128xf32> to vector<8x96xf32>
      %54 = arith.negf %53 : vector<8x96xf32>
      %55 = math.exp %54 : vector<8x96xf32>
      %cst_31 = arith.constant 1.000000e+00 : f32
      %56 = vector.broadcast %cst_31 : f32 to vector<8x96xf32>
      %57 = arith.addf %56, %55 : vector<8x96xf32>
      %58 = arith.divf %56, %57 : vector<8x96xf32>
      %59 = vector.extract_strided_slice %52 {offsets = [0, 96], sizes = [8, 32], strides = [1, 1]} : vector<8x128xf32> to vector<8x32xf32>
      %60 = math.tanh %59 : vector<8x32xf32>
      %61 = vector.extract_strided_slice %58 {offsets = [0, 0], sizes = [8, 32], strides = [1, 1]} : vector<8x96xf32> to vector<8x32xf32>
      %62 = vector.extract_strided_slice %58 {offsets = [0, 32], sizes = [8, 32], strides = [1, 1]} : vector<8x96xf32> to vector<8x32xf32>
      %63 = vector.extract_strided_slice %58 {offsets = [0, 64], sizes = [8, 32], strides = [1, 1]} : vector<8x96xf32> to vector<8x32xf32>
      %64 = arith.mulf %62, %39 : vector<8x32xf32>
      %65 = arith.mulf %61, %60 : vector<8x32xf32>
      %66 = arith.addf %64, %65 : vector<8x32xf32>
      %67 = math.tanh %66 : vector<8x32xf32>
      %68 = arith.mulf %63, %67 : vector<8x32xf32>
      %c0_i32_32 = arith.constant 0 : i32
      %69 = arith.addi %c0_i32_32, %c1_i32 : i32
      %c8_i32_33 = arith.constant 8 : i32
      %70 = arith.muli %69, %c8_i32_33 : i32
      %71 = tpu.assume_multiple %70, 8 : i32
      %72 = arith.index_cast %71 : i32 to index
      %c0_34 = arith.constant 0 : index
      %73 = vector.load %arg13[%72, %c0_34] : memref<64x32xf32, #tpu.memory_space<vmem>>, vector<8x32xf32>
      tpu.vector_store %arg13[%72, %c0_34], %68 {strides = array<i32>} : memref<64x32xf32, #tpu.memory_space<vmem>>, vector<8x32xf32>,
      %c2_i32 = arith.constant 2 : i32
      %c8_i32_35 = arith.constant 8 : i32
      %74 = arith.muli %c2_i32, %c8_i32_35 : i32
      %75 = tpu.assume_multiple %74, 8 : i32
      %76 = arith.index_cast %75 : i32 to index
      %c0_36 = arith.constant 0 : index
      %77 = vector.load %arg15[%76, %c0_36] : memref<64x128xf32, #tpu.memory_space<vmem>>, vector<8x128xf32>
      %cst_37 = arith.constant dense<0.000000e+00> : vector<8x128xf32>
      %78 = tpu.matmul %68, %11, %cst_37 {dimension_numbers = #tpu.dot_dimension_numbers<[1], [0], [0], [1], [0, 0, 1, 1], [], []>} : vector<8x32xf32>, vector<32x128xf32>, vector<8x128xf32> -> vector<8x128xf32>
      %79 = arith.addf %77, %78 : vector<8x128xf32>
      %80 = vector.extract_strided_slice %79 {offsets = [0, 0], sizes = [8, 96], strides = [1, 1]} : vector<8x128xf32> to vector<8x96xf32>
      %81 = arith.negf %80 : vector<8x96xf32>
      %82 = math.exp %81 : vector<8x96xf32>
      %cst_38 = arith.constant 1.000000e+00 : f32
      %83 = vector.broadcast %cst_38 : f32 to vector<8x96xf32>
      %84 = arith.addf %83, %82 : vector<8x96xf32>
      %85 = arith.divf %83, %84 : vector<8x96xf32>
      %86 = vector.extract_strided_slice %79 {offsets = [0, 96], sizes = [8, 32], strides = [1, 1]} : vector<8x128xf32> to vector<8x32xf32>
      %87 = math.tanh %86 : vector<8x32xf32>
      %88 = vector.extract_strided_slice %85 {offsets = [0, 0], sizes = [8, 32], strides = [1, 1]} : vector<8x96xf32> to vector<8x32xf32>
      %89 = vector.extract_strided_slice %85 {offsets = [0, 32], sizes = [8, 32], strides = [1, 1]} : vector<8x96xf32> to vector<8x32xf32>
      %90 = vector.extract_strided_slice %85 {offsets = [0, 64], sizes = [8, 32], strides = [1, 1]} : vector<8x96xf32> to vector<8x32xf32>
      %91 = arith.mulf %89, %66 : vector<8x32xf32>
      %92 = arith.mulf %88, %87 : vector<8x32xf32>
      %93 = arith.addf %91, %92 : vector<8x32xf32>
      %94 = math.tanh %93 : vector<8x32xf32>
      %95 = arith.mulf %90, %94 : vector<8x32xf32>
      %c0_i32_39 = arith.constant 0 : i32
      %96 = arith.addi %c0_i32_39, %c2_i32 : i32
      %c8_i32_40 = arith.constant 8 : i32
      %97 = arith.muli %96, %c8_i32_40 : i32
      %98 = tpu.assume_multiple %97, 8 : i32
      %99 = arith.index_cast %98 : i32 to index
      %c0_41 = arith.constant 0 : index
      %100 = vector.load %arg13[%99, %c0_41] : memref<64x32xf32, #tpu.memory_space<vmem>>, vector<8x32xf32>
      tpu.vector_store %arg13[%99, %c0_41], %95 {strides = array<i32>} : memref<64x32xf32, #tpu.memory_space<vmem>>, vector<8x32xf32>,
      %c3_i32 = arith.constant 3 : i32
      %c8_i32_42 = arith.constant 8 : i32
      %101 = arith.muli %c3_i32, %c8_i32_42 : i32
      %102 = tpu.assume_multiple %101, 8 : i32
      %103 = arith.index_cast %102 : i32 to index
      %c0_43 = arith.constant 0 : index
      %104 = vector.load %arg15[%103, %c0_43] : memref<64x128xf32, #tpu.memory_space<vmem>>, vector<8x128xf32>
      %cst_44 = arith.constant dense<0.000000e+00> : vector<8x128xf32>
      %105 = tpu.matmul %95, %11, %cst_44 {dimension_numbers = #tpu.dot_dimension_numbers<[1], [0], [0], [1], [0, 0, 1, 1], [], []>} : vector<8x32xf32>, vector<32x128xf32>, vector<8x128xf32> -> vector<8x128xf32>
      %106 = arith.addf %104, %105 : vector<8x128xf32>
      %107 = vector.extract_strided_slice %106 {offsets = [0, 0], sizes = [8, 96], strides = [1, 1]} : vector<8x128xf32> to vector<8x96xf32>
      %108 = arith.negf %107 : vector<8x96xf32>
      %109 = math.exp %108 : vector<8x96xf32>
      %cst_45 = arith.constant 1.000000e+00 : f32
      %110 = vector.broadcast %cst_45 : f32 to vector<8x96xf32>
      %111 = arith.addf %110, %109 : vector<8x96xf32>
      %112 = arith.divf %110, %111 : vector<8x96xf32>
      %113 = vector.extract_strided_slice %106 {offsets = [0, 96], sizes = [8, 32], strides = [1, 1]} : vector<8x128xf32> to vector<8x32xf32>
      %114 = math.tanh %113 : vector<8x32xf32>
      %115 = vector.extract_strided_slice %112 {offsets = [0, 0], sizes = [8, 32], strides = [1, 1]} : vector<8x96xf32> to vector<8x32xf32>
      %116 = vector.extract_strided_slice %112 {offsets = [0, 32], sizes = [8, 32], strides = [1, 1]} : vector<8x96xf32> to vector<8x32xf32>
      %117 = vector.extract_strided_slice %112 {offsets = [0, 64], sizes = [8, 32], strides = [1, 1]} : vector<8x96xf32> to vector<8x32xf32>
      %118 = arith.mulf %116, %93 : vector<8x32xf32>
      %119 = arith.mulf %115, %114 : vector<8x32xf32>
      %120 = arith.addf %118, %119 : vector<8x32xf32>
      %121 = math.tanh %120 : vector<8x32xf32>
      %122 = arith.mulf %117, %121 : vector<8x32xf32>
      %c0_i32_46 = arith.constant 0 : i32
      %123 = arith.addi %c0_i32_46, %c3_i32 : i32
      %c8_i32_47 = arith.constant 8 : i32
      %124 = arith.muli %123, %c8_i32_47 : i32
      %125 = tpu.assume_multiple %124, 8 : i32
      %126 = arith.index_cast %125 : i32 to index
      %c0_48 = arith.constant 0 : index
      %127 = vector.load %arg13[%126, %c0_48] : memref<64x32xf32, #tpu.memory_space<vmem>>, vector<8x32xf32>
      tpu.vector_store %arg13[%126, %c0_48], %122 {strides = array<i32>} : memref<64x32xf32, #tpu.memory_space<vmem>>, vector<8x32xf32>,
      %c4_i32 = arith.constant 4 : i32
      %c8_i32_49 = arith.constant 8 : i32
      %128 = arith.muli %c4_i32, %c8_i32_49 : i32
      %129 = tpu.assume_multiple %128, 8 : i32
      %130 = arith.index_cast %129 : i32 to index
      %c0_50 = arith.constant 0 : index
      %131 = vector.load %arg15[%130, %c0_50] : memref<64x128xf32, #tpu.memory_space<vmem>>, vector<8x128xf32>
      %cst_51 = arith.constant dense<0.000000e+00> : vector<8x128xf32>
      %132 = tpu.matmul %122, %11, %cst_51 {dimension_numbers = #tpu.dot_dimension_numbers<[1], [0], [0], [1], [0, 0, 1, 1], [], []>} : vector<8x32xf32>, vector<32x128xf32>, vector<8x128xf32> -> vector<8x128xf32>
      %133 = arith.addf %131, %132 : vector<8x128xf32>
      %134 = vector.extract_strided_slice %133 {offsets = [0, 0], sizes = [8, 96], strides = [1, 1]} : vector<8x128xf32> to vector<8x96xf32>
      %135 = arith.negf %134 : vector<8x96xf32>
      %136 = math.exp %135 : vector<8x96xf32>
      %cst_52 = arith.constant 1.000000e+00 : f32
      %137 = vector.broadcast %cst_52 : f32 to vector<8x96xf32>
      %138 = arith.addf %137, %136 : vector<8x96xf32>
      %139 = arith.divf %137, %138 : vector<8x96xf32>
      %140 = vector.extract_strided_slice %133 {offsets = [0, 96], sizes = [8, 32], strides = [1, 1]} : vector<8x128xf32> to vector<8x32xf32>
      %141 = math.tanh %140 : vector<8x32xf32>
      %142 = vector.extract_strided_slice %139 {offsets = [0, 0], sizes = [8, 32], strides = [1, 1]} : vector<8x96xf32> to vector<8x32xf32>
      %143 = vector.extract_strided_slice %139 {offsets = [0, 32], sizes = [8, 32], strides = [1, 1]} : vector<8x96xf32> to vector<8x32xf32>
      %144 = vector.extract_strided_slice %139 {offsets = [0, 64], sizes = [8, 32], strides = [1, 1]} : vector<8x96xf32> to vector<8x32xf32>
      %145 = arith.mulf %143, %120 : vector<8x32xf32>
      %146 = arith.mulf %142, %141 : vector<8x32xf32>
      %147 = arith.addf %145, %146 : vector<8x32xf32>
      %148 = math.tanh %147 : vector<8x32xf32>
      %149 = arith.mulf %144, %148 : vector<8x32xf32>
      %c0_i32_53 = arith.constant 0 : i32
      %150 = arith.addi %c0_i32_53, %c4_i32 : i32
      %c8_i32_54 = arith.constant 8 : i32
      %151 = arith.muli %150, %c8_i32_54 : i32
      %152 = tpu.assume_multiple %151, 8 : i32
      %153 = arith.index_cast %152 : i32 to index
      %c0_55 = arith.constant 0 : index
      %154 = vector.load %arg13[%153, %c0_55] : memref<64x32xf32, #tpu.memory_space<vmem>>, vector<8x32xf32>
      tpu.vector_store %arg13[%153, %c0_55], %149 {strides = array<i32>} : memref<64x32xf32, #tpu.memory_space<vmem>>, vector<8x32xf32>,
      %c5_i32 = arith.constant 5 : i32
      %c8_i32_56 = arith.constant 8 : i32
      %155 = arith.muli %c5_i32, %c8_i32_56 : i32
      %156 = tpu.assume_multiple %155, 8 : i32
      %157 = arith.index_cast %156 : i32 to index
      %c0_57 = arith.constant 0 : index
      %158 = vector.load %arg15[%157, %c0_57] : memref<64x128xf32, #tpu.memory_space<vmem>>, vector<8x128xf32>
      %cst_58 = arith.constant dense<0.000000e+00> : vector<8x128xf32>
      %159 = tpu.matmul %149, %11, %cst_58 {dimension_numbers = #tpu.dot_dimension_numbers<[1], [0], [0], [1], [0, 0, 1, 1], [], []>} : vector<8x32xf32>, vector<32x128xf32>, vector<8x128xf32> -> vector<8x128xf32>
      %160 = arith.addf %158, %159 : vector<8x128xf32>
      %161 = vector.extract_strided_slice %160 {offsets = [0, 0], sizes = [8, 96], strides = [1, 1]} : vector<8x128xf32> to vector<8x96xf32>
      %162 = arith.negf %161 : vector<8x96xf32>
      %163 = math.exp %162 : vector<8x96xf32>
      %cst_59 = arith.constant 1.000000e+00 : f32
      %164 = vector.broadcast %cst_59 : f32 to vector<8x96xf32>
      %165 = arith.addf %164, %163 : vector<8x96xf32>
      %166 = arith.divf %164, %165 : vector<8x96xf32>
      %167 = vector.extract_strided_slice %160 {offsets = [0, 96], sizes = [8, 32], strides = [1, 1]} : vector<8x128xf32> to vector<8x32xf32>
      %168 = math.tanh %167 : vector<8x32xf32>
      %169 = vector.extract_strided_slice %166 {offsets = [0, 0], sizes = [8, 32], strides = [1, 1]} : vector<8x96xf32> to vector<8x32xf32>
      %170 = vector.extract_strided_slice %166 {offsets = [0, 32], sizes = [8, 32], strides = [1, 1]} : vector<8x96xf32> to vector<8x32xf32>
      %171 = vector.extract_strided_slice %166 {offsets = [0, 64], sizes = [8, 32], strides = [1, 1]} : vector<8x96xf32> to vector<8x32xf32>
      %172 = arith.mulf %170, %147 : vector<8x32xf32>
      %173 = arith.mulf %169, %168 : vector<8x32xf32>
      %174 = arith.addf %172, %173 : vector<8x32xf32>
      %175 = math.tanh %174 : vector<8x32xf32>
      %176 = arith.mulf %171, %175 : vector<8x32xf32>
      %c0_i32_60 = arith.constant 0 : i32
      %177 = arith.addi %c0_i32_60, %c5_i32 : i32
      %c8_i32_61 = arith.constant 8 : i32
      %178 = arith.muli %177, %c8_i32_61 : i32
      %179 = tpu.assume_multiple %178, 8 : i32
      %180 = arith.index_cast %179 : i32 to index
      %c0_62 = arith.constant 0 : index
      %181 = vector.load %arg13[%180, %c0_62] : memref<64x32xf32, #tpu.memory_space<vmem>>, vector<8x32xf32>
      tpu.vector_store %arg13[%180, %c0_62], %176 {strides = array<i32>} : memref<64x32xf32, #tpu.memory_space<vmem>>, vector<8x32xf32>,
      %c6_i32 = arith.constant 6 : i32
      %c8_i32_63 = arith.constant 8 : i32
      %182 = arith.muli %c6_i32, %c8_i32_63 : i32
      %183 = tpu.assume_multiple %182, 8 : i32
      %184 = arith.index_cast %183 : i32 to index
      %c0_64 = arith.constant 0 : index
      %185 = vector.load %arg15[%184, %c0_64] : memref<64x128xf32, #tpu.memory_space<vmem>>, vector<8x128xf32>
      %cst_65 = arith.constant dense<0.000000e+00> : vector<8x128xf32>
      %186 = tpu.matmul %176, %11, %cst_65 {dimension_numbers = #tpu.dot_dimension_numbers<[1], [0], [0], [1], [0, 0, 1, 1], [], []>} : vector<8x32xf32>, vector<32x128xf32>, vector<8x128xf32> -> vector<8x128xf32>
      %187 = arith.addf %185, %186 : vector<8x128xf32>
      %188 = vector.extract_strided_slice %187 {offsets = [0, 0], sizes = [8, 96], strides = [1, 1]} : vector<8x128xf32> to vector<8x96xf32>
      %189 = arith.negf %188 : vector<8x96xf32>
      %190 = math.exp %189 : vector<8x96xf32>
      %cst_66 = arith.constant 1.000000e+00 : f32
      %191 = vector.broadcast %cst_66 : f32 to vector<8x96xf32>
      %192 = arith.addf %191, %190 : vector<8x96xf32>
      %193 = arith.divf %191, %192 : vector<8x96xf32>
      %194 = vector.extract_strided_slice %187 {offsets = [0, 96], sizes = [8, 32], strides = [1, 1]} : vector<8x128xf32> to vector<8x32xf32>
      %195 = math.tanh %194 : vector<8x32xf32>
      %196 = vector.extract_strided_slice %193 {offsets = [0, 0], sizes = [8, 32], strides = [1, 1]} : vector<8x96xf32> to vector<8x32xf32>
      %197 = vector.extract_strided_slice %193 {offsets = [0, 32], sizes = [8, 32], strides = [1, 1]} : vector<8x96xf32> to vector<8x32xf32>
      %198 = vector.extract_strided_slice %193 {offsets = [0, 64], sizes = [8, 32], strides = [1, 1]} : vector<8x96xf32> to vector<8x32xf32>
      %199 = arith.mulf %197, %174 : vector<8x32xf32>
      %200 = arith.mulf %196, %195 : vector<8x32xf32>
      %201 = arith.addf %199, %200 : vector<8x32xf32>
      %202 = math.tanh %201 : vector<8x32xf32>
      %203 = arith.mulf %198, %202 : vector<8x32xf32>
      %c0_i32_67 = arith.constant 0 : i32
      %204 = arith.addi %c0_i32_67, %c6_i32 : i32
      %c8_i32_68 = arith.constant 8 : i32
      %205 = arith.muli %204, %c8_i32_68 : i32
      %206 = tpu.assume_multiple %205, 8 : i32
      %207 = arith.index_cast %206 : i32 to index
      %c0_69 = arith.constant 0 : index
      %208 = vector.load %arg13[%207, %c0_69] : memref<64x32xf32, #tpu.memory_space<vmem>>, vector<8x32xf32>
      tpu.vector_store %arg13[%207, %c0_69], %203 {strides = array<i32>} : memref<64x32xf32, #tpu.memory_space<vmem>>, vector<8x32xf32>,
      %c7_i32 = arith.constant 7 : i32
      %c8_i32_70 = arith.constant 8 : i32
      %209 = arith.muli %c7_i32, %c8_i32_70 : i32
      %210 = tpu.assume_multiple %209, 8 : i32
      %211 = arith.index_cast %210 : i32 to index
      %c0_71 = arith.constant 0 : index
      %212 = vector.load %arg15[%211, %c0_71] : memref<64x128xf32, #tpu.memory_space<vmem>>, vector<8x128xf32>
      %cst_72 = arith.constant dense<0.000000e+00> : vector<8x128xf32>
      %213 = tpu.matmul %203, %11, %cst_72 {dimension_numbers = #tpu.dot_dimension_numbers<[1], [0], [0], [1], [0, 0, 1, 1], [], []>} : vector<8x32xf32>, vector<32x128xf32>, vector<8x128xf32> -> vector<8x128xf32>
      %214 = arith.addf %212, %213 : vector<8x128xf32>
      %215 = vector.extract_strided_slice %214 {offsets = [0, 0], sizes = [8, 96], strides = [1, 1]} : vector<8x128xf32> to vector<8x96xf32>
      %216 = arith.negf %215 : vector<8x96xf32>
      %217 = math.exp %216 : vector<8x96xf32>
      %cst_73 = arith.constant 1.000000e+00 : f32
      %218 = vector.broadcast %cst_73 : f32 to vector<8x96xf32>
      %219 = arith.addf %218, %217 : vector<8x96xf32>
      %220 = arith.divf %218, %219 : vector<8x96xf32>
      %221 = vector.extract_strided_slice %214 {offsets = [0, 96], sizes = [8, 32], strides = [1, 1]} : vector<8x128xf32> to vector<8x32xf32>
      %222 = math.tanh %221 : vector<8x32xf32>
      %223 = vector.extract_strided_slice %220 {offsets = [0, 0], sizes = [8, 32], strides = [1, 1]} : vector<8x96xf32> to vector<8x32xf32>
      %224 = vector.extract_strided_slice %220 {offsets = [0, 32], sizes = [8, 32], strides = [1, 1]} : vector<8x96xf32> to vector<8x32xf32>
      %225 = vector.extract_strided_slice %220 {offsets = [0, 64], sizes = [8, 32], strides = [1, 1]} : vector<8x96xf32> to vector<8x32xf32>
      %226 = arith.mulf %224, %201 : vector<8x32xf32>
      %227 = arith.mulf %223, %222 : vector<8x32xf32>
      %228 = arith.addf %226, %227 : vector<8x32xf32>
      %229 = math.tanh %228 : vector<8x32xf32>
      %230 = arith.mulf %225, %229 : vector<8x32xf32>
      %c0_i32_74 = arith.constant 0 : i32
      %231 = arith.addi %c0_i32_74, %c7_i32 : i32
      %c8_i32_75 = arith.constant 8 : i32
      %232 = arith.muli %231, %c8_i32_75 : i32
      %233 = tpu.assume_multiple %232, 8 : i32
      %234 = arith.index_cast %233 : i32 to index
      %c0_76 = arith.constant 0 : index
      %235 = vector.load %arg13[%234, %c0_76] : memref<64x32xf32, #tpu.memory_space<vmem>>, vector<8x32xf32>
      tpu.vector_store %arg13[%234, %c0_76], %230 {strides = array<i32>} : memref<64x32xf32, #tpu.memory_space<vmem>>, vector<8x32xf32>,
      %c8_i32_77 = arith.constant 8 : i32
      %c0_78 = arith.constant 0 : index
      %c0_79 = arith.constant 0 : index
      %c0_80 = arith.constant 0 : index
      %236 = vector.load %arg11[%c0_78, %c0_79, %c0_80] : memref<2x8x32xf32, #tpu.memory_space<vmem>>, vector<1x8x32xf32>
      %237 = vector.shape_cast %236 : vector<1x8x32xf32> to vector<8x32xf32>
      %238 = vector.shape_cast %230 : vector<8x32xf32> to vector<1x8x32xf32>
      tpu.vector_store %arg11[%c0_78, %c0_79, %c0_80], %238 {strides = array<i32>} : memref<2x8x32xf32, #tpu.memory_space<vmem>>, vector<1x8x32xf32>,
      %c0_81 = arith.constant 0 : index
      %c0_82 = arith.constant 0 : index
      %c0_83 = arith.constant 0 : index
      %239 = vector.load %arg12[%c0_81, %c0_82, %c0_83] : memref<2x8x32xf32, #tpu.memory_space<vmem>>, vector<1x8x32xf32>
      %240 = vector.shape_cast %239 : vector<1x8x32xf32> to vector<8x32xf32>
      %241 = vector.shape_cast %228 : vector<8x32xf32> to vector<1x8x32xf32>
      tpu.vector_store %arg12[%c0_81, %c0_82, %c0_83], %241 {strides = array<i32>} : memref<2x8x32xf32, #tpu.memory_space<vmem>>, vector<1x8x32xf32>,
      %c0_84 = arith.constant 0 : index
      %c0_85 = arith.constant 0 : index
      %242 = vector.load %arg5[%c0_84, %c0_85] : memref<32x128xf32, #tpu.memory_space<vmem>>, vector<32x128xf32>
      %c0_86 = arith.constant 0 : index
      %c0_87 = arith.constant 0 : index
      %243 = vector.load %arg6[%c0_86, %c0_87] : memref<32x128xf32, #tpu.memory_space<vmem>>, vector<32x128xf32>
      %c0_88 = arith.constant 0 : index
      %c0_89 = arith.constant 0 : index
      %244 = vector.load %arg7[%c0_88, %c0_89] : memref<1x128xf32, #tpu.memory_space<vmem>>, vector<1x128xf32>
      %cst_90 = arith.constant 0.000000e+00 : f32
      %245 = vector.broadcast %cst_90 : f32 to vector<8x32xf32>
      %cst_91 = arith.constant 0.000000e+00 : f32
      %246 = vector.broadcast %cst_91 : f32 to vector<8x32xf32>
      %c0_92 = arith.constant 0 : index
      %c0_93 = arith.constant 0 : index
      %247 = vector.load %arg13[%c0_92, %c0_93] : memref<64x32xf32, #tpu.memory_space<vmem>>, vector<64x32xf32>
      %cst_94 = arith.constant dense<0.000000e+00> : vector<64x128xf32>
      %248 = tpu.matmul %247, %242, %cst_94 {dimension_numbers = #tpu.dot_dimension_numbers<[1], [0], [0], [1], [0, 0, 1, 1], [], []>} : vector<64x32xf32>, vector<32x128xf32>, vector<64x128xf32> -> vector<64x128xf32>
      %249 = vector.broadcast %244 : vector<1x128xf32> to vector<64x128xf32>
      %250 = arith.addf %248, %249 : vector<64x128xf32>
      %c0_95 = arith.constant 0 : index
      %c0_96 = arith.constant 0 : index
      %251 = vector.load %arg15[%c0_95, %c0_96] : memref<64x128xf32, #tpu.memory_space<vmem>>, vector<64x128xf32>
      tpu.vector_store %arg15[%c0_95, %c0_96], %250 {strides = array<i32>} : memref<64x128xf32, #tpu.memory_space<vmem>>, vector<64x128xf32>,
      %c0_i32_97 = arith.constant 0 : i32
      %c8_i32_98 = arith.constant 8 : i32
      %252 = arith.muli %c0_i32_97, %c8_i32_98 : i32
      %253 = tpu.assume_multiple %252, 8 : i32
      %254 = arith.index_cast %253 : i32 to index
      %c0_99 = arith.constant 0 : index
      %255 = vector.load %arg15[%254, %c0_99] : memref<64x128xf32, #tpu.memory_space<vmem>>, vector<8x128xf32>
      %cst_100 = arith.constant dense<0.000000e+00> : vector<8x128xf32>
      %256 = tpu.matmul %245, %243, %cst_100 {dimension_numbers = #tpu.dot_dimension_numbers<[1], [0], [0], [1], [0, 0, 1, 1], [], []>} : vector<8x32xf32>, vector<32x128xf32>, vector<8x128xf32> -> vector<8x128xf32>
      %257 = arith.addf %255, %256 : vector<8x128xf32>
      %258 = vector.extract_strided_slice %257 {offsets = [0, 0], sizes = [8, 96], strides = [1, 1]} : vector<8x128xf32> to vector<8x96xf32>
      %259 = arith.negf %258 : vector<8x96xf32>
      %260 = math.exp %259 : vector<8x96xf32>
      %cst_101 = arith.constant 1.000000e+00 : f32
      %261 = vector.broadcast %cst_101 : f32 to vector<8x96xf32>
      %262 = arith.addf %261, %260 : vector<8x96xf32>
      %263 = arith.divf %261, %262 : vector<8x96xf32>
      %264 = vector.extract_strided_slice %257 {offsets = [0, 96], sizes = [8, 32], strides = [1, 1]} : vector<8x128xf32> to vector<8x32xf32>
      %265 = math.tanh %264 : vector<8x32xf32>
      %266 = vector.extract_strided_slice %263 {offsets = [0, 0], sizes = [8, 32], strides = [1, 1]} : vector<8x96xf32> to vector<8x32xf32>
      %267 = vector.extract_strided_slice %263 {offsets = [0, 32], sizes = [8, 32], strides = [1, 1]} : vector<8x96xf32> to vector<8x32xf32>
      %268 = vector.extract_strided_slice %263 {offsets = [0, 64], sizes = [8, 32], strides = [1, 1]} : vector<8x96xf32> to vector<8x32xf32>
      %269 = arith.mulf %267, %246 : vector<8x32xf32>
      %270 = arith.mulf %266, %265 : vector<8x32xf32>
      %271 = arith.addf %269, %270 : vector<8x32xf32>
      %272 = math.tanh %271 : vector<8x32xf32>
      %273 = arith.mulf %268, %272 : vector<8x32xf32>
      %c1_i32_102 = arith.constant 1 : i32
      %c8_i32_103 = arith.constant 8 : i32
      %274 = arith.muli %c1_i32_102, %c8_i32_103 : i32
      %275 = tpu.assume_multiple %274, 8 : i32
      %276 = arith.index_cast %275 : i32 to index
      %c0_104 = arith.constant 0 : index
      %277 = vector.load %arg15[%276, %c0_104] : memref<64x128xf32, #tpu.memory_space<vmem>>, vector<8x128xf32>
      %cst_105 = arith.constant dense<0.000000e+00> : vector<8x128xf32>
      %278 = tpu.matmul %273, %243, %cst_105 {dimension_numbers = #tpu.dot_dimension_numbers<[1], [0], [0], [1], [0, 0, 1, 1], [], []>} : vector<8x32xf32>, vector<32x128xf32>, vector<8x128xf32> -> vector<8x128xf32>
      %279 = arith.addf %277, %278 : vector<8x128xf32>
      %280 = vector.extract_strided_slice %279 {offsets = [0, 0], sizes = [8, 96], strides = [1, 1]} : vector<8x128xf32> to vector<8x96xf32>
      %281 = arith.negf %280 : vector<8x96xf32>
      %282 = math.exp %281 : vector<8x96xf32>
      %cst_106 = arith.constant 1.000000e+00 : f32
      %283 = vector.broadcast %cst_106 : f32 to vector<8x96xf32>
      %284 = arith.addf %283, %282 : vector<8x96xf32>
      %285 = arith.divf %283, %284 : vector<8x96xf32>
      %286 = vector.extract_strided_slice %279 {offsets = [0, 96], sizes = [8, 32], strides = [1, 1]} : vector<8x128xf32> to vector<8x32xf32>
      %287 = math.tanh %286 : vector<8x32xf32>
      %288 = vector.extract_strided_slice %285 {offsets = [0, 0], sizes = [8, 32], strides = [1, 1]} : vector<8x96xf32> to vector<8x32xf32>
      %289 = vector.extract_strided_slice %285 {offsets = [0, 32], sizes = [8, 32], strides = [1, 1]} : vector<8x96xf32> to vector<8x32xf32>
      %290 = vector.extract_strided_slice %285 {offsets = [0, 64], sizes = [8, 32], strides = [1, 1]} : vector<8x96xf32> to vector<8x32xf32>
      %291 = arith.mulf %289, %271 : vector<8x32xf32>
      %292 = arith.mulf %288, %287 : vector<8x32xf32>
      %293 = arith.addf %291, %292 : vector<8x32xf32>
      %294 = math.tanh %293 : vector<8x32xf32>
      %295 = arith.mulf %290, %294 : vector<8x32xf32>
      %c2_i32_107 = arith.constant 2 : i32
      %c8_i32_108 = arith.constant 8 : i32
      %296 = arith.muli %c2_i32_107, %c8_i32_108 : i32
      %297 = tpu.assume_multiple %296, 8 : i32
      %298 = arith.index_cast %297 : i32 to index
      %c0_109 = arith.constant 0 : index
      %299 = vector.load %arg15[%298, %c0_109] : memref<64x128xf32, #tpu.memory_space<vmem>>, vector<8x128xf32>
      %cst_110 = arith.constant dense<0.000000e+00> : vector<8x128xf32>
      %300 = tpu.matmul %295, %243, %cst_110 {dimension_numbers = #tpu.dot_dimension_numbers<[1], [0], [0], [1], [0, 0, 1, 1], [], []>} : vector<8x32xf32>, vector<32x128xf32>, vector<8x128xf32> -> vector<8x128xf32>
      %301 = arith.addf %299, %300 : vector<8x128xf32>
      %302 = vector.extract_strided_slice %301 {offsets = [0, 0], sizes = [8, 96], strides = [1, 1]} : vector<8x128xf32> to vector<8x96xf32>
      %303 = arith.negf %302 : vector<8x96xf32>
      %304 = math.exp %303 : vector<8x96xf32>
      %cst_111 = arith.constant 1.000000e+00 : f32
      %305 = vector.broadcast %cst_111 : f32 to vector<8x96xf32>
      %306 = arith.addf %305, %304 : vector<8x96xf32>
      %307 = arith.divf %305, %306 : vector<8x96xf32>
      %308 = vector.extract_strided_slice %301 {offsets = [0, 96], sizes = [8, 32], strides = [1, 1]} : vector<8x128xf32> to vector<8x32xf32>
      %309 = math.tanh %308 : vector<8x32xf32>
      %310 = vector.extract_strided_slice %307 {offsets = [0, 0], sizes = [8, 32], strides = [1, 1]} : vector<8x96xf32> to vector<8x32xf32>
      %311 = vector.extract_strided_slice %307 {offsets = [0, 32], sizes = [8, 32], strides = [1, 1]} : vector<8x96xf32> to vector<8x32xf32>
      %312 = vector.extract_strided_slice %307 {offsets = [0, 64], sizes = [8, 32], strides = [1, 1]} : vector<8x96xf32> to vector<8x32xf32>
      %313 = arith.mulf %311, %293 : vector<8x32xf32>
      %314 = arith.mulf %310, %309 : vector<8x32xf32>
      %315 = arith.addf %313, %314 : vector<8x32xf32>
      %316 = math.tanh %315 : vector<8x32xf32>
      %317 = arith.mulf %312, %316 : vector<8x32xf32>
      %c3_i32_112 = arith.constant 3 : i32
      %c8_i32_113 = arith.constant 8 : i32
      %318 = arith.muli %c3_i32_112, %c8_i32_113 : i32
      %319 = tpu.assume_multiple %318, 8 : i32
      %320 = arith.index_cast %319 : i32 to index
      %c0_114 = arith.constant 0 : index
      %321 = vector.load %arg15[%320, %c0_114] : memref<64x128xf32, #tpu.memory_space<vmem>>, vector<8x128xf32>
      %cst_115 = arith.constant dense<0.000000e+00> : vector<8x128xf32>
      %322 = tpu.matmul %317, %243, %cst_115 {dimension_numbers = #tpu.dot_dimension_numbers<[1], [0], [0], [1], [0, 0, 1, 1], [], []>} : vector<8x32xf32>, vector<32x128xf32>, vector<8x128xf32> -> vector<8x128xf32>
      %323 = arith.addf %321, %322 : vector<8x128xf32>
      %324 = vector.extract_strided_slice %323 {offsets = [0, 0], sizes = [8, 96], strides = [1, 1]} : vector<8x128xf32> to vector<8x96xf32>
      %325 = arith.negf %324 : vector<8x96xf32>
      %326 = math.exp %325 : vector<8x96xf32>
      %cst_116 = arith.constant 1.000000e+00 : f32
      %327 = vector.broadcast %cst_116 : f32 to vector<8x96xf32>
      %328 = arith.addf %327, %326 : vector<8x96xf32>
      %329 = arith.divf %327, %328 : vector<8x96xf32>
      %330 = vector.extract_strided_slice %323 {offsets = [0, 96], sizes = [8, 32], strides = [1, 1]} : vector<8x128xf32> to vector<8x32xf32>
      %331 = math.tanh %330 : vector<8x32xf32>
      %332 = vector.extract_strided_slice %329 {offsets = [0, 0], sizes = [8, 32], strides = [1, 1]} : vector<8x96xf32> to vector<8x32xf32>
      %333 = vector.extract_strided_slice %329 {offsets = [0, 32], sizes = [8, 32], strides = [1, 1]} : vector<8x96xf32> to vector<8x32xf32>
      %334 = vector.extract_strided_slice %329 {offsets = [0, 64], sizes = [8, 32], strides = [1, 1]} : vector<8x96xf32> to vector<8x32xf32>
      %335 = arith.mulf %333, %315 : vector<8x32xf32>
      %336 = arith.mulf %332, %331 : vector<8x32xf32>
      %337 = arith.addf %335, %336 : vector<8x32xf32>
      %338 = math.tanh %337 : vector<8x32xf32>
      %339 = arith.mulf %334, %338 : vector<8x32xf32>
      %c4_i32_117 = arith.constant 4 : i32
      %c8_i32_118 = arith.constant 8 : i32
      %340 = arith.muli %c4_i32_117, %c8_i32_118 : i32
      %341 = tpu.assume_multiple %340, 8 : i32
      %342 = arith.index_cast %341 : i32 to index
      %c0_119 = arith.constant 0 : index
      %343 = vector.load %arg15[%342, %c0_119] : memref<64x128xf32, #tpu.memory_space<vmem>>, vector<8x128xf32>
      %cst_120 = arith.constant dense<0.000000e+00> : vector<8x128xf32>
      %344 = tpu.matmul %339, %243, %cst_120 {dimension_numbers = #tpu.dot_dimension_numbers<[1], [0], [0], [1], [0, 0, 1, 1], [], []>} : vector<8x32xf32>, vector<32x128xf32>, vector<8x128xf32> -> vector<8x128xf32>
      %345 = arith.addf %343, %344 : vector<8x128xf32>
      %346 = vector.extract_strided_slice %345 {offsets = [0, 0], sizes = [8, 96], strides = [1, 1]} : vector<8x128xf32> to vector<8x96xf32>
      %347 = arith.negf %346 : vector<8x96xf32>
      %348 = math.exp %347 : vector<8x96xf32>
      %cst_121 = arith.constant 1.000000e+00 : f32
      %349 = vector.broadcast %cst_121 : f32 to vector<8x96xf32>
      %350 = arith.addf %349, %348 : vector<8x96xf32>
      %351 = arith.divf %349, %350 : vector<8x96xf32>
      %352 = vector.extract_strided_slice %345 {offsets = [0, 96], sizes = [8, 32], strides = [1, 1]} : vector<8x128xf32> to vector<8x32xf32>
      %353 = math.tanh %352 : vector<8x32xf32>
      %354 = vector.extract_strided_slice %351 {offsets = [0, 0], sizes = [8, 32], strides = [1, 1]} : vector<8x96xf32> to vector<8x32xf32>
      %355 = vector.extract_strided_slice %351 {offsets = [0, 32], sizes = [8, 32], strides = [1, 1]} : vector<8x96xf32> to vector<8x32xf32>
      %356 = vector.extract_strided_slice %351 {offsets = [0, 64], sizes = [8, 32], strides = [1, 1]} : vector<8x96xf32> to vector<8x32xf32>
      %357 = arith.mulf %355, %337 : vector<8x32xf32>
      %358 = arith.mulf %354, %353 : vector<8x32xf32>
      %359 = arith.addf %357, %358 : vector<8x32xf32>
      %360 = math.tanh %359 : vector<8x32xf32>
      %361 = arith.mulf %356, %360 : vector<8x32xf32>
      %c5_i32_122 = arith.constant 5 : i32
      %c8_i32_123 = arith.constant 8 : i32
      %362 = arith.muli %c5_i32_122, %c8_i32_123 : i32
      %363 = tpu.assume_multiple %362, 8 : i32
      %364 = arith.index_cast %363 : i32 to index
      %c0_124 = arith.constant 0 : index
      %365 = vector.load %arg15[%364, %c0_124] : memref<64x128xf32, #tpu.memory_space<vmem>>, vector<8x128xf32>
      %cst_125 = arith.constant dense<0.000000e+00> : vector<8x128xf32>
      %366 = tpu.matmul %361, %243, %cst_125 {dimension_numbers = #tpu.dot_dimension_numbers<[1], [0], [0], [1], [0, 0, 1, 1], [], []>} : vector<8x32xf32>, vector<32x128xf32>, vector<8x128xf32> -> vector<8x128xf32>
      %367 = arith.addf %365, %366 : vector<8x128xf32>
      %368 = vector.extract_strided_slice %367 {offsets = [0, 0], sizes = [8, 96], strides = [1, 1]} : vector<8x128xf32> to vector<8x96xf32>
      %369 = arith.negf %368 : vector<8x96xf32>
      %370 = math.exp %369 : vector<8x96xf32>
      %cst_126 = arith.constant 1.000000e+00 : f32
      %371 = vector.broadcast %cst_126 : f32 to vector<8x96xf32>
      %372 = arith.addf %371, %370 : vector<8x96xf32>
      %373 = arith.divf %371, %372 : vector<8x96xf32>
      %374 = vector.extract_strided_slice %367 {offsets = [0, 96], sizes = [8, 32], strides = [1, 1]} : vector<8x128xf32> to vector<8x32xf32>
      %375 = math.tanh %374 : vector<8x32xf32>
      %376 = vector.extract_strided_slice %373 {offsets = [0, 0], sizes = [8, 32], strides = [1, 1]} : vector<8x96xf32> to vector<8x32xf32>
      %377 = vector.extract_strided_slice %373 {offsets = [0, 32], sizes = [8, 32], strides = [1, 1]} : vector<8x96xf32> to vector<8x32xf32>
      %378 = vector.extract_strided_slice %373 {offsets = [0, 64], sizes = [8, 32], strides = [1, 1]} : vector<8x96xf32> to vector<8x32xf32>
      %379 = arith.mulf %377, %359 : vector<8x32xf32>
      %380 = arith.mulf %376, %375 : vector<8x32xf32>
      %381 = arith.addf %379, %380 : vector<8x32xf32>
      %382 = math.tanh %381 : vector<8x32xf32>
      %383 = arith.mulf %378, %382 : vector<8x32xf32>
      %c6_i32_127 = arith.constant 6 : i32
      %c8_i32_128 = arith.constant 8 : i32
      %384 = arith.muli %c6_i32_127, %c8_i32_128 : i32
      %385 = tpu.assume_multiple %384, 8 : i32
      %386 = arith.index_cast %385 : i32 to index
      %c0_129 = arith.constant 0 : index
      %387 = vector.load %arg15[%386, %c0_129] : memref<64x128xf32, #tpu.memory_space<vmem>>, vector<8x128xf32>
      %cst_130 = arith.constant dense<0.000000e+00> : vector<8x128xf32>
      %388 = tpu.matmul %383, %243, %cst_130 {dimension_numbers = #tpu.dot_dimension_numbers<[1], [0], [0], [1], [0, 0, 1, 1], [], []>} : vector<8x32xf32>, vector<32x128xf32>, vector<8x128xf32> -> vector<8x128xf32>
      %389 = arith.addf %387, %388 : vector<8x128xf32>
      %390 = vector.extract_strided_slice %389 {offsets = [0, 0], sizes = [8, 96], strides = [1, 1]} : vector<8x128xf32> to vector<8x96xf32>
      %391 = arith.negf %390 : vector<8x96xf32>
      %392 = math.exp %391 : vector<8x96xf32>
      %cst_131 = arith.constant 1.000000e+00 : f32
      %393 = vector.broadcast %cst_131 : f32 to vector<8x96xf32>
      %394 = arith.addf %393, %392 : vector<8x96xf32>
      %395 = arith.divf %393, %394 : vector<8x96xf32>
      %396 = vector.extract_strided_slice %389 {offsets = [0, 96], sizes = [8, 32], strides = [1, 1]} : vector<8x128xf32> to vector<8x32xf32>
      %397 = math.tanh %396 : vector<8x32xf32>
      %398 = vector.extract_strided_slice %395 {offsets = [0, 0], sizes = [8, 32], strides = [1, 1]} : vector<8x96xf32> to vector<8x32xf32>
      %399 = vector.extract_strided_slice %395 {offsets = [0, 32], sizes = [8, 32], strides = [1, 1]} : vector<8x96xf32> to vector<8x32xf32>
      %400 = vector.extract_strided_slice %395 {offsets = [0, 64], sizes = [8, 32], strides = [1, 1]} : vector<8x96xf32> to vector<8x32xf32>
      %401 = arith.mulf %399, %381 : vector<8x32xf32>
      %402 = arith.mulf %398, %397 : vector<8x32xf32>
      %403 = arith.addf %401, %402 : vector<8x32xf32>
      %404 = math.tanh %403 : vector<8x32xf32>
      %405 = arith.mulf %400, %404 : vector<8x32xf32>
      %c7_i32_132 = arith.constant 7 : i32
      %c8_i32_133 = arith.constant 8 : i32
      %406 = arith.muli %c7_i32_132, %c8_i32_133 : i32
      %407 = tpu.assume_multiple %406, 8 : i32
      %408 = arith.index_cast %407 : i32 to index
      %c0_134 = arith.constant 0 : index
      %409 = vector.load %arg15[%408, %c0_134] : memref<64x128xf32, #tpu.memory_space<vmem>>, vector<8x128xf32>
      %cst_135 = arith.constant dense<0.000000e+00> : vector<8x128xf32>
      %410 = tpu.matmul %405, %243, %cst_135 {dimension_numbers = #tpu.dot_dimension_numbers<[1], [0], [0], [1], [0, 0, 1, 1], [], []>} : vector<8x32xf32>, vector<32x128xf32>, vector<8x128xf32> -> vector<8x128xf32>
      %411 = arith.addf %409, %410 : vector<8x128xf32>
      %412 = vector.extract_strided_slice %411 {offsets = [0, 0], sizes = [8, 96], strides = [1, 1]} : vector<8x128xf32> to vector<8x96xf32>
      %413 = arith.negf %412 : vector<8x96xf32>
      %414 = math.exp %413 : vector<8x96xf32>
      %cst_136 = arith.constant 1.000000e+00 : f32
      %415 = vector.broadcast %cst_136 : f32 to vector<8x96xf32>
      %416 = arith.addf %415, %414 : vector<8x96xf32>
      %417 = arith.divf %415, %416 : vector<8x96xf32>
      %418 = vector.extract_strided_slice %411 {offsets = [0, 96], sizes = [8, 32], strides = [1, 1]} : vector<8x128xf32> to vector<8x32xf32>
      %419 = math.tanh %418 : vector<8x32xf32>
      %420 = vector.extract_strided_slice %417 {offsets = [0, 0], sizes = [8, 32], strides = [1, 1]} : vector<8x96xf32> to vector<8x32xf32>
      %421 = vector.extract_strided_slice %417 {offsets = [0, 32], sizes = [8, 32], strides = [1, 1]} : vector<8x96xf32> to vector<8x32xf32>
      %422 = vector.extract_strided_slice %417 {offsets = [0, 64], sizes = [8, 32], strides = [1, 1]} : vector<8x96xf32> to vector<8x32xf32>
      %423 = arith.mulf %421, %403 : vector<8x32xf32>
      %424 = arith.mulf %420, %419 : vector<8x32xf32>
      %425 = arith.addf %423, %424 : vector<8x32xf32>
      %426 = math.tanh %425 : vector<8x32xf32>
      %427 = arith.mulf %422, %426 : vector<8x32xf32>
      %c8_i32_137 = arith.constant 8 : i32
      %c1 = arith.constant 1 : index
      %c0_138 = arith.constant 0 : index
      %c0_139 = arith.constant 0 : index
      %428 = vector.load %arg11[%c1, %c0_138, %c0_139] : memref<2x8x32xf32, #tpu.memory_space<vmem>>, vector<1x8x32xf32>
      %429 = vector.shape_cast %428 : vector<1x8x32xf32> to vector<8x32xf32>
      %430 = vector.shape_cast %427 : vector<8x32xf32> to vector<1x8x32xf32>
      tpu.vector_store %arg11[%c1, %c0_138, %c0_139], %430 {strides = array<i32>} : memref<2x8x32xf32, #tpu.memory_space<vmem>>, vector<1x8x32xf32>,
      %c1_140 = arith.constant 1 : index
      %c0_141 = arith.constant 0 : index
      %c0_142 = arith.constant 0 : index
      %431 = vector.load %arg12[%c1_140, %c0_141, %c0_142] : memref<2x8x32xf32, #tpu.memory_space<vmem>>, vector<1x8x32xf32>
      %432 = vector.shape_cast %431 : vector<1x8x32xf32> to vector<8x32xf32>
      %433 = vector.shape_cast %425 : vector<8x32xf32> to vector<1x8x32xf32>
      tpu.vector_store %arg12[%c1_140, %c0_141, %c0_142], %433 {strides = array<i32>} : memref<2x8x32xf32, #tpu.memory_space<vmem>>, vector<1x8x32xf32>,
      %c0_143 = arith.constant 0 : index
      %c0_144 = arith.constant 0 : index
      %434 = vector.load %arg14[%c0_143, %c0_144] : memref<8x32xf32, #tpu.memory_space<vmem>>, vector<8x32xf32>
      tpu.vector_store %arg14[%c0_143, %c0_144], %427 {strides = array<i32>} : memref<8x32xf32, #tpu.memory_space<vmem>>, vector<8x32xf32>,
    } else {
    }
    %c0 = arith.constant 0 : index
    %c0_1 = arith.constant 0 : index
    %3 = vector.load %arg8[%c0, %c0_1] : memref<32x64xf32, #tpu.memory_space<vmem>>, vector<32x64xf32>
    %c0_2 = arith.constant 0 : index
    %c0_3 = arith.constant 0 : index
    %4 = vector.load %arg14[%c0_2, %c0_3] : memref<8x32xf32, #tpu.memory_space<vmem>>, vector<8x32xf32>
    %cst = arith.constant dense<0.000000e+00> : vector<8x64xf32>
    %5 = tpu.matmul %4, %3, %cst {dimension_numbers = #tpu.dot_dimension_numbers<[1], [0], [0], [1], [0, 0, 1, 1], [], []>} : vector<8x32xf32>, vector<32x64xf32>, vector<8x64xf32> -> vector<8x64xf32>
    %c0_4 = arith.constant 0 : index
    %c0_5 = arith.constant 0 : index
    %6 = vector.load %arg9[%c0_4, %c0_5] : memref<1x64xf32, #tpu.memory_space<vmem>>, vector<1x64xf32>
    %7 = vector.broadcast %6 : vector<1x64xf32> to vector<8x64xf32>
    %8 = arith.addf %5, %7 : vector<8x64xf32>
    %c0_6 = arith.constant 0 : index
    %c0_7 = arith.constant 0 : index
    %9 = vector.load %arg10[%c0_6, %c0_7] : memref<8x64xf32, #tpu.memory_space<vmem>>, vector<8x64xf32>
    tpu.vector_store %arg10[%c0_6, %c0_7], %8 {strides = array<i32>} : memref<8x64xf32, #tpu.memory_space<vmem>>, vector<8x64xf32>,
    return
  }
  func.func @transform_0(%arg0: i32) -> (i32, i32) {
    %c0_i32 = arith.constant 0 : i32
    %c0_i32_0 = arith.constant 0 : i32
    %c0_i32_1 = arith.constant 0 : i32
    return %c0_i32, %c0_i32_0 : i32, i32
  }
  func.func @transform_1(%arg0: i32) -> (i32, i32) {
    %c0_i32 = arith.constant 0 : i32
    %c0_i32_0 = arith.constant 0 : i32
    %c0_i32_1 = arith.constant 0 : i32
    return %c0_i32, %c0_i32_0 : i32, i32
  }
  func.func @transform_2(%arg0: i32) -> (i32, i32) {
    %c0_i32 = arith.constant 0 : i32
    %c0_i32_0 = arith.constant 0 : i32
    %c0_i32_1 = arith.constant 0 : i32
    return %c0_i32, %c0_i32_0 : i32, i32
  }
  func.func @transform_3(%arg0: i32) -> (i32, i32) {
    %c0_i32 = arith.constant 0 : i32
    %c0_i32_0 = arith.constant 0 : i32
    %c0_i32_1 = arith.constant 0 : i32
    return %c0_i32, %c0_i32_0 : i32, i32
  }
  func.func @transform_4(%arg0: i32) -> (i32, i32) {
    %c0_i32 = arith.constant 0 : i32
    %c0_i32_0 = arith.constant 0 : i32
    %c0_i32_1 = arith.constant 0 : i32
    return %c0_i32, %c0_i32_0 : i32, i32
  }
  func.func @transform_5(%arg0: i32) -> (i32, i32) {
    %c0_i32 = arith.constant 0 : i32
    %c0_i32_0 = arith.constant 0 : i32
    %c0_i32_1 = arith.constant 0 : i32
    return %c0_i32, %c0_i32_0 : i32, i32
  }
  func.func @transform_6(%arg0: i32) -> (i32, i32) {
    %c0_i32 = arith.constant 0 : i32
    %c0_i32_0 = arith.constant 0 : i32
    %c0_i32_1 = arith.constant 0 : i32
    return %c0_i32, %c0_i32_0 : i32, i32
  }
  func.func @transform_7(%arg0: i32) -> (i32, i32) {
    %c0_i32 = arith.constant 0 : i32
    %c0_i32_0 = arith.constant 0 : i32
    return %c0_i32, %arg0 : i32, i32
  }
  func.func @transform_8(%arg0: i32) -> (i32, i32) {
    %c0_i32 = arith.constant 0 : i32
    %c0_i32_0 = arith.constant 0 : i32
    return %c0_i32, %arg0 : i32, i32
  }
  func.func @transform_9(%arg0: i32) -> (i32, i32) {
    %c0_i32 = arith.constant 0 : i32
    %c0_i32_0 = arith.constant 0 : i32
    return %c0_i32, %arg0 : i32, i32
  }
  func.func @transform_10(%arg0: i32) -> (i32, i32, i32) {
    %c0_i32 = arith.constant 0 : i32
    %c0_i32_0 = arith.constant 0 : i32
    %c0_i32_1 = arith.constant 0 : i32
    %c0_i32_2 = arith.constant 0 : i32
    return %c0_i32, %c0_i32_0, %c0_i32_1 : i32, i32, i32
  }
  func.func @transform_11(%arg0: i32) -> (i32, i32, i32) {
    %c0_i32 = arith.constant 0 : i32
    %c0_i32_0 = arith.constant 0 : i32
    %c0_i32_1 = arith.constant 0 : i32
    %c0_i32_2 = arith.constant 0 : i32
    return %c0_i32, %c0_i32_0, %c0_i32_1 : i32, i32, i32
  }
}

</mosaic_0001>

<llo_original>
// kernel: tpu_custom_call.1
$region0: #{tpu_custom_call.1}
  #allocation0 [shape = 'u32[]', space=smem, size = 0x4, offset = 0x4, fixed_abs, tag = 'smem constant byte address 0x4 - core index']
  #allocation1 [shape = 'u32[144,128]{1,0:T(1,128)}', space=vmem, size = 0x12000, scoped, tag = 'internal scratch']
  #allocation2 [shape = 'f32[64,32]{1,0:T(8,128)}', space=vmem, size = 0x8000, scoped, tag = 'scratch operand']
  #allocation3 [shape = 'f32[8,32]{1,0:T(8,128)}', space=vmem, size = 0x1000, scoped, tag = 'scratch operand']
  #allocation4 [shape = 'f32[64,128]{1,0:T(8,128)}', space=vmem, size = 0x8000, scoped, tag = 'scratch operand']
  %s0 = inlined_call_operand.vmem [shape: f32[64,16], index: 0, kind: input, shape index: {}]
  %s1 = inlined_call_operand.hbm [shape: f32[16,128], index: 1, kind: input, shape index: {}]
  %s2 = inlined_call_operand.vmem [shape: f32[32,128], index: 2, kind: input, shape index: {}]
  %s3 = inlined_call_operand.vmem [shape: f32[1,128], index: 3, kind: input, shape index: {}]
  %s4 = inlined_call_operand.vmem [shape: f32[32,128], index: 4, kind: input, shape index: {}]
  %s5 = inlined_call_operand.vmem [shape: f32[32,128], index: 5, kind: input, shape index: {}]
  %s6 = inlined_call_operand.vmem [shape: f32[1,128], index: 6, kind: input, shape index: {}]
  %s7 = inlined_call_operand.hbm [shape: f32[32,64], index: 7, kind: input, shape index: {}]
  %s8 = inlined_call_operand.vmem [shape: f32[1,64], index: 8, kind: input, shape index: {}]
  %s9 = inlined_call_operand.hbm [shape: f32[8,64], index: 9, kind: output, shape index: {0}]
  %s10 = inlined_call_operand.hbm [shape: f32[2,8,32], index: 10, kind: output, shape index: {1}]
  %s11 = inlined_call_operand.hbm [shape: f32[2,8,32], index: 11, kind: output, shape index: {2}]
  %12 = xla_tuple %s9, %s10, %s11
  %s13 = sld [smem:[#allocation0]]
  $region74: #{tpu_custom_call.1} parent=0
    _
  %s15 = ssub.s32 1, %s13
  %s16 = scalar_select 0, %s15, %s13
  $region1: #{tpu_custom_call.1} parent=0
    #allocation5 [shape = 'u8[8192]{0}', space=vmem, size = 0x2000, scoped, tag = 'input window, operand 1, single buffered']
    #allocation6 [shape = 's32[1]{0}', space=sflag, size = 0x4, scoped, tag = 'scoped memory for tpu_custom_call.1']
    #allocation7 [shape = 's32[1]{0}', space=sflag, size = 0x4, scoped, tag = 'scoped memory for tpu_custom_call.1']
    #allocation8 [shape = 'u8[16384]{0}', space=vmem, size = 0x4000, scoped, tag = 'input window, operand 7, single buffered']
    #allocation9 [shape = 's32[1]{0}', space=sflag, size = 0x4, scoped, tag = 'scoped memory for tpu_custom_call.1']
    #allocation10 [shape = 'u8[4096]{0}', space=vmem, size = 0x1000, scoped, tag = 'output window, operand 0, single buffered']
    #allocation11 [shape = 'u8[8192]{0}', space=vmem, size = 0x2000, scoped, tag = 'output window, operand 1, single buffered']
    #allocation12 [shape = 's32[1]{0}', space=sflag, size = 0x4, scoped, tag = 'scoped memory for tpu_custom_call.1']
    #allocation13 [shape = 'u8[8192]{0}', space=vmem, size = 0x2000, scoped, tag = 'output window, operand 2, single buffered']
    %17 = vsyncpa [#allocation6], 0
    %18 = vsyncpa [#allocation9], 0
    %19 = vsyncpa [#allocation7], 0
    %20 = vsyncpa [#allocation12], 0
    // Predicated region
    $region2: #{tpu_custom_call.1} parent=1 // pred_check
      _
    $region3: #{tpu_custom_call.1} parent=1 // pred_check_branch
      %22 = sbr.rel (0) target = $region5
    $region4: #{tpu_custom_call.1} parent=1 // pred_region
      _
    $region5: #{tpu_custom_call.1} parent=1 // pred_fallthru
      _
    // Predicated region
    $region6: #{tpu_custom_call.1} parent=1 // pred_check
      _
    $region7: #{tpu_custom_call.1} parent=1 // pred_check_branch
      %24 = sbr.rel (0) target = $region9
    $region8: #{tpu_custom_call.1} parent=1 // pred_region
      %s26 = ssub.s32 256, 256
      %27 = vsyncadd [#allocation6], %s26
      %s28 = sshll.u32 [#allocation5], 4
      %s29 = int_to_ptr.vmem [resolvable:$true] %s28
      %34 = dma.hbm_to_vmem [thread:$0]  %s1, 256, %s29, [#allocation6], 128, 128, 8
    $region9: #{tpu_custom_call.1} parent=1 // pred_fallthru
      _
    // Predicated region
    $region10: #{tpu_custom_call.1} parent=1 // pred_check
      _
    $region11: #{tpu_custom_call.1} parent=1 // pred_check_branch
      %36 = sbr.rel (0) target = $region13
    $region12: #{tpu_custom_call.1} parent=1 // pred_region
      _
    $region13: #{tpu_custom_call.1} parent=1 // pred_fallthru
      _
    // Predicated region
    $region14: #{tpu_custom_call.1} parent=1 // pred_check
      _
    $region15: #{tpu_custom_call.1} parent=1 // pred_check_branch
      %38 = sbr.rel (0) target = $region17
    $region16: #{tpu_custom_call.1} parent=1 // pred_region
      _
    $region17: #{tpu_custom_call.1} parent=1 // pred_fallthru
      _
    // Predicated region
    $region18: #{tpu_custom_call.1} parent=1 // pred_check
      _
    $region19: #{tpu_custom_call.1} parent=1 // pred_check_branch
      %40 = sbr.rel (0) target = $region21
    $region20: #{tpu_custom_call.1} parent=1 // pred_region
      _
    $region21: #{tpu_custom_call.1} parent=1 // pred_fallthru
      _
    // Predicated region
    $region22: #{tpu_custom_call.1} parent=1 // pred_check
      _
    $region23: #{tpu_custom_call.1} parent=1 // pred_check_branch
      %42 = sbr.rel (0) target = $region25
    $region24: #{tpu_custom_call.1} parent=1 // pred_region
      _
    $region25: #{tpu_custom_call.1} parent=1 // pred_fallthru
      _
    // Predicated region
    $region26: #{tpu_custom_call.1} parent=1 // pred_check
      _
    $region27: #{tpu_custom_call.1} parent=1 // pred_check_branch
      %44 = sbr.rel (0) target = $region29
    $region28: #{tpu_custom_call.1} parent=1 // pred_region
      _
    $region29: #{tpu_custom_call.1} parent=1 // pred_fallthru
      _
    // Predicated region
    $region30: #{tpu_custom_call.1} parent=1 // pred_check
      _
    $region31: #{tpu_custom_call.1} parent=1 // pred_check_branch
      %46 = sbr.rel (0) target = $region33
    $region32: #{tpu_custom_call.1} parent=1 // pred_region
      %s48 = ssub.s32 512, 512
      %49 = vsyncadd [#allocation9], %s48
      %s50 = sshll.u32 [#allocation8], 4
      %s51 = int_to_ptr.vmem [resolvable:$true] %s50
      %56 = dma.hbm_to_vmem [thread:$0]  %s7, 512, %s51, [#allocation9], 128, 128, 8
    $region33: #{tpu_custom_call.1} parent=1 // pred_fallthru
      _
    // Predicated region
    $region34: #{tpu_custom_call.1} parent=1 // pred_check
      _
    $region35: #{tpu_custom_call.1} parent=1 // pred_check_branch
      %58 = sbr.rel (0) target = $region37
    $region36: #{tpu_custom_call.1} parent=1 // pred_region
      _
    $region37: #{tpu_custom_call.1} parent=1 // pred_fallthru
      _
    // Predicated region
    $region38: #{tpu_custom_call.1} parent=1 // pred_check
      _
    $region39: #{tpu_custom_call.1} parent=1 // pred_check_branch
      %60 = sbr.rel (0) target = $region41
    $region40: #{tpu_custom_call.1} parent=1 // pred_region
      %61 = dma.done [#allocation6], 256
    $region41: #{tpu_custom_call.1} parent=1 // pred_fallthru
      _
    // Predicated region
    $region42: #{tpu_custom_call.1} parent=1 // pred_check
      _
    $region43: #{tpu_custom_call.1} parent=1 // pred_check_branch
      %63 = sbr.rel (0) target = $region45
    $region44: #{tpu_custom_call.1} parent=1 // pred_region
      %64 = dma.done [#allocation9], 512
    $region45: #{tpu_custom_call.1} parent=1 // pred_fallthru
      _
    %p65 = scmp.eq.s32.totalorder 0, 0
    // Predicated region
    $region46: #{tpu_custom_call.1} parent=1 // pred_check
      %p66 = pneg %p65
    $region47: #{tpu_custom_call.1} parent=1 // pred_check_branch
      %68 = sbr.rel (%p66) target = $region49
    $region48: #{tpu_custom_call.1} parent=1 // pred_region
      %v69 = vld [vmem:[#allocation5] sm:$0xff]
      %v70 = vld [vmem:[#allocation5 + $0x8] sm:$0xff]
      %v71 = vld [vmem:[%s2] sm:$0xff]
      %v72 = vld [vmem:[%s2 + $0x8] sm:$0xff]
      %v73 = vld [vmem:[%s2 + $0x10] sm:$0xff]
      %v74 = vld [vmem:[%s2 + $0x18] sm:$0xff]
      %v75 = vld [vmem:[%s3] sm:$0x1]
      %v76 = vld [vmem:[%s0] sm:$0xff]
      %v77 = vld [vmem:[%s0 + $0x8] sm:$0xff]
      %v78 = vld [vmem:[%s0 + $0x10] sm:$0xff]
      %v79 = vld [vmem:[%s0 + $0x18] sm:$0xff]
      %v80 = vld [vmem:[%s0 + $0x20] sm:$0xff]
      %v81 = vld [vmem:[%s0 + $0x28] sm:$0xff]
      %v82 = vld [vmem:[%s0 + $0x30] sm:$0xff]
      %v83 = vld [vmem:[%s0 + $0x38] sm:$0xff]
      %v85 = vlaneseq
      %v86 = vshrl.u32 %v85, 7
      %v87 = vsub.s32 0, %v86
      %v88 = vrot.slane %v75, %v87
      %vm90 = vcmask 130048
      %v92 = vsel %vm90, %v76, 0
      %v95 = vsel %vm90, %v77, 0
      %v98 = vsel %vm90, %v78, 0
      %v101 = vsel %vm90, %v79, 0
      %v104 = vsel %vm90, %v80, 0
      %v107 = vsel %vm90, %v81, 0
      %v110 = vsel %vm90, %v82, 0
      %v113 = vsel %vm90, %v83, 0
      %115 = vmatprep.subr.mxu0 0.0
      %116 = vmatpush1.msra.mxu0 %v69
      %117 = vmatprep.subr.mxu0 0.0
      %118 = vmatpush1.msra.mxu0 %v70
      %119 = vmatprep.subr.mxu0 0.0
      %120 = vmatpush1.msra.mxu0 0.0
      %121 = vmatprep.subr.mxu0 0.0
      %122 = vmatpush1.msra.mxu0 0.0
      %123 = vmatprep.subr.mxu0 0.0
      %124 = vmatpush1.msra.mxu0 0.0
      %125 = vmatprep.subr.mxu0 0.0
      %126 = vmatpush1.msra.mxu0 0.0
      %127 = vmatprep.subr.mxu0 0.0
      %128 = vmatpush1.msra.mxu0 0.0
      %129 = vmatprep.subr.mxu0 0.0
      %130 = vmatpush1.msra.mxu0 0.0
      %131 = vmatprep.subr.mxu0 0.0
      %132 = vmatpush1.msra.mxu0 0.0
      %133 = vmatprep.subr.mxu0 0.0
      %134 = vmatpush1.msra.mxu0 0.0
      %135 = vmatprep.subr.mxu0 0.0
      %136 = vmatpush1.msra.mxu0 0.0
      %137 = vmatprep.subr.mxu0 0.0
      %138 = vmatpush1.msra.mxu0 0.0
      %139 = vmatprep.subr.mxu0 0.0
      %140 = vmatpush1.msra.mxu0 0.0
      %141 = vmatprep.subr.mxu0 0.0
      %142 = vmatpush1.msra.mxu0 0.0
      %143 = vmatprep.subr.mxu0 0.0
      %144 = vmatpush1.msra.mxu0 0.0
      %145 = vmatprep.subr.mxu0 0.0
      %146 = vmatpush1.msra.mxu0 0.0
      %147 = vmatprep.subr.mxu0 0.0
      %148 = vmatpush1.msra.mxu0 0.0
      %149 = vmatprep.subr.mxu0 0.0
      %150 = vmatpush1.msra.mxu0 0.0
      %151 = vmatprep.subr.mxu0 0.0
      %152 = vmatpush1.msra.mxu0 0.0
      %153 = vmatprep.subr.mxu0 0.0
      %154 = vmatpush1.msra.mxu0 0.0
      %155 = vmatprep.subr.mxu0 0.0
      %156 = vmatpush1.msra.mxu0 0.0
      %157 = vmatprep.subr.mxu0 0.0
      %158 = vmatpush1.msra.mxu0 0.0
      %159 = vmatprep.subr.mxu0 0.0
      %160 = vmatpush1.msra.mxu0 0.0
      %161 = vmatprep.subr.mxu0 0.0
      %162 = vmatpush1.msra.mxu0 0.0
      %163 = vmatprep.subr.mxu0 0.0
      %164 = vmatpush1.msra.mxu0 0.0
      %165 = vmatprep.subr.mxu0 0.0
      %166 = vmatpush1.msra.mxu0 0.0
      %167 = vmatprep.subr.mxu0 0.0
      %168 = vmatpush1.msra.mxu0 0.0
      %169 = vmatprep.subr.mxu0 0.0
      %170 = vmatpush1.msra.mxu0 0.0
      %171 = vmatprep.subr.mxu0 0.0
      %172 = vmatpush1.msra.mxu0 0.0
      %173 = vmatprep.subr.mxu0 0.0
      %174 = vmatpush1.msra.mxu0 0.0
      %175 = vmatprep.subr.mxu0 0.0
      %176 = vmatpush1.msra.mxu0 0.0
      %177 = vmatprep.subr.mxu0 0.0
      %178 = vmatpush1.msra.mxu0 0.0
      %179 = vmatprep.mubr.f32.mxu0 0.0
      %180 = vmatmul.mubr.f32.gmra.mrb[0].mxu0 %v92
      %v181 = vpop.f32.mrb[0].mxu0
      %v182 = vadd.f32 %v88, %v181
      %v183 = vpop.f32.mrb[0].mxu0
      %184 = vmatprep.mubr.f32.mxu0 0.0
      %185 = vmatmul.mubr.f32.gmra.mrb[0].mxu0 %v95
      %v186 = vpop.f32.mrb[0].mxu0
      %v187 = vadd.f32 %v88, %v186
      %v188 = vpop.f32.mrb[0].mxu0
      %189 = vmatprep.mubr.f32.mxu0 0.0
      %190 = vmatmul.mubr.f32.gmra.mrb[0].mxu0 %v98
      %v191 = vpop.f32.mrb[0].mxu0
      %v192 = vadd.f32 %v88, %v191
      %v193 = vpop.f32.mrb[0].mxu0
      %194 = vmatprep.mubr.f32.mxu0 0.0
      %195 = vmatmul.mubr.f32.gmra.mrb[0].mxu0 %v101
      %v196 = vpop.f32.mrb[0].mxu0
      %v197 = vadd.f32 %v88, %v196
      %v198 = vpop.f32.mrb[0].mxu0
      %199 = vmatprep.mubr.f32.mxu0 0.0
      %200 = vmatmul.mubr.f32.gmra.mrb[0].mxu0 %v104
      %v201 = vpop.f32.mrb[0].mxu0
      %v202 = vadd.f32 %v88, %v201
      %v203 = vpop.f32.mrb[0].mxu0
      %204 = vmatprep.mubr.f32.mxu0 0.0
      %205 = vmatmul.mubr.f32.gmra.mrb[0].mxu0 %v107
      %v206 = vpop.f32.mrb[0].mxu0
      %v207 = vadd.f32 %v88, %v206
      %v208 = vpop.f32.mrb[0].mxu0
      %209 = vmatprep.mubr.f32.mxu0 0.0
      %210 = vmatmul.mubr.f32.gmra.mrb[0].mxu0 %v110
      %v211 = vpop.f32.mrb[0].mxu0
      %v212 = vadd.f32 %v88, %v211
      %v213 = vpop.f32.mrb[0].mxu0
      %214 = vmatprep.mubr.f32.mxu0 0.0
      %215 = vmatmul.mubr.f32.gmra.mrb[0].mxu0 %v113
      %v216 = vpop.f32.mrb[0].mxu0
      %v217 = vadd.f32 %v88, %v216
      %v218 = vpop.f32.mrb[0].mxu0
      %219 = vdwg.mxu0
      %220 = vst [vmem:[#allocation4] sm:$0xff] %v182
      %221 = vst [vmem:[#allocation4 + $0x8] sm:$0xff] %v187
      %222 = vst [vmem:[#allocation4 + $0x10] sm:$0xff] %v192
      %223 = vst [vmem:[#allocation4 + $0x18] sm:$0xff] %v197
      %224 = vst [vmem:[#allocation4 + $0x20] sm:$0xff] %v202
      %225 = vst [vmem:[#allocation4 + $0x28] sm:$0xff] %v207
      %226 = vst [vmem:[#allocation4 + $0x30] sm:$0xff] %v212
      %227 = vst [vmem:[#allocation4 + $0x38] sm:$0xff] %v217
      %v228 = vld [vmem:[#allocation4] sm:$0xff]
      %vm229 = vcmask 261120
      %v231 = vsel %vm229, 0.0, 0
      %233 = vmatprep.subr.mxu0 0.0
      %234 = vmatpush1.msra.mxu0 %v71
      %235 = vmatprep.subr.mxu0 0.0
      %236 = vmatpush1.msra.mxu0 %v72
      %237 = vmatprep.subr.mxu0 0.0
      %238 = vmatpush1.msra.mxu0 %v73
      %239 = vmatprep.subr.mxu0 0.0
      %240 = vmatpush1.msra.mxu0 %v74
      %241 = vmatprep.subr.mxu0 0.0
      %242 = vmatpush1.msra.mxu0 0.0
      %243 = vmatprep.subr.mxu0 0.0
      %244 = vmatpush1.msra.mxu0 0.0
      %245 = vmatprep.subr.mxu0 0.0
      %246 = vmatpush1.msra.mxu0 0.0
      %247 = vmatprep.subr.mxu0 0.0
      %248 = vmatpush1.msra.mxu0 0.0
      %249 = vmatprep.subr.mxu0 0.0
      %250 = vmatpush1.msra.mxu0 0.0
      %251 = vmatprep.subr.mxu0 0.0
      %252 = vmatpush1.msra.mxu0 0.0
      %253 = vmatprep.subr.mxu0 0.0
      %254 = vmatpush1.msra.mxu0 0.0
      %255 = vmatprep.subr.mxu0 0.0
      %256 = vmatpush1.msra.mxu0 0.0
      %257 = vmatprep.subr.mxu0 0.0
      %258 = vmatpush1.msra.mxu0 0.0
      %259 = vmatprep.subr.mxu0 0.0
      %260 = vmatpush1.msra.mxu0 0.0
      %261 = vmatprep.subr.mxu0 0.0
      %262 = vmatpush1.msra.mxu0 0.0
      %263 = vmatprep.subr.mxu0 0.0
      %264 = vmatpush1.msra.mxu0 0.0
      %265 = vmatprep.subr.mxu0 0.0
      %266 = vmatpush1.msra.mxu0 0.0
      %267 = vmatprep.subr.mxu0 0.0
      %268 = vmatpush1.msra.mxu0 0.0
      %269 = vmatprep.subr.mxu0 0.0
      %270 = vmatpush1.msra.mxu0 0.0
      %271 = vmatprep.subr.mxu0 0.0
      %272 = vmatpush1.msra.mxu0 0.0
      %273 = vmatprep.subr.mxu0 0.0
      %274 = vmatpush1.msra.mxu0 0.0
      %275 = vmatprep.subr.mxu0 0.0
      %276 = vmatpush1.msra.mxu0 0.0
      %277 = vmatprep.subr.mxu0 0.0
      %278 = vmatpush1.msra.mxu0 0.0
      %279 = vmatprep.subr.mxu0 0.0
      %280 = vmatpush1.msra.mxu0 0.0
      %281 = vmatprep.subr.mxu0 0.0
      %282 = vmatpush1.msra.mxu0 0.0
      %283 = vmatprep.subr.mxu0 0.0
      %284 = vmatpush1.msra.mxu0 0.0
      %285 = vmatprep.subr.mxu0 0.0
      %286 = vmatpush1.msra.mxu0 0.0
      %287 = vmatprep.subr.mxu0 0.0
      %288 = vmatpush1.msra.mxu0 0.0
      %289 = vmatprep.subr.mxu0 0.0
      %290 = vmatpush1.msra.mxu0 0.0
      %291 = vmatprep.subr.mxu0 0.0
      %292 = vmatpush1.msra.mxu0 0.0
      %293 = vmatprep.subr.mxu0 0.0
      %294 = vmatpush1.msra.mxu0 0.0
      %295 = vmatprep.subr.mxu0 0.0
      %296 = vmatpush1.msra.mxu0 0.0
      %297 = vmatprep.mubr.f32.mxu0 0.0
      %298 = vmatmul.mubr.f32.gmra.mrb[0].mxu0 %v231
      %v299 = vpop.f32.mrb[0].mxu0
      %v300 = vadd.f32 0.0, %v299
      %v301 = vpop.f32.mrb[0].mxu0
      %302 = vdwg.mxu0
      %v303 = vadd.f32 %v228, %v300
      %v304 = vxor.u32 %v303, 2147483648
      %v305 = vmul.f32 %v304, 1.442695
      %v306 = vpow.pop %v305
      %v307 = vadd.f32 %v306, 1.0
      %v308 = vrcp.pop %v307
      %v309 = vmul.f32 1.0, %v308
      %v310 = vtanh.pop %v303
      %v311 = vmul.f32 %v309, 0.0
      %313 = vrot.lane.b32.xlu0 %v310, 32
      %v314 = vpop.permute.xlu0 %313
      %v316 = vmul.f32 %v309, %v314
      %318 = vrot.lane.b32.xlu0 %v316, 32
      %v319 = vpop.permute.xlu0 %318
      %v321 = vadd.f32 %v311, %v319
      %v322 = vtanh.pop %v321
      %324 = vrot.lane.b32.xlu0 %v322, 32
      %v325 = vpop.permute.xlu0 %324
      %v327 = vmul.f32 %v309, %v325
      %329 = vrot.lane.b32.xlu0 %v327, 64
      %v330 = vpop.permute.xlu0 %329
      %332 = vst.msk [vmem:[#allocation2] sm:$0xff] %vm229, %v330
      %s333 = scalar_lea.vmem [#allocation4], 8
      %v334 = vld [vmem:[%s333] sm:$0xff]
      %v335 = vsel %vm229, %v330, 0
      %337 = vmatprep.subr.mxu0 0.0
      %338 = vmatpush1.msra.mxu0 %v71
      %339 = vmatprep.subr.mxu0 0.0
      %340 = vmatpush1.msra.mxu0 %v72
      %341 = vmatprep.subr.mxu0 0.0
      %342 = vmatpush1.msra.mxu0 %v73
      %343 = vmatprep.subr.mxu0 0.0
      %344 = vmatpush1.msra.mxu0 %v74
      %345 = vmatprep.subr.mxu0 0.0
      %346 = vmatpush1.msra.mxu0 0.0
      %347 = vmatprep.subr.mxu0 0.0
      %348 = vmatpush1.msra.mxu0 0.0
      %349 = vmatprep.subr.mxu0 0.0
      %350 = vmatpush1.msra.mxu0 0.0
      %351 = vmatprep.subr.mxu0 0.0
      %352 = vmatpush1.msra.mxu0 0.0
      %353 = vmatprep.subr.mxu0 0.0
      %354 = vmatpush1.msra.mxu0 0.0
      %355 = vmatprep.subr.mxu0 0.0
      %356 = vmatpush1.msra.mxu0 0.0
      %357 = vmatprep.subr.mxu0 0.0
      %358 = vmatpush1.msra.mxu0 0.0
      %359 = vmatprep.subr.mxu0 0.0
      %360 = vmatpush1.msra.mxu0 0.0
      %361 = vmatprep.subr.mxu0 0.0
      %362 = vmatpush1.msra.mxu0 0.0
      %363 = vmatprep.subr.mxu0 0.0
      %364 = vmatpush1.msra.mxu0 0.0
      %365 = vmatprep.subr.mxu0 0.0
      %366 = vmatpush1.msra.mxu0 0.0
      %367 = vmatprep.subr.mxu0 0.0
      %368 = vmatpush1.msra.mxu0 0.0
      %369 = vmatprep.subr.mxu0 0.0
      %370 = vmatpush1.msra.mxu0 0.0
      %371 = vmatprep.subr.mxu0 0.0
      %372 = vmatpush1.msra.mxu0 0.0
      %373 = vmatprep.subr.mxu0 0.0
      %374 = vmatpush1.msra.mxu0 0.0
      %375 = vmatprep.subr.mxu0 0.0
      %376 = vmatpush1.msra.mxu0 0.0
      %377 = vmatprep.subr.mxu0 0.0
      %378 = vmatpush1.msra.mxu0 0.0
      %379 = vmatprep.subr.mxu0 0.0
      %380 = vmatpush1.msra.mxu0 0.0
      %381 = vmatprep.subr.mxu0 0.0
      %382 = vmatpush1.msra.mxu0 0.0
      %383 = vmatprep.subr.mxu0 0.0
      %384 = vmatpush1.msra.mxu0 0.0
      %385 = vmatprep.subr.mxu0 0.0
      %386 = vmatpush1.msra.mxu0 0.0
      %387 = vmatprep.subr.mxu0 0.0
      %388 = vmatpush1.msra.mxu0 0.0
      %389 = vmatprep.subr.mxu0 0.0
      %390 = vmatpush1.msra.mxu0 0.0
      %391 = vmatprep.subr.mxu0 0.0
      %392 = vmatpush1.msra.mxu0 0.0
      %393 = vmatprep.subr.mxu0 0.0
      %394 = vmatpush1.msra.mxu0 0.0
      %395 = vmatprep.subr.mxu0 0.0
      %396 = vmatpush1.msra.mxu0 0.0
      %397 = vmatprep.subr.mxu0 0.0
      %398 = vmatpush1.msra.mxu0 0.0
      %399 = vmatprep.subr.mxu0 0.0
      %400 = vmatpush1.msra.mxu0 0.0
      %401 = vmatprep.mubr.f32.mxu0 0.0
      %402 = vmatmul.mubr.f32.gmra.mrb[0].mxu0 %v335
      %v403 = vpop.f32.mrb[0].mxu0
      %v404 = vadd.f32 0.0, %v403
      %v405 = vpop.f32.mrb[0].mxu0
      %406 = vdwg.mxu0
      %v407 = vadd.f32 %v334, %v404
      %v408 = vxor.u32 %v407, 2147483648
      %v409 = vmul.f32 %v408, 1.442695
      %v410 = vpow.pop %v409
      %v411 = vadd.f32 %v410, 1.0
      %v412 = vrcp.pop %v411
      %v413 = vmul.f32 1.0, %v412
      %v414 = vtanh.pop %v407
      %v415 = vmul.f32 %v413, %v321
      %417 = vrot.lane.b32.xlu0 %v414, 32
      %v418 = vpop.permute.xlu0 %417
      %v420 = vmul.f32 %v413, %v418
      %422 = vrot.lane.b32.xlu0 %v420, 32
      %v423 = vpop.permute.xlu0 %422
      %v425 = vadd.f32 %v415, %v423
      %v426 = vtanh.pop %v425
      %428 = vrot.lane.b32.xlu0 %v426, 32
      %v429 = vpop.permute.xlu0 %428
      %v431 = vmul.f32 %v413, %v429
      %433 = vrot.lane.b32.xlu0 %v431, 64
      %v434 = vpop.permute.xlu0 %433
      %s436 = scalar_lea.vmem [#allocation2], 8
      %437 = vst.msk [vmem:[%s436] sm:$0xff] %vm229, %v434
      %s438 = scalar_lea.vmem [#allocation4], 16
      %v439 = vld [vmem:[%s438] sm:$0xff]
      %v440 = vsel %vm229, %v434, 0
      %442 = vmatprep.subr.mxu0 0.0
      %443 = vmatpush1.msra.mxu0 %v71
      %444 = vmatprep.subr.mxu0 0.0
      %445 = vmatpush1.msra.mxu0 %v72
      %446 = vmatprep.subr.mxu0 0.0
      %447 = vmatpush1.msra.mxu0 %v73
      %448 = vmatprep.subr.mxu0 0.0
      %449 = vmatpush1.msra.mxu0 %v74
      %450 = vmatprep.subr.mxu0 0.0
      %451 = vmatpush1.msra.mxu0 0.0
      %452 = vmatprep.subr.mxu0 0.0
      %453 = vmatpush1.msra.mxu0 0.0
      %454 = vmatprep.subr.mxu0 0.0
      %455 = vmatpush1.msra.mxu0 0.0
      %456 = vmatprep.subr.mxu0 0.0
      %457 = vmatpush1.msra.mxu0 0.0
      %458 = vmatprep.subr.mxu0 0.0
      %459 = vmatpush1.msra.mxu0 0.0
      %460 = vmatprep.subr.mxu0 0.0
      %461 = vmatpush1.msra.mxu0 0.0
      %462 = vmatprep.subr.mxu0 0.0
      %463 = vmatpush1.msra.mxu0 0.0
      %464 = vmatprep.subr.mxu0 0.0
      %465 = vmatpush1.msra.mxu0 0.0
      %466 = vmatprep.subr.mxu0 0.0
      %467 = vmatpush1.msra.mxu0 0.0
      %468 = vmatprep.subr.mxu0 0.0
      %469 = vmatpush1.msra.mxu0 0.0
      %470 = vmatprep.subr.mxu0 0.0
      %471 = vmatpush1.msra.mxu0 0.0
      %472 = vmatprep.subr.mxu0 0.0
      %473 = vmatpush1.msra.mxu0 0.0
      %474 = vmatprep.subr.mxu0 0.0
      %475 = vmatpush1.msra.mxu0 0.0
      %476 = vmatprep.subr.mxu0 0.0
      %477 = vmatpush1.msra.mxu0 0.0
      %478 = vmatprep.subr.mxu0 0.0
      %479 = vmatpush1.msra.mxu0 0.0
      %480 = vmatprep.subr.mxu0 0.0
      %481 = vmatpush1.msra.mxu0 0.0
      %482 = vmatprep.subr.mxu0 0.0
      %483 = vmatpush1.msra.mxu0 0.0
      %484 = vmatprep.subr.mxu0 0.0
      %485 = vmatpush1.msra.mxu0 0.0
      %486 = vmatprep.subr.mxu0 0.0
      %487 = vmatpush1.msra.mxu0 0.0
      %488 = vmatprep.subr.mxu0 0.0
      %489 = vmatpush1.msra.mxu0 0.0
      %490 = vmatprep.subr.mxu0 0.0
      %491 = vmatpush1.msra.mxu0 0.0
      %492 = vmatprep.subr.mxu0 0.0
      %493 = vmatpush1.msra.mxu0 0.0
      %494 = vmatprep.subr.mxu0 0.0
      %495 = vmatpush1.msra.mxu0 0.0
      %496 = vmatprep.subr.mxu0 0.0
      %497 = vmatpush1.msra.mxu0 0.0
      %498 = vmatprep.subr.mxu0 0.0
      %499 = vmatpush1.msra.mxu0 0.0
      %500 = vmatprep.subr.mxu0 0.0
      %501 = vmatpush1.msra.mxu0 0.0
      %502 = vmatprep.subr.mxu0 0.0
      %503 = vmatpush1.msra.mxu0 0.0
      %504 = vmatprep.subr.mxu0 0.0
      %505 = vmatpush1.msra.mxu0 0.0
      %506 = vmatprep.mubr.f32.mxu0 0.0
      %507 = vmatmul.mubr.f32.gmra.mrb[0].mxu0 %v440
      %v508 = vpop.f32.mrb[0].mxu0
      %v509 = vadd.f32 0.0, %v508
      %v510 = vpop.f32.mrb[0].mxu0
      %511 = vdwg.mxu0
      %v512 = vadd.f32 %v439, %v509
      %v513 = vxor.u32 %v512, 2147483648
      %v514 = vmul.f32 %v513, 1.442695
      %v515 = vpow.pop %v514
      %v516 = vadd.f32 %v515, 1.0
      %v517 = vrcp.pop %v516
      %v518 = vmul.f32 1.0, %v517
      %v519 = vtanh.pop %v512
      %v520 = vmul.f32 %v518, %v425
      %522 = vrot.lane.b32.xlu0 %v519, 32
      %v523 = vpop.permute.xlu0 %522
      %v525 = vmul.f32 %v518, %v523
      %527 = vrot.lane.b32.xlu0 %v525, 32
      %v528 = vpop.permute.xlu0 %527
      %v530 = vadd.f32 %v520, %v528
      %v531 = vtanh.pop %v530
      %533 = vrot.lane.b32.xlu0 %v531, 32
      %v534 = vpop.permute.xlu0 %533
      %v536 = vmul.f32 %v518, %v534
      %538 = vrot.lane.b32.xlu0 %v536, 64
      %v539 = vpop.permute.xlu0 %538
      %s541 = scalar_lea.vmem [#allocation2], 16
      %542 = vst.msk [vmem:[%s541] sm:$0xff] %vm229, %v539
      %s543 = scalar_lea.vmem [#allocation4], 24
      %v544 = vld [vmem:[%s543] sm:$0xff]
      %v545 = vsel %vm229, %v539, 0
      %547 = vmatprep.subr.mxu0 0.0
      %548 = vmatpush1.msra.mxu0 %v71
      %549 = vmatprep.subr.mxu0 0.0
      %550 = vmatpush1.msra.mxu0 %v72
      %551 = vmatprep.subr.mxu0 0.0
      %552 = vmatpush1.msra.mxu0 %v73
      %553 = vmatprep.subr.mxu0 0.0
      %554 = vmatpush1.msra.mxu0 %v74
      %555 = vmatprep.subr.mxu0 0.0
      %556 = vmatpush1.msra.mxu0 0.0
      %557 = vmatprep.subr.mxu0 0.0
      %558 = vmatpush1.msra.mxu0 0.0
      %559 = vmatprep.subr.mxu0 0.0
      %560 = vmatpush1.msra.mxu0 0.0
      %561 = vmatprep.subr.mxu0 0.0
      %562 = vmatpush1.msra.mxu0 0.0
      %563 = vmatprep.subr.mxu0 0.0
      %564 = vmatpush1.msra.mxu0 0.0
      %565 = vmatprep.subr.mxu0 0.0
      %566 = vmatpush1.msra.mxu0 0.0
      %567 = vmatprep.subr.mxu0 0.0
      %568 = vmatpush1.msra.mxu0 0.0
      %569 = vmatprep.subr.mxu0 0.0
      %570 = vmatpush1.msra.mxu0 0.0
      %571 = vmatprep.subr.mxu0 0.0
      %572 = vmatpush1.msra.mxu0 0.0
      %573 = vmatprep.subr.mxu0 0.0
      %574 = vmatpush1.msra.mxu0 0.0
      %575 = vmatprep.subr.mxu0 0.0
      %576 = vmatpush1.msra.mxu0 0.0
      %577 = vmatprep.subr.mxu0 0.0
      %578 = vmatpush1.msra.mxu0 0.0
      %579 = vmatprep.subr.mxu0 0.0
      %580 = vmatpush1.msra.mxu0 0.0
      %581 = vmatprep.subr.mxu0 0.0
      %582 = vmatpush1.msra.mxu0 0.0
      %583 = vmatprep.subr.mxu0 0.0
      %584 = vmatpush1.msra.mxu0 0.0
      %585 = vmatprep.subr.mxu0 0.0
      %586 = vmatpush1.msra.mxu0 0.0
      %587 = vmatprep.subr.mxu0 0.0
      %588 = vmatpush1.msra.mxu0 0.0
      %589 = vmatprep.subr.mxu0 0.0
      %590 = vmatpush1.msra.mxu0 0.0
      %591 = vmatprep.subr.mxu0 0.0
      %592 = vmatpush1.msra.mxu0 0.0
      %593 = vmatprep.subr.mxu0 0.0
      %594 = vmatpush1.msra.mxu0 0.0
      %595 = vmatprep.subr.mxu0 0.0
      %596 = vmatpush1.msra.mxu0 0.0
      %597 = vmatprep.subr.mxu0 0.0
      %598 = vmatpush1.msra.mxu0 0.0
      %599 = vmatprep.subr.mxu0 0.0
      %600 = vmatpush1.msra.mxu0 0.0
      %601 = vmatprep.subr.mxu0 0.0
      %602 = vmatpush1.msra.mxu0 0.0
      %603 = vmatprep.subr.mxu0 0.0
      %604 = vmatpush1.msra.mxu0 0.0
      %605 = vmatprep.subr.mxu0 0.0
      %606 = vmatpush1.msra.mxu0 0.0
      %607 = vmatprep.subr.mxu0 0.0
      %608 = vmatpush1.msra.mxu0 0.0
      %609 = vmatprep.subr.mxu0 0.0
      %610 = vmatpush1.msra.mxu0 0.0
      %611 = vmatprep.mubr.f32.mxu0 0.0
      %612 = vmatmul.mubr.f32.gmra.mrb[0].mxu0 %v545
      %v613 = vpop.f32.mrb[0].mxu0
      %v614 = vadd.f32 0.0, %v613
      %v615 = vpop.f32.mrb[0].mxu0
      %616 = vdwg.mxu0
      %v617 = vadd.f32 %v544, %v614
      %v618 = vxor.u32 %v617, 2147483648
      %v619 = vmul.f32 %v618, 1.442695
      %v620 = vpow.pop %v619
      %v621 = vadd.f32 %v620, 1.0
      %v622 = vrcp.pop %v621
      %v623 = vmul.f32 1.0, %v622
      %v624 = vtanh.pop %v617
      %v625 = vmul.f32 %v623, %v530
      %627 = vrot.lane.b32.xlu0 %v624, 32
      %v628 = vpop.permute.xlu0 %627
      %v630 = vmul.f32 %v623, %v628
      %632 = vrot.lane.b32.xlu0 %v630, 32
      %v633 = vpop.permute.xlu0 %632
      %v635 = vadd.f32 %v625, %v633
      %v636 = vtanh.pop %v635
      %638 = vrot.lane.b32.xlu0 %v636, 32
      %v639 = vpop.permute.xlu0 %638
      %v641 = vmul.f32 %v623, %v639
      %643 = vrot.lane.b32.xlu0 %v641, 64
      %v644 = vpop.permute.xlu0 %643
      %s646 = scalar_lea.vmem [#allocation2], 24
      %647 = vst.msk [vmem:[%s646] sm:$0xff] %vm229, %v644
      %s648 = scalar_lea.vmem [#allocation4], 32
      %v649 = vld [vmem:[%s648] sm:$0xff]
      %v650 = vsel %vm229, %v644, 0
      %652 = vmatprep.subr.mxu0 0.0
      %653 = vmatpush1.msra.mxu0 %v71
      %654 = vmatprep.subr.mxu0 0.0
      %655 = vmatpush1.msra.mxu0 %v72
      %656 = vmatprep.subr.mxu0 0.0
      %657 = vmatpush1.msra.mxu0 %v73
      %658 = vmatprep.subr.mxu0 0.0
      %659 = vmatpush1.msra.mxu0 %v74
      %660 = vmatprep.subr.mxu0 0.0
      %661 = vmatpush1.msra.mxu0 0.0
      %662 = vmatprep.subr.mxu0 0.0
      %663 = vmatpush1.msra.mxu0 0.0
      %664 = vmatprep.subr.mxu0 0.0
      %665 = vmatpush1.msra.mxu0 0.0
      %666 = vmatprep.subr.mxu0 0.0
      %667 = vmatpush1.msra.mxu0 0.0
      %668 = vmatprep.subr.mxu0 0.0
      %669 = vmatpush1.msra.mxu0 0.0
      %670 = vmatprep.subr.mxu0 0.0
      %671 = vmatpush1.msra.mxu0 0.0
      %672 = vmatprep.subr.mxu0 0.0
      %673 = vmatpush1.msra.mxu0 0.0
      %674 = vmatprep.subr.mxu0 0.0
      %675 = vmatpush1.msra.mxu0 0.0
      %676 = vmatprep.subr.mxu0 0.0
      %677 = vmatpush1.msra.mxu0 0.0
      %678 = vmatprep.subr.mxu0 0.0
      %679 = vmatpush1.msra.mxu0 0.0
      %680 = vmatprep.subr.mxu0 0.0
      %681 = vmatpush1.msra.mxu0 0.0
      %682 = vmatprep.subr.mxu0 0.0
      %683 = vmatpush1.msra.mxu0 0.0
      %684 = vmatprep.subr.mxu0 0.0
      %685 = vmatpush1.msra.mxu0 0.0
      %686 = vmatprep.subr.mxu0 0.0
      %687 = vmatpush1.msra.mxu0 0.0
      %688 = vmatprep.subr.mxu0 0.0
      %689 = vmatpush1.msra.mxu0 0.0
      %690 = vmatprep.subr.mxu0 0.0
      %691 = vmatpush1.msra.mxu0 0.0
      %692 = vmatprep.subr.mxu0 0.0
      %693 = vmatpush1.msra.mxu0 0.0
      %694 = vmatprep.subr.mxu0 0.0
      %695 = vmatpush1.msra.mxu0 0.0
      %696 = vmatprep.subr.mxu0 0.0
      %697 = vmatpush1.msra.mxu0 0.0
      %698 = vmatprep.subr.mxu0 0.0
      %699 = vmatpush1.msra.mxu0 0.0
      %700 = vmatprep.subr.mxu0 0.0
      %701 = vmatpush1.msra.mxu0 0.0
      %702 = vmatprep.subr.mxu0 0.0
      %703 = vmatpush1.msra.mxu0 0.0
      %704 = vmatprep.subr.mxu0 0.0
      %705 = vmatpush1.msra.mxu0 0.0
      %706 = vmatprep.subr.mxu0 0.0
      %707 = vmatpush1.msra.mxu0 0.0
      %708 = vmatprep.subr.mxu0 0.0
      %709 = vmatpush1.msra.mxu0 0.0
      %710 = vmatprep.subr.mxu0 0.0
      %711 = vmatpush1.msra.mxu0 0.0
      %712 = vmatprep.subr.mxu0 0.0
      %713 = vmatpush1.msra.mxu0 0.0
      %714 = vmatprep.subr.mxu0 0.0
      %715 = vmatpush1.msra.mxu0 0.0
      %716 = vmatprep.mubr.f32.mxu0 0.0
      %717 = vmatmul.mubr.f32.gmra.mrb[0].mxu0 %v650
      %v718 = vpop.f32.mrb[0].mxu0
      %v719 = vadd.f32 0.0, %v718
      %v720 = vpop.f32.mrb[0].mxu0
      %721 = vdwg.mxu0
      %v722 = vadd.f32 %v649, %v719
      %v723 = vxor.u32 %v722, 2147483648
      %v724 = vmul.f32 %v723, 1.442695
      %v725 = vpow.pop %v724
      %v726 = vadd.f32 %v725, 1.0
      %v727 = vrcp.pop %v726
      %v728 = vmul.f32 1.0, %v727
      %v729 = vtanh.pop %v722
      %v730 = vmul.f32 %v728, %v635
      %732 = vrot.lane.b32.xlu0 %v729, 32
      %v733 = vpop.permute.xlu0 %732
      %v735 = vmul.f32 %v728, %v733
      %737 = vrot.lane.b32.xlu0 %v735, 32
      %v738 = vpop.permute.xlu0 %737
      %v740 = vadd.f32 %v730, %v738
      %v741 = vtanh.pop %v740
      %743 = vrot.lane.b32.xlu0 %v741, 32
      %v744 = vpop.permute.xlu0 %743
      %v746 = vmul.f32 %v728, %v744
      %748 = vrot.lane.b32.xlu0 %v746, 64
      %v749 = vpop.permute.xlu0 %748
      %s751 = scalar_lea.vmem [#allocation2], 32
      %752 = vst.msk [vmem:[%s751] sm:$0xff] %vm229, %v749
      %s753 = scalar_lea.vmem [#allocation4], 40
      %v754 = vld [vmem:[%s753] sm:$0xff]
      %v755 = vsel %vm229, %v749, 0
      %757 = vmatprep.subr.mxu0 0.0
      %758 = vmatpush1.msra.mxu0 %v71
      %759 = vmatprep.subr.mxu0 0.0
      %760 = vmatpush1.msra.mxu0 %v72
      %761 = vmatprep.subr.mxu0 0.0
      %762 = vmatpush1.msra.mxu0 %v73
      %763 = vmatprep.subr.mxu0 0.0
      %764 = vmatpush1.msra.mxu0 %v74
      %765 = vmatprep.subr.mxu0 0.0
      %766 = vmatpush1.msra.mxu0 0.0
      %767 = vmatprep.subr.mxu0 0.0
      %768 = vmatpush1.msra.mxu0 0.0
      %769 = vmatprep.subr.mxu0 0.0
      %770 = vmatpush1.msra.mxu0 0.0
      %771 = vmatprep.subr.mxu0 0.0
      %772 = vmatpush1.msra.mxu0 0.0
      %773 = vmatprep.subr.mxu0 0.0
      %774 = vmatpush1.msra.mxu0 0.0
      %775 = vmatprep.subr.mxu0 0.0
      %776 = vmatpush1.msra.mxu0 0.0
      %777 = vmatprep.subr.mxu0 0.0
      %778 = vmatpush1.msra.mxu0 0.0
      %779 = vmatprep.subr.mxu0 0.0
      %780 = vmatpush1.msra.mxu0 0.0
      %781 = vmatprep.subr.mxu0 0.0
      %782 = vmatpush1.msra.mxu0 0.0
      %783 = vmatprep.subr.mxu0 0.0
      %784 = vmatpush1.msra.mxu0 0.0
      %785 = vmatprep.subr.mxu0 0.0
      %786 = vmatpush1.msra.mxu0 0.0
      %787 = vmatprep.subr.mxu0 0.0
      %788 = vmatpush1.msra.mxu0 0.0
      %789 = vmatprep.subr.mxu0 0.0
      %790 = vmatpush1.msra.mxu0 0.0
      %791 = vmatprep.subr.mxu0 0.0
      %792 = vmatpush1.msra.mxu0 0.0
      %793 = vmatprep.subr.mxu0 0.0
      %794 = vmatpush1.msra.mxu0 0.0
      %795 = vmatprep.subr.mxu0 0.0
      %796 = vmatpush1.msra.mxu0 0.0
      %797 = vmatprep.subr.mxu0 0.0
      %798 = vmatpush1.msra.mxu0 0.0
      %799 = vmatprep.subr.mxu0 0.0
      %800 = vmatpush1.msra.mxu0 0.0
      %801 = vmatprep.subr.mxu0 0.0
      %802 = vmatpush1.msra.mxu0 0.0
      %803 = vmatprep.subr.mxu0 0.0
      %804 = vmatpush1.msra.mxu0 0.0
      %805 = vmatprep.subr.mxu0 0.0
      %806 = vmatpush1.msra.mxu0 0.0
      %807 = vmatprep.subr.mxu0 0.0
      %808 = vmatpush1.msra.mxu0 0.0
      %809 = vmatprep.subr.mxu0 0.0
      %810 = vmatpush1.msra.mxu0 0.0
      %811 = vmatprep.subr.mxu0 0.0
      %812 = vmatpush1.msra.mxu0 0.0
      %813 = vmatprep.subr.mxu0 0.0
      %814 = vmatpush1.msra.mxu0 0.0
      %815 = vmatprep.subr.mxu0 0.0
      %816 = vmatpush1.msra.mxu0 0.0
      %817 = vmatprep.subr.mxu0 0.0
      %818 = vmatpush1.msra.mxu0 0.0
      %819 = vmatprep.subr.mxu0 0.0
      %820 = vmatpush1.msra.mxu0 0.0
      %821 = vmatprep.mubr.f32.mxu0 0.0
      %822 = vmatmul.mubr.f32.gmra.mrb[0].mxu0 %v755
      %v823 = vpop.f32.mrb[0].mxu0
      %v824 = vadd.f32 0.0, %v823
      %v825 = vpop.f32.mrb[0].mxu0
      %826 = vdwg.mxu0
      %v827 = vadd.f32 %v754, %v824
      %v828 = vxor.u32 %v827, 2147483648
      %v829 = vmul.f32 %v828, 1.442695
      %v830 = vpow.pop %v829
      %v831 = vadd.f32 %v830, 1.0
      %v832 = vrcp.pop %v831
      %v833 = vmul.f32 1.0, %v832
      %v834 = vtanh.pop %v827
      %v835 = vmul.f32 %v833, %v740
      %837 = vrot.lane.b32.xlu0 %v834, 32
      %v838 = vpop.permute.xlu0 %837
      %v840 = vmul.f32 %v833, %v838
      %842 = vrot.lane.b32.xlu0 %v840, 32
      %v843 = vpop.permute.xlu0 %842
      %v845 = vadd.f32 %v835, %v843
      %v846 = vtanh.pop %v845
      %848 = vrot.lane.b32.xlu0 %v846, 32
      %v849 = vpop.permute.xlu0 %848
      %v851 = vmul.f32 %v833, %v849
      %853 = vrot.lane.b32.xlu0 %v851, 64
      %v854 = vpop.permute.xlu0 %853
      %s856 = scalar_lea.vmem [#allocation2], 40
      %857 = vst.msk [vmem:[%s856] sm:$0xff] %vm229, %v854
      %s858 = scalar_lea.vmem [#allocation4], 48
      %v859 = vld [vmem:[%s858] sm:$0xff]
      %v860 = vsel %vm229, %v854, 0
      %862 = vmatprep.subr.mxu0 0.0
      %863 = vmatpush1.msra.mxu0 %v71
      %864 = vmatprep.subr.mxu0 0.0
      %865 = vmatpush1.msra.mxu0 %v72
      %866 = vmatprep.subr.mxu0 0.0
      %867 = vmatpush1.msra.mxu0 %v73
      %868 = vmatprep.subr.mxu0 0.0
      %869 = vmatpush1.msra.mxu0 %v74
      %870 = vmatprep.subr.mxu0 0.0
      %871 = vmatpush1.msra.mxu0 0.0
      %872 = vmatprep.subr.mxu0 0.0
      %873 = vmatpush1.msra.mxu0 0.0
      %874 = vmatprep.subr.mxu0 0.0
      %875 = vmatpush1.msra.mxu0 0.0
      %876 = vmatprep.subr.mxu0 0.0
      %877 = vmatpush1.msra.mxu0 0.0
      %878 = vmatprep.subr.mxu0 0.0
      %879 = vmatpush1.msra.mxu0 0.0
      %880 = vmatprep.subr.mxu0 0.0
      %881 = vmatpush1.msra.mxu0 0.0
      %882 = vmatprep.subr.mxu0 0.0
      %883 = vmatpush1.msra.mxu0 0.0
      %884 = vmatprep.subr.mxu0 0.0
      %885 = vmatpush1.msra.mxu0 0.0
      %886 = vmatprep.subr.mxu0 0.0
      %887 = vmatpush1.msra.mxu0 0.0
      %888 = vmatprep.subr.mxu0 0.0
      %889 = vmatpush1.msra.mxu0 0.0
      %890 = vmatprep.subr.mxu0 0.0
      %891 = vmatpush1.msra.mxu0 0.0
      %892 = vmatprep.subr.mxu0 0.0
      %893 = vmatpush1.msra.mxu0 0.0
      %894 = vmatprep.subr.mxu0 0.0
      %895 = vmatpush1.msra.mxu0 0.0
      %896 = vmatprep.subr.mxu0 0.0
      %897 = vmatpush1.msra.mxu0 0.0
      %898 = vmatprep.subr.mxu0 0.0
      %899 = vmatpush1.msra.mxu0 0.0
      %900 = vmatprep.subr.mxu0 0.0
      %901 = vmatpush1.msra.mxu0 0.0
      %902 = vmatprep.subr.mxu0 0.0
      %903 = vmatpush1.msra.mxu0 0.0
      %904 = vmatprep.subr.mxu0 0.0
      %905 = vmatpush1.msra.mxu0 0.0
      %906 = vmatprep.subr.mxu0 0.0
      %907 = vmatpush1.msra.mxu0 0.0
      %908 = vmatprep.subr.mxu0 0.0
      %909 = vmatpush1.msra.mxu0 0.0
      %910 = vmatprep.subr.mxu0 0.0
      %911 = vmatpush1.msra.mxu0 0.0
      %912 = vmatprep.subr.mxu0 0.0
      %913 = vmatpush1.msra.mxu0 0.0
      %914 = vmatprep.subr.mxu0 0.0
      %915 = vmatpush1.msra.mxu0 0.0
      %916 = vmatprep.subr.mxu0 0.0
      %917 = vmatpush1.msra.mxu0 0.0
      %918 = vmatprep.subr.mxu0 0.0
      %919 = vmatpush1.msra.mxu0 0.0
      %920 = vmatprep.subr.mxu0 0.0
      %921 = vmatpush1.msra.mxu0 0.0
      %922 = vmatprep.subr.mxu0 0.0
      %923 = vmatpush1.msra.mxu0 0.0
      %924 = vmatprep.subr.mxu0 0.0
      %925 = vmatpush1.msra.mxu0 0.0
      %926 = vmatprep.mubr.f32.mxu0 0.0
      %927 = vmatmul.mubr.f32.gmra.mrb[0].mxu0 %v860
      %v928 = vpop.f32.mrb[0].mxu0
      %v929 = vadd.f32 0.0, %v928
      %v930 = vpop.f32.mrb[0].mxu0
      %931 = vdwg.mxu0
      %v932 = vadd.f32 %v859, %v929
      %v933 = vxor.u32 %v932, 2147483648
      %v934 = vmul.f32 %v933, 1.442695
      %v935 = vpow.pop %v934
      %v936 = vadd.f32 %v935, 1.0
      %v937 = vrcp.pop %v936
      %v938 = vmul.f32 1.0, %v937
      %v939 = vtanh.pop %v932
      %v940 = vmul.f32 %v938, %v845
      %942 = vrot.lane.b32.xlu0 %v939, 32
      %v943 = vpop.permute.xlu0 %942
      %v945 = vmul.f32 %v938, %v943
      %947 = vrot.lane.b32.xlu0 %v945, 32
      %v948 = vpop.permute.xlu0 %947
      %v950 = vadd.f32 %v940, %v948
      %v951 = vtanh.pop %v950
      %953 = vrot.lane.b32.xlu0 %v951, 32
      %v954 = vpop.permute.xlu0 %953
      %v956 = vmul.f32 %v938, %v954
      %958 = vrot.lane.b32.xlu0 %v956, 64
      %v959 = vpop.permute.xlu0 %958
      %s961 = scalar_lea.vmem [#allocation2], 48
      %962 = vst.msk [vmem:[%s961] sm:$0xff] %vm229, %v959
      %s963 = scalar_lea.vmem [#allocation4], 56
      %v964 = vld [vmem:[%s963] sm:$0xff]
      %v965 = vsel %vm229, %v959, 0
      %967 = vmatprep.subr.mxu0 0.0
      %968 = vmatpush1.msra.mxu0 %v71
      %969 = vmatprep.subr.mxu0 0.0
      %970 = vmatpush1.msra.mxu0 %v72
      %971 = vmatprep.subr.mxu0 0.0
      %972 = vmatpush1.msra.mxu0 %v73
      %973 = vmatprep.subr.mxu0 0.0
      %974 = vmatpush1.msra.mxu0 %v74
      %975 = vmatprep.subr.mxu0 0.0
      %976 = vmatpush1.msra.mxu0 0.0
      %977 = vmatprep.subr.mxu0 0.0
      %978 = vmatpush1.msra.mxu0 0.0
      %979 = vmatprep.subr.mxu0 0.0
      %980 = vmatpush1.msra.mxu0 0.0
      %981 = vmatprep.subr.mxu0 0.0
      %982 = vmatpush1.msra.mxu0 0.0
      %983 = vmatprep.subr.mxu0 0.0
      %984 = vmatpush1.msra.mxu0 0.0
      %985 = vmatprep.subr.mxu0 0.0
      %986 = vmatpush1.msra.mxu0 0.0
      %987 = vmatprep.subr.mxu0 0.0
      %988 = vmatpush1.msra.mxu0 0.0
      %989 = vmatprep.subr.mxu0 0.0
      %990 = vmatpush1.msra.mxu0 0.0
      %991 = vmatprep.subr.mxu0 0.0
      %992 = vmatpush1.msra.mxu0 0.0
      %993 = vmatprep.subr.mxu0 0.0
      %994 = vmatpush1.msra.mxu0 0.0
      %995 = vmatprep.subr.mxu0 0.0
      %996 = vmatpush1.msra.mxu0 0.0
      %997 = vmatprep.subr.mxu0 0.0
      %998 = vmatpush1.msra.mxu0 0.0
      %999 = vmatprep.subr.mxu0 0.0
      %1000 = vmatpush1.msra.mxu0 0.0
      %1001 = vmatprep.subr.mxu0 0.0
      %1002 = vmatpush1.msra.mxu0 0.0
      %1003 = vmatprep.subr.mxu0 0.0
      %1004 = vmatpush1.msra.mxu0 0.0
      %1005 = vmatprep.subr.mxu0 0.0
      %1006 = vmatpush1.msra.mxu0 0.0
      %1007 = vmatprep.subr.mxu0 0.0
      %1008 = vmatpush1.msra.mxu0 0.0
      %1009 = vmatprep.subr.mxu0 0.0
      %1010 = vmatpush1.msra.mxu0 0.0
      %1011 = vmatprep.subr.mxu0 0.0
      %1012 = vmatpush1.msra.mxu0 0.0
      %1013 = vmatprep.subr.mxu0 0.0
      %1014 = vmatpush1.msra.mxu0 0.0
      %1015 = vmatprep.subr.mxu0 0.0
      %1016 = vmatpush1.msra.mxu0 0.0
      %1017 = vmatprep.subr.mxu0 0.0
      %1018 = vmatpush1.msra.mxu0 0.0
      %1019 = vmatprep.subr.mxu0 0.0
      %1020 = vmatpush1.msra.mxu0 0.0
      %1021 = vmatprep.subr.mxu0 0.0
      %1022 = vmatpush1.msra.mxu0 0.0
      %1023 = vmatprep.subr.mxu0 0.0
      %1024 = vmatpush1.msra.mxu0 0.0
      %1025 = vmatprep.subr.mxu0 0.0
      %1026 = vmatpush1.msra.mxu0 0.0
      %1027 = vmatprep.subr.mxu0 0.0
      %1028 = vmatpush1.msra.mxu0 0.0
      %1029 = vmatprep.subr.mxu0 0.0
      %1030 = vmatpush1.msra.mxu0 0.0
      %1031 = vmatprep.mubr.f32.mxu0 0.0
      %1032 = vmatmul.mubr.f32.gmra.mrb[0].mxu0 %v965
      %v1033 = vpop.f32.mrb[0].mxu0
      %v1034 = vadd.f32 0.0, %v1033
      %v1035 = vpop.f32.mrb[0].mxu0
      %1036 = vdwg.mxu0
      %v1037 = vadd.f32 %v964, %v1034
      %v1038 = vxor.u32 %v1037, 2147483648
      %v1039 = vmul.f32 %v1038, 1.442695
      %v1040 = vpow.pop %v1039
      %v1041 = vadd.f32 %v1040, 1.0
      %v1042 = vrcp.pop %v1041
      %v1043 = vmul.f32 1.0, %v1042
      %v1044 = vtanh.pop %v1037
      %v1045 = vmul.f32 %v1043, %v950
      %1047 = vrot.lane.b32.xlu0 %v1044, 32
      %v1048 = vpop.permute.xlu0 %1047
      %v1050 = vmul.f32 %v1043, %v1048
      %1052 = vrot.lane.b32.xlu0 %v1050, 32
      %v1053 = vpop.permute.xlu0 %1052
      %v1055 = vadd.f32 %v1045, %v1053
      %v1056 = vtanh.pop %v1055
      %1058 = vrot.lane.b32.xlu0 %v1056, 32
      %v1059 = vpop.permute.xlu0 %1058
      %v1061 = vmul.f32 %v1043, %v1059
      %1063 = vrot.lane.b32.xlu0 %v1061, 64
      %v1064 = vpop.permute.xlu0 %1063
      %s1066 = scalar_lea.vmem [#allocation2], 56
      %1067 = vst.msk [vmem:[%s1066] sm:$0xff] %vm229, %v1064
      %1068 = vst.msk [vmem:[#allocation11] sm:$0xff] %vm229, %v1064
      %1070 = vrot.lane.b32.xlu0 %v1055, 96
      %v1071 = vpop.permute.xlu0 %1070
      %1073 = vst.msk [vmem:[#allocation13] sm:$0xff] %vm229, %v1071
      %v1074 = vld [vmem:[%s4] sm:$0xff]
      %v1075 = vld [vmem:[%s4 + $0x8] sm:$0xff]
      %v1076 = vld [vmem:[%s4 + $0x10] sm:$0xff]
      %v1077 = vld [vmem:[%s4 + $0x18] sm:$0xff]
      %v1078 = vld [vmem:[%s5] sm:$0xff]
      %v1079 = vld [vmem:[%s5 + $0x8] sm:$0xff]
      %v1080 = vld [vmem:[%s5 + $0x10] sm:$0xff]
      %v1081 = vld [vmem:[%s5 + $0x18] sm:$0xff]
      %v1082 = vld [vmem:[%s6] sm:$0x1]
      %v1083 = vld [vmem:[#allocation2] sm:$0xff]
      %v1084 = vld [vmem:[#allocation2 + $0x8] sm:$0xff]
      %v1085 = vld [vmem:[#allocation2 + $0x10] sm:$0xff]
      %v1086 = vld [vmem:[#allocation2 + $0x18] sm:$0xff]
      %v1087 = vld [vmem:[#allocation2 + $0x20] sm:$0xff]
      %v1088 = vld [vmem:[#allocation2 + $0x28] sm:$0xff]
      %v1089 = vld [vmem:[#allocation2 + $0x30] sm:$0xff]
      %v1090 = vld [vmem:[#allocation2 + $0x38] sm:$0xff]
      %v1092 = vlaneseq
      %v1093 = vshrl.u32 %v1092, 7
      %v1094 = vsub.s32 0, %v1093
      %v1095 = vrot.slane %v1082, %v1094
      %v1098 = vsel %vm229, %v1083, 0
      %v1101 = vsel %vm229, %v1084, 0
      %v1104 = vsel %vm229, %v1085, 0
      %v1107 = vsel %vm229, %v1086, 0
      %v1110 = vsel %vm229, %v1087, 0
      %v1113 = vsel %vm229, %v1088, 0
      %v1116 = vsel %vm229, %v1089, 0
      %v1119 = vsel %vm229, %v1090, 0
      %1121 = vmatprep.subr.mxu0 0.0
      %1122 = vmatpush1.msra.mxu0 %v1074
      %1123 = vmatprep.subr.mxu0 0.0
      %1124 = vmatpush1.msra.mxu0 %v1075
      %1125 = vmatprep.subr.mxu0 0.0
      %1126 = vmatpush1.msra.mxu0 %v1076
      %1127 = vmatprep.subr.mxu0 0.0
      %1128 = vmatpush1.msra.mxu0 %v1077
      %1129 = vmatprep.subr.mxu0 0.0
      %1130 = vmatpush1.msra.mxu0 0.0
      %1131 = vmatprep.subr.mxu0 0.0
      %1132 = vmatpush1.msra.mxu0 0.0
      %1133 = vmatprep.subr.mxu0 0.0
      %1134 = vmatpush1.msra.mxu0 0.0
      %1135 = vmatprep.subr.mxu0 0.0
      %1136 = vmatpush1.msra.mxu0 0.0
      %1137 = vmatprep.subr.mxu0 0.0
      %1138 = vmatpush1.msra.mxu0 0.0
      %1139 = vmatprep.subr.mxu0 0.0
      %1140 = vmatpush1.msra.mxu0 0.0
      %1141 = vmatprep.subr.mxu0 0.0
      %1142 = vmatpush1.msra.mxu0 0.0
      %1143 = vmatprep.subr.mxu0 0.0
      %1144 = vmatpush1.msra.mxu0 0.0
      %1145 = vmatprep.subr.mxu0 0.0
      %1146 = vmatpush1.msra.mxu0 0.0
      %1147 = vmatprep.subr.mxu0 0.0
      %1148 = vmatpush1.msra.mxu0 0.0
      %1149 = vmatprep.subr.mxu0 0.0
      %1150 = vmatpush1.msra.mxu0 0.0
      %1151 = vmatprep.subr.mxu0 0.0
      %1152 = vmatpush1.msra.mxu0 0.0
      %1153 = vmatprep.subr.mxu0 0.0
      %1154 = vmatpush1.msra.mxu0 0.0
      %1155 = vmatprep.subr.mxu0 0.0
      %1156 = vmatpush1.msra.mxu0 0.0
      %1157 = vmatprep.subr.mxu0 0.0
      %1158 = vmatpush1.msra.mxu0 0.0
      %1159 = vmatprep.subr.mxu0 0.0
      %1160 = vmatpush1.msra.mxu0 0.0
      %1161 = vmatprep.subr.mxu0 0.0
      %1162 = vmatpush1.msra.mxu0 0.0
      %1163 = vmatprep.subr.mxu0 0.0
      %1164 = vmatpush1.msra.mxu0 0.0
      %1165 = vmatprep.subr.mxu0 0.0
      %1166 = vmatpush1.msra.mxu0 0.0
      %1167 = vmatprep.subr.mxu0 0.0
      %1168 = vmatpush1.msra.mxu0 0.0
      %1169 = vmatprep.subr.mxu0 0.0
      %1170 = vmatpush1.msra.mxu0 0.0
      %1171 = vmatprep.subr.mxu0 0.0
      %1172 = vmatpush1.msra.mxu0 0.0
      %1173 = vmatprep.subr.mxu0 0.0
      %1174 = vmatpush1.msra.mxu0 0.0
      %1175 = vmatprep.subr.mxu0 0.0
      %1176 = vmatpush1.msra.mxu0 0.0
      %1177 = vmatprep.subr.mxu0 0.0
      %1178 = vmatpush1.msra.mxu0 0.0
      %1179 = vmatprep.subr.mxu0 0.0
      %1180 = vmatpush1.msra.mxu0 0.0
      %1181 = vmatprep.subr.mxu0 0.0
      %1182 = vmatpush1.msra.mxu0 0.0
      %1183 = vmatprep.subr.mxu0 0.0
      %1184 = vmatpush1.msra.mxu0 0.0
      %1185 = vmatprep.mubr.f32.mxu0 0.0
      %1186 = vmatmul.mubr.f32.gmra.mrb[0].mxu0 %v1098
      %v1187 = vpop.f32.mrb[0].mxu0
      %v1188 = vadd.f32 %v1095, %v1187
      %v1189 = vpop.f32.mrb[0].mxu0
      %1190 = vmatprep.mubr.f32.mxu0 0.0
      %1191 = vmatmul.mubr.f32.gmra.mrb[0].mxu0 %v1101
      %v1192 = vpop.f32.mrb[0].mxu0
      %v1193 = vadd.f32 %v1095, %v1192
      %v1194 = vpop.f32.mrb[0].mxu0
      %1195 = vmatprep.mubr.f32.mxu0 0.0
      %1196 = vmatmul.mubr.f32.gmra.mrb[0].mxu0 %v1104
      %v1197 = vpop.f32.mrb[0].mxu0
      %v1198 = vadd.f32 %v1095, %v1197
      %v1199 = vpop.f32.mrb[0].mxu0
      %1200 = vmatprep.mubr.f32.mxu0 0.0
      %1201 = vmatmul.mubr.f32.gmra.mrb[0].mxu0 %v1107
      %v1202 = vpop.f32.mrb[0].mxu0
      %v1203 = vadd.f32 %v1095, %v1202
      %v1204 = vpop.f32.mrb[0].mxu0
      %1205 = vmatprep.mubr.f32.mxu0 0.0
      %1206 = vmatmul.mubr.f32.gmra.mrb[0].mxu0 %v1110
      %v1207 = vpop.f32.mrb[0].mxu0
      %v1208 = vadd.f32 %v1095, %v1207
      %v1209 = vpop.f32.mrb[0].mxu0
      %1210 = vmatprep.mubr.f32.mxu0 0.0
      %1211 = vmatmul.mubr.f32.gmra.mrb[0].mxu0 %v1113
      %v1212 = vpop.f32.mrb[0].mxu0
      %v1213 = vadd.f32 %v1095, %v1212
      %v1214 = vpop.f32.mrb[0].mxu0
      %1215 = vmatprep.mubr.f32.mxu0 0.0
      %1216 = vmatmul.mubr.f32.gmra.mrb[0].mxu0 %v1116
      %v1217 = vpop.f32.mrb[0].mxu0
      %v1218 = vadd.f32 %v1095, %v1217
      %v1219 = vpop.f32.mrb[0].mxu0
      %1220 = vmatprep.mubr.f32.mxu0 0.0
      %1221 = vmatmul.mubr.f32.gmra.mrb[0].mxu0 %v1119
      %v1222 = vpop.f32.mrb[0].mxu0
      %v1223 = vadd.f32 %v1095, %v1222
      %v1224 = vpop.f32.mrb[0].mxu0
      %1225 = vdwg.mxu0
      %1226 = vst [vmem:[#allocation4] sm:$0xff] %v1188
      %1227 = vst [vmem:[#allocation4 + $0x8] sm:$0xff] %v1193
      %1228 = vst [vmem:[#allocation4 + $0x10] sm:$0xff] %v1198
      %1229 = vst [vmem:[#allocation4 + $0x18] sm:$0xff] %v1203
      %1230 = vst [vmem:[#allocation4 + $0x20] sm:$0xff] %v1208
      %1231 = vst [vmem:[#allocation4 + $0x28] sm:$0xff] %v1213
      %1232 = vst [vmem:[#allocation4 + $0x30] sm:$0xff] %v1218
      %1233 = vst [vmem:[#allocation4 + $0x38] sm:$0xff] %v1223
      %v1234 = vld [vmem:[#allocation4] sm:$0xff]
      %1235 = vmatprep.subr.mxu0 0.0
      %1236 = vmatpush1.msra.mxu0 %v1078
      %1237 = vmatprep.subr.mxu0 0.0
      %1238 = vmatpush1.msra.mxu0 %v1079
      %1239 = vmatprep.subr.mxu0 0.0
      %1240 = vmatpush1.msra.mxu0 %v1080
      %1241 = vmatprep.subr.mxu0 0.0
      %1242 = vmatpush1.msra.mxu0 %v1081
      %1243 = vmatprep.subr.mxu0 0.0
      %1244 = vmatpush1.msra.mxu0 0.0
      %1245 = vmatprep.subr.mxu0 0.0
      %1246 = vmatpush1.msra.mxu0 0.0
      %1247 = vmatprep.subr.mxu0 0.0
      %1248 = vmatpush1.msra.mxu0 0.0
      %1249 = vmatprep.subr.mxu0 0.0
      %1250 = vmatpush1.msra.mxu0 0.0
      %1251 = vmatprep.subr.mxu0 0.0
      %1252 = vmatpush1.msra.mxu0 0.0
      %1253 = vmatprep.subr.mxu0 0.0
      %1254 = vmatpush1.msra.mxu0 0.0
      %1255 = vmatprep.subr.mxu0 0.0
      %1256 = vmatpush1.msra.mxu0 0.0
      %1257 = vmatprep.subr.mxu0 0.0
      %1258 = vmatpush1.msra.mxu0 0.0
      %1259 = vmatprep.subr.mxu0 0.0
      %1260 = vmatpush1.msra.mxu0 0.0
      %1261 = vmatprep.subr.mxu0 0.0
      %1262 = vmatpush1.msra.mxu0 0.0
      %1263 = vmatprep.subr.mxu0 0.0
      %1264 = vmatpush1.msra.mxu0 0.0
      %1265 = vmatprep.subr.mxu0 0.0
      %1266 = vmatpush1.msra.mxu0 0.0
      %1267 = vmatprep.subr.mxu0 0.0
      %1268 = vmatpush1.msra.mxu0 0.0
      %1269 = vmatprep.subr.mxu0 0.0
      %1270 = vmatpush1.msra.mxu0 0.0
      %1271 = vmatprep.subr.mxu0 0.0
      %1272 = vmatpush1.msra.mxu0 0.0
      %1273 = vmatprep.subr.mxu0 0.0
      %1274 = vmatpush1.msra.mxu0 0.0
      %1275 = vmatprep.subr.mxu0 0.0
      %1276 = vmatpush1.msra.mxu0 0.0
      %1277 = vmatprep.subr.mxu0 0.0
      %1278 = vmatpush1.msra.mxu0 0.0
      %1279 = vmatprep.subr.mxu0 0.0
      %1280 = vmatpush1.msra.mxu0 0.0
      %1281 = vmatprep.subr.mxu0 0.0
      %1282 = vmatpush1.msra.mxu0 0.0
      %1283 = vmatprep.subr.mxu0 0.0
      %1284 = vmatpush1.msra.mxu0 0.0
      %1285 = vmatprep.subr.mxu0 0.0
      %1286 = vmatpush1.msra.mxu0 0.0
      %1287 = vmatprep.subr.mxu0 0.0
      %1288 = vmatpush1.msra.mxu0 0.0
      %1289 = vmatprep.subr.mxu0 0.0
      %1290 = vmatpush1.msra.mxu0 0.0
      %1291 = vmatprep.subr.mxu0 0.0
      %1292 = vmatpush1.msra.mxu0 0.0
      %1293 = vmatprep.subr.mxu0 0.0
      %1294 = vmatpush1.msra.mxu0 0.0
      %1295 = vmatprep.subr.mxu0 0.0
      %1296 = vmatpush1.msra.mxu0 0.0
      %1297 = vmatprep.subr.mxu0 0.0
      %1298 = vmatpush1.msra.mxu0 0.0
      %1299 = vmatprep.mubr.f32.mxu0 0.0
      %1300 = vmatmul.mubr.f32.gmra.mrb[0].mxu0 %v231
      %v1301 = vpop.f32.mrb[0].mxu0
      %v1302 = vadd.f32 0.0, %v1301
      %v1303 = vpop.f32.mrb[0].mxu0
      %1304 = vdwg.mxu0
      %v1305 = vadd.f32 %v1234, %v1302
      %v1306 = vxor.u32 %v1305, 2147483648
      %v1307 = vmul.f32 %v1306, 1.442695
      %v1308 = vpow.pop %v1307
      %v1309 = vadd.f32 %v1308, 1.0
      %v1310 = vrcp.pop %v1309
      %v1311 = vmul.f32 1.0, %v1310
      %v1312 = vtanh.pop %v1305
      %v1313 = vmul.f32 %v1311, 0.0
      %1315 = vrot.lane.b32.xlu0 %v1312, 32
      %v1316 = vpop.permute.xlu0 %1315
      %v1318 = vmul.f32 %v1311, %v1316
      %1320 = vrot.lane.b32.xlu0 %v1318, 32
      %v1321 = vpop.permute.xlu0 %1320
      %v1323 = vadd.f32 %v1313, %v1321
      %v1324 = vtanh.pop %v1323
      %1326 = vrot.lane.b32.xlu0 %v1324, 32
      %v1327 = vpop.permute.xlu0 %1326
      %v1329 = vmul.f32 %v1311, %v1327
      %v1330 = vld [vmem:[%s333] sm:$0xff]
      %1332 = vrot.lane.b32.xlu0 %v1329, 64
      %v1333 = vpop.permute.xlu0 %1332
      %v1334 = vsel %vm229, %v1333, 0
      %1336 = vmatprep.subr.mxu0 0.0
      %1337 = vmatpush1.msra.mxu0 %v1078
      %1338 = vmatprep.subr.mxu0 0.0
      %1339 = vmatpush1.msra.mxu0 %v1079
      %1340 = vmatprep.subr.mxu0 0.0
      %1341 = vmatpush1.msra.mxu0 %v1080
      %1342 = vmatprep.subr.mxu0 0.0
      %1343 = vmatpush1.msra.mxu0 %v1081
      %1344 = vmatprep.subr.mxu0 0.0
      %1345 = vmatpush1.msra.mxu0 0.0
      %1346 = vmatprep.subr.mxu0 0.0
      %1347 = vmatpush1.msra.mxu0 0.0
      %1348 = vmatprep.subr.mxu0 0.0
      %1349 = vmatpush1.msra.mxu0 0.0
      %1350 = vmatprep.subr.mxu0 0.0
      %1351 = vmatpush1.msra.mxu0 0.0
      %1352 = vmatprep.subr.mxu0 0.0
      %1353 = vmatpush1.msra.mxu0 0.0
      %1354 = vmatprep.subr.mxu0 0.0
      %1355 = vmatpush1.msra.mxu0 0.0
      %1356 = vmatprep.subr.mxu0 0.0
      %1357 = vmatpush1.msra.mxu0 0.0
      %1358 = vmatprep.subr.mxu0 0.0
      %1359 = vmatpush1.msra.mxu0 0.0
      %1360 = vmatprep.subr.mxu0 0.0
      %1361 = vmatpush1.msra.mxu0 0.0
      %1362 = vmatprep.subr.mxu0 0.0
      %1363 = vmatpush1.msra.mxu0 0.0
      %1364 = vmatprep.subr.mxu0 0.0
      %1365 = vmatpush1.msra.mxu0 0.0
      %1366 = vmatprep.subr.mxu0 0.0
      %1367 = vmatpush1.msra.mxu0 0.0
      %1368 = vmatprep.subr.mxu0 0.0
      %1369 = vmatpush1.msra.mxu0 0.0
      %1370 = vmatprep.subr.mxu0 0.0
      %1371 = vmatpush1.msra.mxu0 0.0
      %1372 = vmatprep.subr.mxu0 0.0
      %1373 = vmatpush1.msra.mxu0 0.0
      %1374 = vmatprep.subr.mxu0 0.0
      %1375 = vmatpush1.msra.mxu0 0.0
      %1376 = vmatprep.subr.mxu0 0.0
      %1377 = vmatpush1.msra.mxu0 0.0
      %1378 = vmatprep.subr.mxu0 0.0
      %1379 = vmatpush1.msra.mxu0 0.0
      %1380 = vmatprep.subr.mxu0 0.0
      %1381 = vmatpush1.msra.mxu0 0.0
      %1382 = vmatprep.subr.mxu0 0.0
      %1383 = vmatpush1.msra.mxu0 0.0
      %1384 = vmatprep.subr.mxu0 0.0
      %1385 = vmatpush1.msra.mxu0 0.0
      %1386 = vmatprep.subr.mxu0 0.0
      %1387 = vmatpush1.msra.mxu0 0.0
      %1388 = vmatprep.subr.mxu0 0.0
      %1389 = vmatpush1.msra.mxu0 0.0
      %1390 = vmatprep.subr.mxu0 0.0
      %1391 = vmatpush1.msra.mxu0 0.0
      %1392 = vmatprep.subr.mxu0 0.0
      %1393 = vmatpush1.msra.mxu0 0.0
      %1394 = vmatprep.subr.mxu0 0.0
      %1395 = vmatpush1.msra.mxu0 0.0
      %1396 = vmatprep.subr.mxu0 0.0
      %1397 = vmatpush1.msra.mxu0 0.0
      %1398 = vmatprep.subr.mxu0 0.0
      %1399 = vmatpush1.msra.mxu0 0.0
      %1400 = vmatprep.mubr.f32.mxu0 0.0
      %1401 = vmatmul.mubr.f32.gmra.mrb[0].mxu0 %v1334
      %v1402 = vpop.f32.mrb[0].mxu0
      %v1403 = vadd.f32 0.0, %v1402
      %v1404 = vpop.f32.mrb[0].mxu0
      %1405 = vdwg.mxu0
      %v1406 = vadd.f32 %v1330, %v1403
      %v1407 = vxor.u32 %v1406, 2147483648
      %v1408 = vmul.f32 %v1407, 1.442695
      %v1409 = vpow.pop %v1408
      %v1410 = vadd.f32 %v1409, 1.0
      %v1411 = vrcp.pop %v1410
      %v1412 = vmul.f32 1.0, %v1411
      %v1413 = vtanh.pop %v1406
      %v1414 = vmul.f32 %v1412, %v1323
      %1416 = vrot.lane.b32.xlu0 %v1413, 32
      %v1417 = vpop.permute.xlu0 %1416
      %v1419 = vmul.f32 %v1412, %v1417
      %1421 = vrot.lane.b32.xlu0 %v1419, 32
      %v1422 = vpop.permute.xlu0 %1421
      %v1424 = vadd.f32 %v1414, %v1422
      %v1425 = vtanh.pop %v1424
      %1427 = vrot.lane.b32.xlu0 %v1425, 32
      %v1428 = vpop.permute.xlu0 %1427
      %v1430 = vmul.f32 %v1412, %v1428
      %v1431 = vld [vmem:[%s438] sm:$0xff]
      %1433 = vrot.lane.b32.xlu0 %v1430, 64
      %v1434 = vpop.permute.xlu0 %1433
      %v1435 = vsel %vm229, %v1434, 0
      %1437 = vmatprep.subr.mxu0 0.0
      %1438 = vmatpush1.msra.mxu0 %v1078
      %1439 = vmatprep.subr.mxu0 0.0
      %1440 = vmatpush1.msra.mxu0 %v1079
      %1441 = vmatprep.subr.mxu0 0.0
      %1442 = vmatpush1.msra.mxu0 %v1080
      %1443 = vmatprep.subr.mxu0 0.0
      %1444 = vmatpush1.msra.mxu0 %v1081
      %1445 = vmatprep.subr.mxu0 0.0
      %1446 = vmatpush1.msra.mxu0 0.0
      %1447 = vmatprep.subr.mxu0 0.0
      %1448 = vmatpush1.msra.mxu0 0.0
      %1449 = vmatprep.subr.mxu0 0.0
      %1450 = vmatpush1.msra.mxu0 0.0
      %1451 = vmatprep.subr.mxu0 0.0
      %1452 = vmatpush1.msra.mxu0 0.0
      %1453 = vmatprep.subr.mxu0 0.0
      %1454 = vmatpush1.msra.mxu0 0.0
      %1455 = vmatprep.subr.mxu0 0.0
      %1456 = vmatpush1.msra.mxu0 0.0
      %1457 = vmatprep.subr.mxu0 0.0
      %1458 = vmatpush1.msra.mxu0 0.0
      %1459 = vmatprep.subr.mxu0 0.0
      %1460 = vmatpush1.msra.mxu0 0.0
      %1461 = vmatprep.subr.mxu0 0.0
      %1462 = vmatpush1.msra.mxu0 0.0
      %1463 = vmatprep.subr.mxu0 0.0
      %1464 = vmatpush1.msra.mxu0 0.0
      %1465 = vmatprep.subr.mxu0 0.0
      %1466 = vmatpush1.msra.mxu0 0.0
      %1467 = vmatprep.subr.mxu0 0.0
      %1468 = vmatpush1.msra.mxu0 0.0
      %1469 = vmatprep.subr.mxu0 0.0
      %1470 = vmatpush1.msra.mxu0 0.0
      %1471 = vmatprep.subr.mxu0 0.0
      %1472 = vmatpush1.msra.mxu0 0.0
      %1473 = vmatprep.subr.mxu0 0.0
      %1474 = vmatpush1.msra.mxu0 0.0
      %1475 = vmatprep.subr.mxu0 0.0
      %1476 = vmatpush1.msra.mxu0 0.0
      %1477 = vmatprep.subr.mxu0 0.0
      %1478 = vmatpush1.msra.mxu0 0.0
      %1479 = vmatprep.subr.mxu0 0.0
      %1480 = vmatpush1.msra.mxu0 0.0
      %1481 = vmatprep.subr.mxu0 0.0
      %1482 = vmatpush1.msra.mxu0 0.0
      %1483 = vmatprep.subr.mxu0 0.0
      %1484 = vmatpush1.msra.mxu0 0.0
      %1485 = vmatprep.subr.mxu0 0.0
      %1486 = vmatpush1.msra.mxu0 0.0
      %1487 = vmatprep.subr.mxu0 0.0
      %1488 = vmatpush1.msra.mxu0 0.0
      %1489 = vmatprep.subr.mxu0 0.0
      %1490 = vmatpush1.msra.mxu0 0.0
      %1491 = vmatprep.subr.mxu0 0.0
      %1492 = vmatpush1.msra.mxu0 0.0
      %1493 = vmatprep.subr.mxu0 0.0
      %1494 = vmatpush1.msra.mxu0 0.0
      %1495 = vmatprep.subr.mxu0 0.0
      %1496 = vmatpush1.msra.mxu0 0.0
      %1497 = vmatprep.subr.mxu0 0.0
      %1498 = vmatpush1.msra.mxu0 0.0
      %1499 = vmatprep.subr.mxu0 0.0
      %1500 = vmatpush1.msra.mxu0 0.0
      %1501 = vmatprep.mubr.f32.mxu0 0.0
      %1502 = vmatmul.mubr.f32.gmra.mrb[0].mxu0 %v1435
      %v1503 = vpop.f32.mrb[0].mxu0
      %v1504 = vadd.f32 0.0, %v1503
      %v1505 = vpop.f32.mrb[0].mxu0
      %1506 = vdwg.mxu0
      %v1507 = vadd.f32 %v1431, %v1504
      %v1508 = vxor.u32 %v1507, 2147483648
      %v1509 = vmul.f32 %v1508, 1.442695
      %v1510 = vpow.pop %v1509
      %v1511 = vadd.f32 %v1510, 1.0
      %v1512 = vrcp.pop %v1511
      %v1513 = vmul.f32 1.0, %v1512
      %v1514 = vtanh.pop %v1507
      %v1515 = vmul.f32 %v1513, %v1424
      %1517 = vrot.lane.b32.xlu0 %v1514, 32
      %v1518 = vpop.permute.xlu0 %1517
      %v1520 = vmul.f32 %v1513, %v1518
      %1522 = vrot.lane.b32.xlu0 %v1520, 32
      %v1523 = vpop.permute.xlu0 %1522
      %v1525 = vadd.f32 %v1515, %v1523
      %v1526 = vtanh.pop %v1525
      %1528 = vrot.lane.b32.xlu0 %v1526, 32
      %v1529 = vpop.permute.xlu0 %1528
      %v1531 = vmul.f32 %v1513, %v1529
      %v1532 = vld [vmem:[%s543] sm:$0xff]
      %1534 = vrot.lane.b32.xlu0 %v1531, 64
      %v1535 = vpop.permute.xlu0 %1534
      %v1536 = vsel %vm229, %v1535, 0
      %1538 = vmatprep.subr.mxu0 0.0
      %1539 = vmatpush1.msra.mxu0 %v1078
      %1540 = vmatprep.subr.mxu0 0.0
      %1541 = vmatpush1.msra.mxu0 %v1079
      %1542 = vmatprep.subr.mxu0 0.0
      %1543 = vmatpush1.msra.mxu0 %v1080
      %1544 = vmatprep.subr.mxu0 0.0
      %1545 = vmatpush1.msra.mxu0 %v1081
      %1546 = vmatprep.subr.mxu0 0.0
      %1547 = vmatpush1.msra.mxu0 0.0
      %1548 = vmatprep.subr.mxu0 0.0
      %1549 = vmatpush1.msra.mxu0 0.0
      %1550 = vmatprep.subr.mxu0 0.0
      %1551 = vmatpush1.msra.mxu0 0.0
      %1552 = vmatprep.subr.mxu0 0.0
      %1553 = vmatpush1.msra.mxu0 0.0
      %1554 = vmatprep.subr.mxu0 0.0
      %1555 = vmatpush1.msra.mxu0 0.0
      %1556 = vmatprep.subr.mxu0 0.0
      %1557 = vmatpush1.msra.mxu0 0.0
      %1558 = vmatprep.subr.mxu0 0.0
      %1559 = vmatpush1.msra.mxu0 0.0
      %1560 = vmatprep.subr.mxu0 0.0
      %1561 = vmatpush1.msra.mxu0 0.0
      %1562 = vmatprep.subr.mxu0 0.0
      %1563 = vmatpush1.msra.mxu0 0.0
      %1564 = vmatprep.subr.mxu0 0.0
      %1565 = vmatpush1.msra.mxu0 0.0
      %1566 = vmatprep.subr.mxu0 0.0
      %1567 = vmatpush1.msra.mxu0 0.0
      %1568 = vmatprep.subr.mxu0 0.0
      %1569 = vmatpush1.msra.mxu0 0.0
      %1570 = vmatprep.subr.mxu0 0.0
      %1571 = vmatpush1.msra.mxu0 0.0
      %1572 = vmatprep.subr.mxu0 0.0
      %1573 = vmatpush1.msra.mxu0 0.0
      %1574 = vmatprep.subr.mxu0 0.0
      %1575 = vmatpush1.msra.mxu0 0.0
      %1576 = vmatprep.subr.mxu0 0.0
      %1577 = vmatpush1.msra.mxu0 0.0
      %1578 = vmatprep.subr.mxu0 0.0
      %1579 = vmatpush1.msra.mxu0 0.0
      %1580 = vmatprep.subr.mxu0 0.0
      %1581 = vmatpush1.msra.mxu0 0.0
      %1582 = vmatprep.subr.mxu0 0.0
      %1583 = vmatpush1.msra.mxu0 0.0
      %1584 = vmatprep.subr.mxu0 0.0
      %1585 = vmatpush1.msra.mxu0 0.0
      %1586 = vmatprep.subr.mxu0 0.0
      %1587 = vmatpush1.msra.mxu0 0.0
      %1588 = vmatprep.subr.mxu0 0.0
      %1589 = vmatpush1.msra.mxu0 0.0
      %1590 = vmatprep.subr.mxu0 0.0
      %1591 = vmatpush1.msra.mxu0 0.0
      %1592 = vmatprep.subr.mxu0 0.0
      %1593 = vmatpush1.msra.mxu0 0.0
      %1594 = vmatprep.subr.mxu0 0.0
      %1595 = vmatpush1.msra.mxu0 0.0
      %1596 = vmatprep.subr.mxu0 0.0
      %1597 = vmatpush1.msra.mxu0 0.0
      %1598 = vmatprep.subr.mxu0 0.0
      %1599 = vmatpush1.msra.mxu0 0.0
      %1600 = vmatprep.subr.mxu0 0.0
      %1601 = vmatpush1.msra.mxu0 0.0
      %1602 = vmatprep.mubr.f32.mxu0 0.0
      %1603 = vmatmul.mubr.f32.gmra.mrb[0].mxu0 %v1536
      %v1604 = vpop.f32.mrb[0].mxu0
      %v1605 = vadd.f32 0.0, %v1604
      %v1606 = vpop.f32.mrb[0].mxu0
      %1607 = vdwg.mxu0
      %v1608 = vadd.f32 %v1532, %v1605
      %v1609 = vxor.u32 %v1608, 2147483648
      %v1610 = vmul.f32 %v1609, 1.442695
      %v1611 = vpow.pop %v1610
      %v1612 = vadd.f32 %v1611, 1.0
      %v1613 = vrcp.pop %v1612
      %v1614 = vmul.f32 1.0, %v1613
      %v1615 = vtanh.pop %v1608
      %v1616 = vmul.f32 %v1614, %v1525
      %1618 = vrot.lane.b32.xlu0 %v1615, 32
      %v1619 = vpop.permute.xlu0 %1618
      %v1621 = vmul.f32 %v1614, %v1619
      %1623 = vrot.lane.b32.xlu0 %v1621, 32
      %v1624 = vpop.permute.xlu0 %1623
      %v1626 = vadd.f32 %v1616, %v1624
      %v1627 = vtanh.pop %v1626
      %1629 = vrot.lane.b32.xlu0 %v1627, 32
      %v1630 = vpop.permute.xlu0 %1629
      %v1632 = vmul.f32 %v1614, %v1630
      %v1633 = vld [vmem:[%s648] sm:$0xff]
      %1635 = vrot.lane.b32.xlu0 %v1632, 64
      %v1636 = vpop.permute.xlu0 %1635
      %v1637 = vsel %vm229, %v1636, 0
      %1639 = vmatprep.subr.mxu0 0.0
      %1640 = vmatpush1.msra.mxu0 %v1078
      %1641 = vmatprep.subr.mxu0 0.0
      %1642 = vmatpush1.msra.mxu0 %v1079
      %1643 = vmatprep.subr.mxu0 0.0
      %1644 = vmatpush1.msra.mxu0 %v1080
      %1645 = vmatprep.subr.mxu0 0.0
      %1646 = vmatpush1.msra.mxu0 %v1081
      %1647 = vmatprep.subr.mxu0 0.0
      %1648 = vmatpush1.msra.mxu0 0.0
      %1649 = vmatprep.subr.mxu0 0.0
      %1650 = vmatpush1.msra.mxu0 0.0
      %1651 = vmatprep.subr.mxu0 0.0
      %1652 = vmatpush1.msra.mxu0 0.0
      %1653 = vmatprep.subr.mxu0 0.0
      %1654 = vmatpush1.msra.mxu0 0.0
      %1655 = vmatprep.subr.mxu0 0.0
      %1656 = vmatpush1.msra.mxu0 0.0
      %1657 = vmatprep.subr.mxu0 0.0
      %1658 = vmatpush1.msra.mxu0 0.0
      %1659 = vmatprep.subr.mxu0 0.0
      %1660 = vmatpush1.msra.mxu0 0.0
      %1661 = vmatprep.subr.mxu0 0.0
      %1662 = vmatpush1.msra.mxu0 0.0
      %1663 = vmatprep.subr.mxu0 0.0
      %1664 = vmatpush1.msra.mxu0 0.0
      %1665 = vmatprep.subr.mxu0 0.0
      %1666 = vmatpush1.msra.mxu0 0.0
      %1667 = vmatprep.subr.mxu0 0.0
      %1668 = vmatpush1.msra.mxu0 0.0
      %1669 = vmatprep.subr.mxu0 0.0
      %1670 = vmatpush1.msra.mxu0 0.0
      %1671 = vmatprep.subr.mxu0 0.0
      %1672 = vmatpush1.msra.mxu0 0.0
      %1673 = vmatprep.subr.mxu0 0.0
      %1674 = vmatpush1.msra.mxu0 0.0
      %1675 = vmatprep.subr.mxu0 0.0
      %1676 = vmatpush1.msra.mxu0 0.0
      %1677 = vmatprep.subr.mxu0 0.0
      %1678 = vmatpush1.msra.mxu0 0.0
      %1679 = vmatprep.subr.mxu0 0.0
      %1680 = vmatpush1.msra.mxu0 0.0
      %1681 = vmatprep.subr.mxu0 0.0
      %1682 = vmatpush1.msra.mxu0 0.0
      %1683 = vmatprep.subr.mxu0 0.0
      %1684 = vmatpush1.msra.mxu0 0.0
      %1685 = vmatprep.subr.mxu0 0.0
      %1686 = vmatpush1.msra.mxu0 0.0
      %1687 = vmatprep.subr.mxu0 0.0
      %1688 = vmatpush1.msra.mxu0 0.0
      %1689 = vmatprep.subr.mxu0 0.0
      %1690 = vmatpush1.msra.mxu0 0.0
      %1691 = vmatprep.subr.mxu0 0.0
      %1692 = vmatpush1.msra.mxu0 0.0
      %1693 = vmatprep.subr.mxu0 0.0
      %1694 = vmatpush1.msra.mxu0 0.0
      %1695 = vmatprep.subr.mxu0 0.0
      %1696 = vmatpush1.msra.mxu0 0.0
      %1697 = vmatprep.subr.mxu0 0.0
      %1698 = vmatpush1.msra.mxu0 0.0
      %1699 = vmatprep.subr.mxu0 0.0
      %1700 = vmatpush1.msra.mxu0 0.0
      %1701 = vmatprep.subr.mxu0 0.0
      %1702 = vmatpush1.msra.mxu0 0.0
      %1703 = vmatprep.mubr.f32.mxu0 0.0
      %1704 = vmatmul.mubr.f32.gmra.mrb[0].mxu0 %v1637
      %v1705 = vpop.f32.mrb[0].mxu0
      %v1706 = vadd.f32 0.0, %v1705
      %v1707 = vpop.f32.mrb[0].mxu0
      %1708 = vdwg.mxu0
      %v1709 = vadd.f32 %v1633, %v1706
      %v1710 = vxor.u32 %v1709, 2147483648
      %v1711 = vmul.f32 %v1710, 1.442695
      %v1712 = vpow.pop %v1711
      %v1713 = vadd.f32 %v1712, 1.0
      %v1714 = vrcp.pop %v1713
      %v1715 = vmul.f32 1.0, %v1714
      %v1716 = vtanh.pop %v1709
      %v1717 = vmul.f32 %v1715, %v1626
      %1719 = vrot.lane.b32.xlu0 %v1716, 32
      %v1720 = vpop.permute.xlu0 %1719
      %v1722 = vmul.f32 %v1715, %v1720
      %1724 = vrot.lane.b32.xlu0 %v1722, 32
      %v1725 = vpop.permute.xlu0 %1724
      %v1727 = vadd.f32 %v1717, %v1725
      %v1728 = vtanh.pop %v1727
      %1730 = vrot.lane.b32.xlu0 %v1728, 32
      %v1731 = vpop.permute.xlu0 %1730
      %v1733 = vmul.f32 %v1715, %v1731
      %v1734 = vld [vmem:[%s753] sm:$0xff]
      %1736 = vrot.lane.b32.xlu0 %v1733, 64
      %v1737 = vpop.permute.xlu0 %1736
      %v1738 = vsel %vm229, %v1737, 0
      %1740 = vmatprep.subr.mxu0 0.0
      %1741 = vmatpush1.msra.mxu0 %v1078
      %1742 = vmatprep.subr.mxu0 0.0
      %1743 = vmatpush1.msra.mxu0 %v1079
      %1744 = vmatprep.subr.mxu0 0.0
      %1745 = vmatpush1.msra.mxu0 %v1080
      %1746 = vmatprep.subr.mxu0 0.0
      %1747 = vmatpush1.msra.mxu0 %v1081
      %1748 = vmatprep.subr.mxu0 0.0
      %1749 = vmatpush1.msra.mxu0 0.0
      %1750 = vmatprep.subr.mxu0 0.0
      %1751 = vmatpush1.msra.mxu0 0.0
      %1752 = vmatprep.subr.mxu0 0.0
      %1753 = vmatpush1.msra.mxu0 0.0
      %1754 = vmatprep.subr.mxu0 0.0
      %1755 = vmatpush1.msra.mxu0 0.0
      %1756 = vmatprep.subr.mxu0 0.0
      %1757 = vmatpush1.msra.mxu0 0.0
      %1758 = vmatprep.subr.mxu0 0.0
      %1759 = vmatpush1.msra.mxu0 0.0
      %1760 = vmatprep.subr.mxu0 0.0
      %1761 = vmatpush1.msra.mxu0 0.0
      %1762 = vmatprep.subr.mxu0 0.0
      %1763 = vmatpush1.msra.mxu0 0.0
      %1764 = vmatprep.subr.mxu0 0.0
      %1765 = vmatpush1.msra.mxu0 0.0
      %1766 = vmatprep.subr.mxu0 0.0
      %1767 = vmatpush1.msra.mxu0 0.0
      %1768 = vmatprep.subr.mxu0 0.0
      %1769 = vmatpush1.msra.mxu0 0.0
      %1770 = vmatprep.subr.mxu0 0.0
      %1771 = vmatpush1.msra.mxu0 0.0
      %1772 = vmatprep.subr.mxu0 0.0
      %1773 = vmatpush1.msra.mxu0 0.0
      %1774 = vmatprep.subr.mxu0 0.0
      %1775 = vmatpush1.msra.mxu0 0.0
      %1776 = vmatprep.subr.mxu0 0.0
      %1777 = vmatpush1.msra.mxu0 0.0
      %1778 = vmatprep.subr.mxu0 0.0
      %1779 = vmatpush1.msra.mxu0 0.0
      %1780 = vmatprep.subr.mxu0 0.0
      %1781 = vmatpush1.msra.mxu0 0.0
      %1782 = vmatprep.subr.mxu0 0.0
      %1783 = vmatpush1.msra.mxu0 0.0
      %1784 = vmatprep.subr.mxu0 0.0
      %1785 = vmatpush1.msra.mxu0 0.0
      %1786 = vmatprep.subr.mxu0 0.0
      %1787 = vmatpush1.msra.mxu0 0.0
      %1788 = vmatprep.subr.mxu0 0.0
      %1789 = vmatpush1.msra.mxu0 0.0
      %1790 = vmatprep.subr.mxu0 0.0
      %1791 = vmatpush1.msra.mxu0 0.0
      %1792 = vmatprep.subr.mxu0 0.0
      %1793 = vmatpush1.msra.mxu0 0.0
      %1794 = vmatprep.subr.mxu0 0.0
      %1795 = vmatpush1.msra.mxu0 0.0
      %1796 = vmatprep.subr.mxu0 0.0
      %1797 = vmatpush1.msra.mxu0 0.0
      %1798 = vmatprep.subr.mxu0 0.0
      %1799 = vmatpush1.msra.mxu0 0.0
      %1800 = vmatprep.subr.mxu0 0.0
      %1801 = vmatpush1.msra.mxu0 0.0
      %1802 = vmatprep.subr.mxu0 0.0
      %1803 = vmatpush1.msra.mxu0 0.0
      %1804 = vmatprep.mubr.f32.mxu0 0.0
      %1805 = vmatmul.mubr.f32.gmra.mrb[0].mxu0 %v1738
      %v1806 = vpop.f32.mrb[0].mxu0
      %v1807 = vadd.f32 0.0, %v1806
      %v1808 = vpop.f32.mrb[0].mxu0
      %1809 = vdwg.mxu0
      %v1810 = vadd.f32 %v1734, %v1807
      %v1811 = vxor.u32 %v1810, 2147483648
      %v1812 = vmul.f32 %v1811, 1.442695
      %v1813 = vpow.pop %v1812
      %v1814 = vadd.f32 %v1813, 1.0
      %v1815 = vrcp.pop %v1814
      %v1816 = vmul.f32 1.0, %v1815
      %v1817 = vtanh.pop %v1810
      %v1818 = vmul.f32 %v1816, %v1727
      %1820 = vrot.lane.b32.xlu0 %v1817, 32
      %v1821 = vpop.permute.xlu0 %1820
      %v1823 = vmul.f32 %v1816, %v1821
      %1825 = vrot.lane.b32.xlu0 %v1823, 32
      %v1826 = vpop.permute.xlu0 %1825
      %v1828 = vadd.f32 %v1818, %v1826
      %v1829 = vtanh.pop %v1828
      %1831 = vrot.lane.b32.xlu0 %v1829, 32
      %v1832 = vpop.permute.xlu0 %1831
      %v1834 = vmul.f32 %v1816, %v1832
      %v1835 = vld [vmem:[%s858] sm:$0xff]
      %1837 = vrot.lane.b32.xlu0 %v1834, 64
      %v1838 = vpop.permute.xlu0 %1837
      %v1839 = vsel %vm229, %v1838, 0
      %1841 = vmatprep.subr.mxu0 0.0
      %1842 = vmatpush1.msra.mxu0 %v1078
      %1843 = vmatprep.subr.mxu0 0.0
      %1844 = vmatpush1.msra.mxu0 %v1079
      %1845 = vmatprep.subr.mxu0 0.0
      %1846 = vmatpush1.msra.mxu0 %v1080
      %1847 = vmatprep.subr.mxu0 0.0
      %1848 = vmatpush1.msra.mxu0 %v1081
      %1849 = vmatprep.subr.mxu0 0.0
      %1850 = vmatpush1.msra.mxu0 0.0
      %1851 = vmatprep.subr.mxu0 0.0
      %1852 = vmatpush1.msra.mxu0 0.0
      %1853 = vmatprep.subr.mxu0 0.0
      %1854 = vmatpush1.msra.mxu0 0.0
      %1855 = vmatprep.subr.mxu0 0.0
      %1856 = vmatpush1.msra.mxu0 0.0
      %1857 = vmatprep.subr.mxu0 0.0
      %1858 = vmatpush1.msra.mxu0 0.0
      %1859 = vmatprep.subr.mxu0 0.0
      %1860 = vmatpush1.msra.mxu0 0.0
      %1861 = vmatprep.subr.mxu0 0.0
      %1862 = vmatpush1.msra.mxu0 0.0
      %1863 = vmatprep.subr.mxu0 0.0
      %1864 = vmatpush1.msra.mxu0 0.0
      %1865 = vmatprep.subr.mxu0 0.0
      %1866 = vmatpush1.msra.mxu0 0.0
      %1867 = vmatprep.subr.mxu0 0.0
      %1868 = vmatpush1.msra.mxu0 0.0
      %1869 = vmatprep.subr.mxu0 0.0
      %1870 = vmatpush1.msra.mxu0 0.0
      %1871 = vmatprep.subr.mxu0 0.0
      %1872 = vmatpush1.msra.mxu0 0.0
      %1873 = vmatprep.subr.mxu0 0.0
      %1874 = vmatpush1.msra.mxu0 0.0
      %1875 = vmatprep.subr.mxu0 0.0
      %1876 = vmatpush1.msra.mxu0 0.0
      %1877 = vmatprep.subr.mxu0 0.0
      %1878 = vmatpush1.msra.mxu0 0.0
      %1879 = vmatprep.subr.mxu0 0.0
      %1880 = vmatpush1.msra.mxu0 0.0
      %1881 = vmatprep.subr.mxu0 0.0
      %1882 = vmatpush1.msra.mxu0 0.0
      %1883 = vmatprep.subr.mxu0 0.0
      %1884 = vmatpush1.msra.mxu0 0.0
      %1885 = vmatprep.subr.mxu0 0.0
      %1886 = vmatpush1.msra.mxu0 0.0
      %1887 = vmatprep.subr.mxu0 0.0
      %1888 = vmatpush1.msra.mxu0 0.0
      %1889 = vmatprep.subr.mxu0 0.0
      %1890 = vmatpush1.msra.mxu0 0.0
      %1891 = vmatprep.subr.mxu0 0.0
      %1892 = vmatpush1.msra.mxu0 0.0
      %1893 = vmatprep.subr.mxu0 0.0
      %1894 = vmatpush1.msra.mxu0 0.0
      %1895 = vmatprep.subr.mxu0 0.0
      %1896 = vmatpush1.msra.mxu0 0.0
      %1897 = vmatprep.subr.mxu0 0.0
      %1898 = vmatpush1.msra.mxu0 0.0
      %1899 = vmatprep.subr.mxu0 0.0
      %1900 = vmatpush1.msra.mxu0 0.0
      %1901 = vmatprep.subr.mxu0 0.0
      %1902 = vmatpush1.msra.mxu0 0.0
      %1903 = vmatprep.subr.mxu0 0.0
      %1904 = vmatpush1.msra.mxu0 0.0
      %1905 = vmatprep.mubr.f32.mxu0 0.0
      %1906 = vmatmul.mubr.f32.gmra.mrb[0].mxu0 %v1839
      %v1907 = vpop.f32.mrb[0].mxu0
      %v1908 = vadd.f32 0.0, %v1907
      %v1909 = vpop.f32.mrb[0].mxu0
      %1910 = vdwg.mxu0
      %v1911 = vadd.f32 %v1835, %v1908
      %v1912 = vxor.u32 %v1911, 2147483648
      %v1913 = vmul.f32 %v1912, 1.442695
      %v1914 = vpow.pop %v1913
      %v1915 = vadd.f32 %v1914, 1.0
      %v1916 = vrcp.pop %v1915
      %v1917 = vmul.f32 1.0, %v1916
      %v1918 = vtanh.pop %v1911
      %v1919 = vmul.f32 %v1917, %v1828
      %1921 = vrot.lane.b32.xlu0 %v1918, 32
      %v1922 = vpop.permute.xlu0 %1921
      %v1924 = vmul.f32 %v1917, %v1922
      %1926 = vrot.lane.b32.xlu0 %v1924, 32
      %v1927 = vpop.permute.xlu0 %1926
      %v1929 = vadd.f32 %v1919, %v1927
      %v1930 = vtanh.pop %v1929
      %1932 = vrot.lane.b32.xlu0 %v1930, 32
      %v1933 = vpop.permute.xlu0 %1932
      %v1935 = vmul.f32 %v1917, %v1933
      %v1936 = vld [vmem:[%s963] sm:$0xff]
      %1938 = vrot.lane.b32.xlu0 %v1935, 64
      %v1939 = vpop.permute.xlu0 %1938
      %v1940 = vsel %vm229, %v1939, 0
      %1942 = vmatprep.subr.mxu0 0.0
      %1943 = vmatpush1.msra.mxu0 %v1078
      %1944 = vmatprep.subr.mxu0 0.0
      %1945 = vmatpush1.msra.mxu0 %v1079
      %1946 = vmatprep.subr.mxu0 0.0
      %1947 = vmatpush1.msra.mxu0 %v1080
      %1948 = vmatprep.subr.mxu0 0.0
      %1949 = vmatpush1.msra.mxu0 %v1081
      %1950 = vmatprep.subr.mxu0 0.0
      %1951 = vmatpush1.msra.mxu0 0.0
      %1952 = vmatprep.subr.mxu0 0.0
      %1953 = vmatpush1.msra.mxu0 0.0
      %1954 = vmatprep.subr.mxu0 0.0
      %1955 = vmatpush1.msra.mxu0 0.0
      %1956 = vmatprep.subr.mxu0 0.0
      %1957 = vmatpush1.msra.mxu0 0.0
      %1958 = vmatprep.subr.mxu0 0.0
      %1959 = vmatpush1.msra.mxu0 0.0
      %1960 = vmatprep.subr.mxu0 0.0
      %1961 = vmatpush1.msra.mxu0 0.0
      %1962 = vmatprep.subr.mxu0 0.0
      %1963 = vmatpush1.msra.mxu0 0.0
      %1964 = vmatprep.subr.mxu0 0.0
      %1965 = vmatpush1.msra.mxu0 0.0
      %1966 = vmatprep.subr.mxu0 0.0
      %1967 = vmatpush1.msra.mxu0 0.0
      %1968 = vmatprep.subr.mxu0 0.0
      %1969 = vmatpush1.msra.mxu0 0.0
      %1970 = vmatprep.subr.mxu0 0.0
      %1971 = vmatpush1.msra.mxu0 0.0
      %1972 = vmatprep.subr.mxu0 0.0
      %1973 = vmatpush1.msra.mxu0 0.0
      %1974 = vmatprep.subr.mxu0 0.0
      %1975 = vmatpush1.msra.mxu0 0.0
      %1976 = vmatprep.subr.mxu0 0.0
      %1977 = vmatpush1.msra.mxu0 0.0
      %1978 = vmatprep.subr.mxu0 0.0
      %1979 = vmatpush1.msra.mxu0 0.0
      %1980 = vmatprep.subr.mxu0 0.0
      %1981 = vmatpush1.msra.mxu0 0.0
      %1982 = vmatprep.subr.mxu0 0.0
      %1983 = vmatpush1.msra.mxu0 0.0
      %1984 = vmatprep.subr.mxu0 0.0
      %1985 = vmatpush1.msra.mxu0 0.0
      %1986 = vmatprep.subr.mxu0 0.0
      %1987 = vmatpush1.msra.mxu0 0.0
      %1988 = vmatprep.subr.mxu0 0.0
      %1989 = vmatpush1.msra.mxu0 0.0
      %1990 = vmatprep.subr.mxu0 0.0
      %1991 = vmatpush1.msra.mxu0 0.0
      %1992 = vmatprep.subr.mxu0 0.0
      %1993 = vmatpush1.msra.mxu0 0.0
      %1994 = vmatprep.subr.mxu0 0.0
      %1995 = vmatpush1.msra.mxu0 0.0
      %1996 = vmatprep.subr.mxu0 0.0
      %1997 = vmatpush1.msra.mxu0 0.0
      %1998 = vmatprep.subr.mxu0 0.0
      %1999 = vmatpush1.msra.mxu0 0.0
      %2000 = vmatprep.subr.mxu0 0.0
      %2001 = vmatpush1.msra.mxu0 0.0
      %2002 = vmatprep.subr.mxu0 0.0
      %2003 = vmatpush1.msra.mxu0 0.0
      %2004 = vmatprep.subr.mxu0 0.0
      %2005 = vmatpush1.msra.mxu0 0.0
      %2006 = vmatprep.mubr.f32.mxu0 0.0
      %2007 = vmatmul.mubr.f32.gmra.mrb[0].mxu0 %v1940
      %v2008 = vpop.f32.mrb[0].mxu0
      %v2009 = vadd.f32 0.0, %v2008
      %v2010 = vpop.f32.mrb[0].mxu0
      %2011 = vdwg.mxu0
      %v2012 = vadd.f32 %v1936, %v2009
      %v2013 = vxor.u32 %v2012, 2147483648
      %v2014 = vmul.f32 %v2013, 1.442695
      %v2015 = vpow.pop %v2014
      %v2016 = vadd.f32 %v2015, 1.0
      %v2017 = vrcp.pop %v2016
      %v2018 = vmul.f32 1.0, %v2017
      %v2019 = vtanh.pop %v2012
      %v2020 = vmul.f32 %v2018, %v1929
      %2022 = vrot.lane.b32.xlu0 %v2019, 32
      %v2023 = vpop.permute.xlu0 %2022
      %v2025 = vmul.f32 %v2018, %v2023
      %2027 = vrot.lane.b32.xlu0 %v2025, 32
      %v2028 = vpop.permute.xlu0 %2027
      %v2030 = vadd.f32 %v2020, %v2028
      %v2031 = vtanh.pop %v2030
      %2033 = vrot.lane.b32.xlu0 %v2031, 32
      %v2034 = vpop.permute.xlu0 %2033
      %v2036 = vmul.f32 %v2018, %v2034
      %2038 = vrot.lane.b32.xlu0 %v2036, 64
      %v2039 = vpop.permute.xlu0 %2038
      %s2041 = scalar_lea.vmem [#allocation11], 8
      %2042 = vst.msk [vmem:[%s2041] sm:$0xff] %vm229, %v2039
      %2044 = vrot.lane.b32.xlu0 %v2030, 96
      %v2045 = vpop.permute.xlu0 %2044
      %s2047 = scalar_lea.vmem [#allocation13], 8
      %2048 = vst.msk [vmem:[%s2047] sm:$0xff] %vm229, %v2045
      %2049 = vst.msk [vmem:[#allocation3] sm:$0xff] %vm229, %v2039
    $region49: #{tpu_custom_call.1} parent=1 // pred_fallthru
      _
    %v2050 = vld [vmem:[#allocation8] sm:$0xff]
    %v2051 = vld [vmem:[#allocation8 + $0x8] sm:$0xff]
    %v2052 = vld [vmem:[#allocation8 + $0x10] sm:$0xff]
    %v2053 = vld [vmem:[#allocation8 + $0x18] sm:$0xff]
    %v2054 = vld [vmem:[#allocation3] sm:$0xff]
    %v2055 = vld [vmem:[%s8] sm:$0x1]
    %v2057 = vlaneseq
    %v2058 = vshrl.u32 %v2057, 7
    %v2059 = vsub.s32 0, %v2058
    %v2060 = vrot.slane %v2055, %v2059
    %vm2062 = vcmask 261120
    %v2064 = vsel %vm2062, %v2054, 0
    %2066 = vmatprep.subr.mxu0 0.0
    %2067 = vmatpush1.msra.mxu0 %v2050
    %2068 = vmatprep.subr.mxu0 0.0
    %2069 = vmatpush1.msra.mxu0 %v2051
    %2070 = vmatprep.subr.mxu0 0.0
    %2071 = vmatpush1.msra.mxu0 %v2052
    %2072 = vmatprep.subr.mxu0 0.0
    %2073 = vmatpush1.msra.mxu0 %v2053
    %2074 = vmatprep.subr.mxu0 0.0
    %2075 = vmatpush1.msra.mxu0 0.0
    %2076 = vmatprep.subr.mxu0 0.0
    %2077 = vmatpush1.msra.mxu0 0.0
    %2078 = vmatprep.subr.mxu0 0.0
    %2079 = vmatpush1.msra.mxu0 0.0
    %2080 = vmatprep.subr.mxu0 0.0
    %2081 = vmatpush1.msra.mxu0 0.0
    %2082 = vmatprep.subr.mxu0 0.0
    %2083 = vmatpush1.msra.mxu0 0.0
    %2084 = vmatprep.subr.mxu0 0.0
    %2085 = vmatpush1.msra.mxu0 0.0
    %2086 = vmatprep.subr.mxu0 0.0
    %2087 = vmatpush1.msra.mxu0 0.0
    %2088 = vmatprep.subr.mxu0 0.0
    %2089 = vmatpush1.msra.mxu0 0.0
    %2090 = vmatprep.subr.mxu0 0.0
    %2091 = vmatpush1.msra.mxu0 0.0
    %2092 = vmatprep.subr.mxu0 0.0
    %2093 = vmatpush1.msra.mxu0 0.0
    %2094 = vmatprep.subr.mxu0 0.0
    %2095 = vmatpush1.msra.mxu0 0.0
    %2096 = vmatprep.subr.mxu0 0.0
    %2097 = vmatpush1.msra.mxu0 0.0
    %2098 = vmatprep.subr.mxu0 0.0
    %2099 = vmatpush1.msra.mxu0 0.0
    %2100 = vmatprep.subr.mxu0 0.0
    %2101 = vmatpush1.msra.mxu0 0.0
    %2102 = vmatprep.subr.mxu0 0.0
    %2103 = vmatpush1.msra.mxu0 0.0
    %2104 = vmatprep.subr.mxu0 0.0
    %2105 = vmatpush1.msra.mxu0 0.0
    %2106 = vmatprep.subr.mxu0 0.0
    %2107 = vmatpush1.msra.mxu0 0.0
    %2108 = vmatprep.subr.mxu0 0.0
    %2109 = vmatpush1.msra.mxu0 0.0
    %2110 = vmatprep.subr.mxu0 0.0
    %2111 = vmatpush1.msra.mxu0 0.0
    %2112 = vmatprep.subr.mxu0 0.0
    %2113 = vmatpush1.msra.mxu0 0.0
    %2114 = vmatprep.subr.mxu0 0.0
    %2115 = vmatpush1.msra.mxu0 0.0
    %2116 = vmatprep.subr.mxu0 0.0
    %2117 = vmatpush1.msra.mxu0 0.0
    %2118 = vmatprep.subr.mxu0 0.0
    %2119 = vmatpush1.msra.mxu0 0.0
    %2120 = vmatprep.subr.mxu0 0.0
    %2121 = vmatpush1.msra.mxu0 0.0
    %2122 = vmatprep.subr.mxu0 0.0
    %2123 = vmatpush1.msra.mxu0 0.0
    %2124 = vmatprep.subr.mxu0 0.0
    %2125 = vmatpush1.msra.mxu0 0.0
    %2126 = vmatprep.subr.mxu0 0.0
    %2127 = vmatpush1.msra.mxu0 0.0
    %2128 = vmatprep.subr.mxu0 0.0
    %2129 = vmatpush1.msra.mxu0 0.0
    %2130 = vmatprep.mubr.f32.mxu0 0.0
    %2131 = vmatmul.mubr.f32.gmra.mrb[0].mxu0 %v2064
    %v2132 = vpop.f32.mrb[0].mxu0
    %v2133 = vadd.f32 %v2060, %v2132
    %v2134 = vpop.f32.mrb[0].mxu0
    %2135 = vdwg.mxu0
    %vm2136 = vcmask 523264
    %2137 = vst.msk [vmem:[#allocation10] sm:$0xff] %vm2136, %v2133
    // Predicated region
    $region50: #{tpu_custom_call.1} parent=1 // pred_check
      _
    $region51: #{tpu_custom_call.1} parent=1 // pred_check_branch
      %2139 = sbr.rel (0) target = $region53
    $region52: #{tpu_custom_call.1} parent=1 // pred_region
      %s2141 = ssub.s32 128, 128
      %2142 = vsyncadd [#allocation7], %s2141
      %s2144 = sshll.u32 [#allocation10], 4
      %s2145 = int_to_ptr.vmem [resolvable:$true] %s2144
      %2147 = dma.vmem_to_hbm [thread:$0]  %s2145, 128, %s9, [#allocation7]
    $region53: #{tpu_custom_call.1} parent=1 // pred_fallthru
      _
    // Predicated region
    $region54: #{tpu_custom_call.1} parent=1 // pred_check
      _
    $region55: #{tpu_custom_call.1} parent=1 // pred_check_branch
      %2149 = sbr.rel (0) target = $region57
    $region56: #{tpu_custom_call.1} parent=1 // pred_region
      %s2151 = ssub.s32 256, 256
      %2152 = vsyncadd [#allocation12], %s2151
      %s2153 = sshll.u32 [#allocation11], 4
      %s2154 = int_to_ptr.vmem [resolvable:$true] %s2153
      %2159 = dma.vmem_to_hbm [thread:$0]  %s2154, 256, %s10, [#allocation12], 128, 128, 8
    $region57: #{tpu_custom_call.1} parent=1 // pred_fallthru
      _
    // Predicated region
    $region58: #{tpu_custom_call.1} parent=1 // pred_check
      _
    $region59: #{tpu_custom_call.1} parent=1 // pred_check_branch
      %2161 = sbr.rel (0) target = $region61
    $region60: #{tpu_custom_call.1} parent=1 // pred_region
      %s2163 = ssub.s32 256, 256
      %2164 = vsyncadd [#allocation12], %s2163
      %s2165 = sshll.u32 [#allocation13], 4
      %s2166 = int_to_ptr.vmem [resolvable:$true] %s2165
      %2171 = dma.vmem_to_hbm [thread:$0]  %s2166, 256, %s11, [#allocation12], 128, 128, 8
    $region61: #{tpu_custom_call.1} parent=1 // pred_fallthru
      _
    // Predicated region
    $region62: #{tpu_custom_call.1} parent=1 // pred_check
      _
    $region63: #{tpu_custom_call.1} parent=1 // pred_check_branch
      %2173 = sbr.rel (0) target = $region65
    $region64: #{tpu_custom_call.1} parent=1 // pred_region
      %2174 = dma.done [#allocation7], 128
    $region65: #{tpu_custom_call.1} parent=1 // pred_fallthru
      _
    // Predicated region
    $region66: #{tpu_custom_call.1} parent=1 // pred_check
      _
    $region67: #{tpu_custom_call.1} parent=1 // pred_check_branch
      %2176 = sbr.rel (0) target = $region69
    $region68: #{tpu_custom_call.1} parent=1 // pred_region
      %2177 = dma.done [#allocation12], 256
    $region69: #{tpu_custom_call.1} parent=1 // pred_fallthru
      _
    // Predicated region
    $region70: #{tpu_custom_call.1} parent=1 // pred_check
      _
    $region71: #{tpu_custom_call.1} parent=1 // pred_check_branch
      %2179 = sbr.rel (0) target = $region73
    $region72: #{tpu_custom_call.1} parent=1 // pred_region
      %2180 = dma.done [#allocation12], 256
    $region73: #{tpu_custom_call.1} parent=1 // pred_fallthru
      _
    %2181 = vsyncpa [#allocation6], 1
    %2182 = vsyncpa [#allocation9], 1
    %2183 = vsyncpa [#allocation7], 1
    %2184 = vsyncpa [#allocation12], 1

</llo_original>
